<compile_context>
chip_gen: v7x
topology: tpu7x:2x2x1
jax: 0.10.0
libtpu: 0.0.40
codegen_flags: <defaults>
</compile_context>

<pallas_src>
import functools
import math

import jax
import jax.numpy as jnp
import numpy as np
from jax.experimental import pallas as pl
from jax.experimental.pallas import tpu as pltpu


# ----------------------------------------------------------------------------
# timing / position signals (same formula as _gen_timing_signal)
# ----------------------------------------------------------------------------
def gen_timing_signal(length, channels, min_timescale=1.0, max_timescale=1.0e4):
    position = np.arange(length, dtype=np.float64)
    num_timescales = channels // 2
    log_inc = math.log(float(max_timescale) / float(min_timescale)) / (num_timescales - 1)
    inv_timescales = min_timescale * np.exp(
        np.arange(num_timescales, dtype=np.float64) * -log_inc)
    scaled_time = position[:, None] * inv_timescales[None, :]
    signal = np.concatenate([np.sin(scaled_time), np.cos(scaled_time)], axis=1)
    signal = np.pad(signal, [[0, 0], [0, channels % 2]], "constant")
    return jnp.asarray(signal.astype(np.float32))  # [length, channels]


# ----------------------------------------------------------------------------
# in-kernel helpers
# ----------------------------------------------------------------------------
def _layer_norm(v, gamma, beta, eps):
    # matches the custom LayerNorm: torch.std is unbiased (N-1), eps added to std
    mean = jnp.mean(v, axis=-1, keepdims=True)
    diff = v - mean
    var = jnp.sum(diff * diff, axis=-1, keepdims=True) / (v.shape[-1] - 1)
    inv = 1.0 / (jnp.sqrt(var) + eps)
    return gamma * (diff * inv) + beta


def _conv1d_same_wide(x, w_cat, b):
    # kernel_size=3, pad 'both' (SAME):
    #   y[t] = x[t-1]@w0 + x[t]@w1 + x[t+1]@w2 + b
    # implemented as one wide-K matmul: [x_prev | x | x_next] @ [w0; w1; w2]
    zero = jnp.zeros((1, x.shape[-1]), jnp.float32)
    x_prev = jnp.concatenate([zero, x[:-1, :]], axis=0)
    x_next = jnp.concatenate([x[1:, :], zero], axis=0)
    x_cat = jnp.concatenate([x_prev, x, x_next], axis=-1)           # (L, 3*Cin)
    return jnp.dot(x_cat, w_cat, preferred_element_type=jnp.float32) + b


# ----------------------------------------------------------------------------
# fused encoder kernel (embedding proj + all layers), grid over batch
# ----------------------------------------------------------------------------
def encoder_fused_kernel(x_ref, sig_ref, wp_ref,
                         g1_ref, b1_ref, wq_ref, wk_ref, wv_ref, wo_ref,
                         g2_ref, b2_ref, wc1_ref, bc1_ref, wc2_ref, bc2_ref,
                         o_ref, *, num_layers, num_heads, head_k, head_v, eps):
    # x_ref: (1, L, D) block for one batch element; everything stays in VMEM.
    x = jnp.dot(x_ref[0], wp_ref[...], preferred_element_type=jnp.float32)

    # hoist weight/param loads out of the layer loop
    g1 = g1_ref[...]; b1 = b1_ref[...]
    g2 = g2_ref[...]; b2 = b2_ref[...]
    wq = wq_ref[...]; wk = wk_ref[...]; wv = wv_ref[...]; wo = wo_ref[...]
    wc1 = wc1_ref[...]; bc1 = bc1_ref[...]
    wc2 = wc2_ref[...]; bc2 = bc2_ref[...]

    scale = head_k ** (-0.5)

    for l in range(num_layers):                       # Universal Transformer: shared weights
        x = x + sig_ref[l]                            # timing + position signal add

        # ---- pre-norm + multi-head self-attention (heads batched) ----
        xn = _layer_norm(x, g1, b1, eps)
        q = jnp.dot(xn, wq, preferred_element_type=jnp.float32) * scale
        k = jnp.dot(xn, wk, preferred_element_type=jnp.float32)
        v = jnp.dot(xn, wv, preferred_element_type=jnp.float32)

        qh = jnp.stack([q[:, h * head_k:(h + 1) * head_k] for h in range(num_heads)], axis=0)
        kh = jnp.stack([k[:, h * head_k:(h + 1) * head_k] for h in range(num_heads)], axis=0)
        vh = jnp.stack([v[:, h * head_v:(h + 1) * head_v] for h in range(num_heads)], axis=0)

        logits = jnp.einsum('hqd,hkd->hqk', qh, kh,
                            preferred_element_type=jnp.float32)      # (H, L, L)
        m = jnp.max(logits, axis=-1, keepdims=True)
        e = jnp.exp(logits - m)
        w = e / jnp.sum(e, axis=-1, keepdims=True)
        ctx = jnp.einsum('hqk,hkd->hqd', w, vh,
                         preferred_element_type=jnp.float32)          # (H, L, dv)
        ctx = jnp.concatenate([ctx[h] for h in range(num_heads)], axis=-1)
        x = x + jnp.dot(ctx, wo, preferred_element_type=jnp.float32)  # residual

        # ---- pre-norm + conv FFN (layer_config='cc', relu after BOTH convs) ----
        xn2 = _layer_norm(x, g2, b2, eps)
        h1 = jnp.maximum(_conv1d_same_wide(xn2, wc1, bc1), 0.0)
        h2 = jnp.maximum(_conv1d_same_wide(h1, wc2, bc2), 0.0)
        x = x + h2                                    # residual

    o_ref[0] = x


# ----------------------------------------------------------------------------
# wrapper
# ----------------------------------------------------------------------------
def encoder_forward(inputs, p, timing, position, *, num_layers, num_heads,
                    head_k, head_v):
    B, L, D = inputs.shape
    F = p["wc1"].shape[-1]

    # combined per-layer signal, computed once host-side: (num_layers, L, D)
    sig = timing[:L][None, :, :] + position[:num_layers, None, :]
    # concatenate the 3 conv taps along the input-feature axis (host side)
    wc1_cat = p["wc1"].reshape(3 * D, F)
    wc2_cat = p["wc2"].reshape(3 * F, D)

    kernel = functools.partial(encoder_fused_kernel,
                               num_layers=num_layers, num_heads=num_heads,
                               head_k=head_k, head_v=head_v, eps=1e-6)

    const2 = lambda b: (0, 0)
    const3 = lambda b: (0, 0, 0)
    in_specs = [
        pl.BlockSpec((1, L, D), lambda b: (b, 0, 0)),        # inputs
        pl.BlockSpec((num_layers, L, D), const3),            # combined signal
        pl.BlockSpec((D, D), const2),                        # embedding proj
        pl.BlockSpec((1, D), const2),                        # ln_mha gamma
        pl.BlockSpec((1, D), const2),                        # ln_mha beta
        pl.BlockSpec((D, D), const2),                        # Wq
        pl.BlockSpec((D, D), const2),                        # Wk
        pl.BlockSpec((D, D), const2),                        # Wv
        pl.BlockSpec((D, D), const2),                        # Wo
        pl.BlockSpec((1, D), const2),                        # ln_ffn gamma
        pl.BlockSpec((1, D), const2),                        # ln_ffn beta
        pl.BlockSpec((3 * D, F), const2),                    # conv1 weights (taps concat)
        pl.BlockSpec((1, F), const2),                        # conv1 bias
        pl.BlockSpec((3 * F, D), const2),                    # conv2 weights (taps concat)
        pl.BlockSpec((1, D), const2),                        # conv2 bias
    ]
    call = pl.pallas_call(
        kernel,
        out_shape=jax.ShapeDtypeStruct((B, L, D), jnp.float32),
        grid=(B,),
        in_specs=in_specs,
        out_specs=pl.BlockSpec((1, L, D), lambda b: (b, 0, 0)),
        compiler_params=pltpu.CompilerParams(dimension_semantics=("parallel",)),
    )
    return call(inputs, sig, p["wp"], p["g1"], p["b1"], p["wq"], p["wk"],
                p["wv"], p["wo"], p["g2"], p["b2"], wc1_cat, p["bc1"],
                wc2_cat, p["bc2"])


# ----------------------------------------------------------------------------
# pure-JAX reference (same math, vectorized) for correctness check
# ----------------------------------------------------------------------------
def reference_forward(inputs, p, timing, position, *, num_layers, num_heads,
                      head_k, head_v, eps=1e-6):
    def ln(v, g, b):
        mean = v.mean(-1, keepdims=True)
        diff = v - mean
        std = jnp.sqrt((diff ** 2).sum(-1, keepdims=True) / (v.shape[-1] - 1))
        return g * diff / (std + eps) + b

    def conv(v, w, b):
        zero = jnp.zeros_like(v[:, :1, :])
        prev = jnp.concatenate([zero, v[:, :-1, :]], axis=1)
        nxt = jnp.concatenate([v[:, 1:, :], zero], axis=1)
        return prev @ w[0] + v @ w[1] + nxt @ w[2] + b

    x = inputs @ p["wp"]
    B, L, D = x.shape
    for l in range(num_layers):
        x = x + timing[:L][None] + position[l][None, None, :]
        xn = ln(x, p["g1"], p["b1"])
        q = xn @ p["wq"]; k = xn @ p["wk"]; v = xn @ p["wv"]
        qh = q.reshape(B, L, num_heads, head_k).transpose(0, 2, 1, 3) * head_k ** -0.5
        kh = k.reshape(B, L, num_heads, head_k).transpose(0, 2, 1, 3)
        vh = v.reshape(B, L, num_heads, head_v).transpose(0, 2, 1, 3)
        logits = qh @ kh.transpose(0, 1, 3, 2)
        w = jax.nn.softmax(logits, axis=-1)
        ctx = (w @ vh).transpose(0, 2, 1, 3).reshape(B, L, num_heads * head_v)
        x = x + ctx @ p["wo"]
        xn = ln(x, p["g2"], p["b2"])
        h = jax.nn.relu(conv(xn, p["wc1"], p["bc1"]))
        h = jax.nn.relu(conv(h, p["wc2"], p["bc2"]))
        x = x + h
    return x


# ----------------------------------------------------------------------------
if __name__ == "__main__":
    # small config: embedding_size = hidden_size = 32, num_layers=2, heads=4,
    # total_key_depth = total_value_depth = 32, filter_size = 64, max_length=100
    B, L = 2, 8
    D = 32
    H = 4
    F = 64
    NUM_LAYERS = 2
    MAX_LEN = 100
    dk = D // H
    dv = D // H

    key = jax.random.PRNGKey(0)
    ks = jax.random.split(key, 10)

    def init(k, shape, scale=0.1):
        return scale * jax.random.normal(k, shape, dtype=jnp.float32)

    params = {
        "wp":  init(ks[0], (D, D)),            # embedding_proj (in, out) layout
        "g1":  jnp.ones((1, D), jnp.float32),
        "b1":  jnp.zeros((1, D), jnp.float32),
        "wq":  init(ks[1], (D, D)),
        "wk":  init(ks[2], (D, D)),
        "wv":  init(ks[3], (D, D)),
        "wo":  init(ks[4], (D, D)),
        "g2":  jnp.ones((1, D), jnp.float32),
        "b2":  jnp.zeros((1, D), jnp.float32),
        "wc1": init(ks[5], (3, D, F)),         # (tap, Cin, Cout)
        "bc1": init(ks[6], (1, F)),
        "wc2": init(ks[7], (3, F, D)),
        "bc2": init(ks[8], (1, D)),
    }

    timing = gen_timing_signal(MAX_LEN, D)       # [max_length, D]
    position = gen_timing_signal(NUM_LAYERS, D)  # [num_layers, D]

    inputs = jax.random.normal(ks[9], (B, L, D), dtype=jnp.float32)

    out = encoder_forward(inputs, params, timing, position,
                          num_layers=NUM_LAYERS, num_heads=H,
                          head_k=dk, head_v=dv)
    out = jax.block_until_ready(out)

    ref = reference_forward(inputs, params, timing, position,
                            num_layers=NUM_LAYERS, num_heads=H,
                            head_k=dk, head_v=dv)
    ref = jax.block_until_ready(ref)

    assert out.shape == (B, L, D)
    np.testing.assert_allclose(np.asarray(out), np.asarray(ref),
                               rtol=2e-3, atol=2e-3)
    print("KERNEL_OK")
</pallas_src>

<mosaic_0001>
module attributes {stable_mosaic.version = 11 : i64} {
  func.func @encoder_fused_kernel(%arg0: i32, %arg1: memref<1x8x32xf32, #tpu.memory_space<vmem>>, %arg2: memref<2x8x32xf32, #tpu.memory_space<vmem>>, %arg3: memref<32x32xf32, #tpu.memory_space<vmem>>, %arg4: memref<1x32xf32, #tpu.memory_space<vmem>>, %arg5: memref<1x32xf32, #tpu.memory_space<vmem>>, %arg6: memref<32x32xf32, #tpu.memory_space<vmem>>, %arg7: memref<32x32xf32, #tpu.memory_space<vmem>>, %arg8: memref<32x32xf32, #tpu.memory_space<vmem>>, %arg9: memref<32x32xf32, #tpu.memory_space<vmem>>, %arg10: memref<1x32xf32, #tpu.memory_space<vmem>>, %arg11: memref<1x32xf32, #tpu.memory_space<vmem>>, %arg12: memref<96x64xf32, #tpu.memory_space<vmem>>, %arg13: memref<1x64xf32, #tpu.memory_space<vmem>>, %arg14: memref<192x32xf32, #tpu.memory_space<vmem>>, %arg15: memref<1x32xf32, #tpu.memory_space<vmem>>, %arg16: memref<1x8x32xf32, #tpu.memory_space<vmem>>) attributes {dimension_semantics = [#tpu.dimension_semantics<parallel>], iteration_bounds = array<i64: 2>, scalar_prefetch = 0 : i64, scratch_operands = 0 : i64, tpu.core_type = #tpu.core_type<tc>, window_params = [{transform_indices = @transform_0, window_bounds = array<i64: 1, 8, 32>}, {pipeline_mode = #tpu.pipeline_mode<synchronous>, transform_indices = @transform_1, window_bounds = array<i64: 2, 8, 32>}, {pipeline_mode = #tpu.pipeline_mode<synchronous>, transform_indices = @transform_2, window_bounds = array<i64: 32, 32>}, {pipeline_mode = #tpu.pipeline_mode<synchronous>, transform_indices = @transform_3, window_bounds = array<i64: 1, 32>}, {pipeline_mode = #tpu.pipeline_mode<synchronous>, transform_indices = @transform_4, window_bounds = array<i64: 1, 32>}, {pipeline_mode = #tpu.pipeline_mode<synchronous>, transform_indices = @transform_5, window_bounds = array<i64: 32, 32>}, {pipeline_mode = #tpu.pipeline_mode<synchronous>, transform_indices = @transform_6, window_bounds = array<i64: 32, 32>}, {pipeline_mode = #tpu.pipeline_mode<synchronous>, transform_indices = @transform_7, window_bounds = array<i64: 32, 32>}, {pipeline_mode = #tpu.pipeline_mode<synchronous>, transform_indices = @transform_8, window_bounds = array<i64: 32, 32>}, {pipeline_mode = #tpu.pipeline_mode<synchronous>, transform_indices = @transform_9, window_bounds = array<i64: 1, 32>}, {pipeline_mode = #tpu.pipeline_mode<synchronous>, transform_indices = @transform_10, window_bounds = array<i64: 1, 32>}, {pipeline_mode = #tpu.pipeline_mode<synchronous>, transform_indices = @transform_11, window_bounds = array<i64: 96, 64>}, {pipeline_mode = #tpu.pipeline_mode<synchronous>, transform_indices = @transform_12, window_bounds = array<i64: 1, 64>}, {pipeline_mode = #tpu.pipeline_mode<synchronous>, transform_indices = @transform_13, window_bounds = array<i64: 192, 32>}, {pipeline_mode = #tpu.pipeline_mode<synchronous>, transform_indices = @transform_14, window_bounds = array<i64: 1, 32>}, {transform_indices = @transform_15, window_bounds = array<i64: 1, 8, 32>}]} {
    %c0 = arith.constant 0 : index
    %c0_0 = arith.constant 0 : index
    %c0_1 = arith.constant 0 : index
    %0 = vector.load %arg1[%c0, %c0_0, %c0_1] : memref<1x8x32xf32, #tpu.memory_space<vmem>>, vector<1x8x32xf32>
    %1 = vector.shape_cast %0 : vector<1x8x32xf32> to vector<8x32xf32>
    %c0_2 = arith.constant 0 : index
    %c0_3 = arith.constant 0 : index
    %2 = vector.load %arg3[%c0_2, %c0_3] : memref<32x32xf32, #tpu.memory_space<vmem>>, vector<32x32xf32>
    %cst = arith.constant dense<0.000000e+00> : vector<8x32xf32>
    %3 = tpu.matmul %1, %2, %cst {dimension_numbers = #tpu.dot_dimension_numbers<[1], [0], [0], [1], [0, 0, 1, 1], [], []>} : vector<8x32xf32>, vector<32x32xf32>, vector<8x32xf32> -> vector<8x32xf32>
    %c0_4 = arith.constant 0 : index
    %c0_5 = arith.constant 0 : index
    %4 = vector.load %arg4[%c0_4, %c0_5] : memref<1x32xf32, #tpu.memory_space<vmem>>, vector<1x32xf32>
    %c0_6 = arith.constant 0 : index
    %c0_7 = arith.constant 0 : index
    %5 = vector.load %arg5[%c0_6, %c0_7] : memref<1x32xf32, #tpu.memory_space<vmem>>, vector<1x32xf32>
    %c0_8 = arith.constant 0 : index
    %c0_9 = arith.constant 0 : index
    %6 = vector.load %arg10[%c0_8, %c0_9] : memref<1x32xf32, #tpu.memory_space<vmem>>, vector<1x32xf32>
    %c0_10 = arith.constant 0 : index
    %c0_11 = arith.constant 0 : index
    %7 = vector.load %arg11[%c0_10, %c0_11] : memref<1x32xf32, #tpu.memory_space<vmem>>, vector<1x32xf32>
    %c0_12 = arith.constant 0 : index
    %c0_13 = arith.constant 0 : index
    %8 = vector.load %arg6[%c0_12, %c0_13] : memref<32x32xf32, #tpu.memory_space<vmem>>, vector<32x32xf32>
    %c0_14 = arith.constant 0 : index
    %c0_15 = arith.constant 0 : index
    %9 = vector.load %arg7[%c0_14, %c0_15] : memref<32x32xf32, #tpu.memory_space<vmem>>, vector<32x32xf32>
    %c0_16 = arith.constant 0 : index
    %c0_17 = arith.constant 0 : index
    %10 = vector.load %arg8[%c0_16, %c0_17] : memref<32x32xf32, #tpu.memory_space<vmem>>, vector<32x32xf32>
    %c0_18 = arith.constant 0 : index
    %c0_19 = arith.constant 0 : index
    %11 = vector.load %arg9[%c0_18, %c0_19] : memref<32x32xf32, #tpu.memory_space<vmem>>, vector<32x32xf32>
    %c0_20 = arith.constant 0 : index
    %c0_21 = arith.constant 0 : index
    %12 = vector.load %arg12[%c0_20, %c0_21] : memref<96x64xf32, #tpu.memory_space<vmem>>, vector<96x64xf32>
    %c0_22 = arith.constant 0 : index
    %c0_23 = arith.constant 0 : index
    %13 = vector.load %arg13[%c0_22, %c0_23] : memref<1x64xf32, #tpu.memory_space<vmem>>, vector<1x64xf32>
    %c0_24 = arith.constant 0 : index
    %c0_25 = arith.constant 0 : index
    %14 = vector.load %arg14[%c0_24, %c0_25] : memref<192x32xf32, #tpu.memory_space<vmem>>, vector<192x32xf32>
    %c0_26 = arith.constant 0 : index
    %c0_27 = arith.constant 0 : index
    %15 = vector.load %arg15[%c0_26, %c0_27] : memref<1x32xf32, #tpu.memory_space<vmem>>, vector<1x32xf32>
    %c0_28 = arith.constant 0 : index
    %c0_29 = arith.constant 0 : index
    %c0_30 = arith.constant 0 : index
    %16 = vector.load %arg2[%c0_28, %c0_29, %c0_30] : memref<2x8x32xf32, #tpu.memory_space<vmem>>, vector<1x8x32xf32>
    %17 = vector.shape_cast %16 : vector<1x8x32xf32> to vector<8x32xf32>
    %18 = arith.addf %3, %17 : vector<8x32xf32>
    %cst_31 = arith.constant dense<0.000000e+00> : vector<8xf32>
    %19 = vector.multi_reduction <add>, %18, %cst_31 [1] : vector<8x32xf32> to vector<8xf32>
    %20 = vector.shape_cast %19 : vector<8xf32> to vector<8x1xf32>
    %cst_32 = arith.constant 3.200000e+01 : f32
    %21 = vector.broadcast %cst_32 : f32 to vector<8x1xf32>
    %22 = arith.divf %20, %21 : vector<8x1xf32>
    %23 = vector.broadcast %22 : vector<8x1xf32> to vector<8x32xf32>
    %24 = arith.subf %18, %23 : vector<8x32xf32>
    %25 = arith.mulf %24, %24 : vector<8x32xf32>
    %cst_33 = arith.constant dense<0.000000e+00> : vector<8xf32>
    %26 = vector.multi_reduction <add>, %25, %cst_33 [1] : vector<8x32xf32> to vector<8xf32>
    %27 = vector.shape_cast %26 : vector<8xf32> to vector<8x1xf32>
    %cst_34 = arith.constant 3.100000e+01 : f32
    %28 = vector.broadcast %cst_34 : f32 to vector<8x1xf32>
    %29 = arith.divf %27, %28 : vector<8x1xf32>
    %30 = math.sqrt %29 : vector<8x1xf32>
    %cst_35 = arith.constant 9.99999997E-7 : f32
    %31 = vector.broadcast %cst_35 : f32 to vector<8x1xf32>
    %32 = arith.addf %30, %31 : vector<8x1xf32>
    %cst_36 = arith.constant 1.000000e+00 : f32
    %33 = vector.broadcast %cst_36 : f32 to vector<8x1xf32>
    %34 = arith.divf %33, %32 : vector<8x1xf32>
    %35 = vector.broadcast %34 : vector<8x1xf32> to vector<8x32xf32>
    %36 = arith.mulf %24, %35 : vector<8x32xf32>
    %37 = vector.broadcast %4 : vector<1x32xf32> to vector<8x32xf32>
    %38 = arith.mulf %37, %36 : vector<8x32xf32>
    %39 = vector.broadcast %5 : vector<1x32xf32> to vector<8x32xf32>
    %40 = arith.addf %38, %39 : vector<8x32xf32>
    %cst_37 = arith.constant dense<0.000000e+00> : vector<8x32xf32>
    %41 = tpu.matmul %40, %8, %cst_37 {dimension_numbers = #tpu.dot_dimension_numbers<[1], [0], [0], [1], [0, 0, 1, 1], [], []>} : vector<8x32xf32>, vector<32x32xf32>, vector<8x32xf32> -> vector<8x32xf32>
    %cst_38 = arith.constant 0.353553385 : f32
    %42 = vector.broadcast %cst_38 : f32 to vector<8x32xf32>
    %43 = arith.mulf %41, %42 : vector<8x32xf32>
    %cst_39 = arith.constant dense<0.000000e+00> : vector<8x32xf32>
    %44 = tpu.matmul %40, %9, %cst_39 {dimension_numbers = #tpu.dot_dimension_numbers<[1], [0], [0], [1], [0, 0, 1, 1], [], []>} : vector<8x32xf32>, vector<32x32xf32>, vector<8x32xf32> -> vector<8x32xf32>
    %cst_40 = arith.constant dense<0.000000e+00> : vector<8x32xf32>
    %45 = tpu.matmul %40, %10, %cst_40 {dimension_numbers = #tpu.dot_dimension_numbers<[1], [0], [0], [1], [0, 0, 1, 1], [], []>} : vector<8x32xf32>, vector<32x32xf32>, vector<8x32xf32> -> vector<8x32xf32>
    %46 = vector.extract_strided_slice %43 {offsets = [0, 0], sizes = [8, 8], strides = [1, 1]} : vector<8x32xf32> to vector<8x8xf32>
    %47 = vector.extract_strided_slice %43 {offsets = [0, 8], sizes = [8, 8], strides = [1, 1]} : vector<8x32xf32> to vector<8x8xf32>
    %48 = vector.extract_strided_slice %43 {offsets = [0, 16], sizes = [8, 8], strides = [1, 1]} : vector<8x32xf32> to vector<8x8xf32>
    %49 = vector.extract_strided_slice %43 {offsets = [0, 24], sizes = [8, 8], strides = [1, 1]} : vector<8x32xf32> to vector<8x8xf32>
    %50 = vector.shape_cast %46 : vector<8x8xf32> to vector<1x8x8xf32>
    %51 = vector.shape_cast %47 : vector<8x8xf32> to vector<1x8x8xf32>
    %52 = vector.shape_cast %48 : vector<8x8xf32> to vector<1x8x8xf32>
    %53 = vector.shape_cast %49 : vector<8x8xf32> to vector<1x8x8xf32>
    %54 = tpu.concatenate %50, %51, %52, %53 in 0 : vector<1x8x8xf32>, vector<1x8x8xf32>, vector<1x8x8xf32>, vector<1x8x8xf32> -> vector<4x8x8xf32>
    %55 = vector.extract_strided_slice %44 {offsets = [0, 0], sizes = [8, 8], strides = [1, 1]} : vector<8x32xf32> to vector<8x8xf32>
    %56 = vector.extract_strided_slice %44 {offsets = [0, 8], sizes = [8, 8], strides = [1, 1]} : vector<8x32xf32> to vector<8x8xf32>
    %57 = vector.extract_strided_slice %44 {offsets = [0, 16], sizes = [8, 8], strides = [1, 1]} : vector<8x32xf32> to vector<8x8xf32>
    %58 = vector.extract_strided_slice %44 {offsets = [0, 24], sizes = [8, 8], strides = [1, 1]} : vector<8x32xf32> to vector<8x8xf32>
    %59 = vector.shape_cast %55 : vector<8x8xf32> to vector<1x8x8xf32>
    %60 = vector.shape_cast %56 : vector<8x8xf32> to vector<1x8x8xf32>
    %61 = vector.shape_cast %57 : vector<8x8xf32> to vector<1x8x8xf32>
    %62 = vector.shape_cast %58 : vector<8x8xf32> to vector<1x8x8xf32>
    %63 = tpu.concatenate %59, %60, %61, %62 in 0 : vector<1x8x8xf32>, vector<1x8x8xf32>, vector<1x8x8xf32>, vector<1x8x8xf32> -> vector<4x8x8xf32>
    %64 = vector.extract_strided_slice %45 {offsets = [0, 0], sizes = [8, 8], strides = [1, 1]} : vector<8x32xf32> to vector<8x8xf32>
    %65 = vector.extract_strided_slice %45 {offsets = [0, 8], sizes = [8, 8], strides = [1, 1]} : vector<8x32xf32> to vector<8x8xf32>
    %66 = vector.extract_strided_slice %45 {offsets = [0, 16], sizes = [8, 8], strides = [1, 1]} : vector<8x32xf32> to vector<8x8xf32>
    %67 = vector.extract_strided_slice %45 {offsets = [0, 24], sizes = [8, 8], strides = [1, 1]} : vector<8x32xf32> to vector<8x8xf32>
    %68 = vector.shape_cast %64 : vector<8x8xf32> to vector<1x8x8xf32>
    %69 = vector.shape_cast %65 : vector<8x8xf32> to vector<1x8x8xf32>
    %70 = vector.shape_cast %66 : vector<8x8xf32> to vector<1x8x8xf32>
    %71 = vector.shape_cast %67 : vector<8x8xf32> to vector<1x8x8xf32>
    %72 = tpu.concatenate %68, %69, %70, %71 in 0 : vector<1x8x8xf32>, vector<1x8x8xf32>, vector<1x8x8xf32>, vector<1x8x8xf32> -> vector<4x8x8xf32>
    "tpu.trace_start"() <{level = 10 : i32, message = "hqd,hkd->hqk"}> : () -> ()
    %cst_41 = arith.constant dense<0.000000e+00> : vector<4x8x8xf32>
    %73 = tpu.matmul %54, %63, %cst_41 {dimension_numbers = #tpu.dot_dimension_numbers<[2], [2], [1], [1], [0, 0, 0, 1, 1, 1], [0], [0]>} : vector<4x8x8xf32>, vector<4x8x8xf32>, vector<4x8x8xf32> -> vector<4x8x8xf32>
    "tpu.trace_stop"() : () -> ()
    %cst_42 = arith.constant dense<0xFF800000> : vector<4x8xf32>
    %74 = vector.multi_reduction <maximumf>, %73, %cst_42 [2] : vector<4x8x8xf32> to vector<4x8xf32>
    %75 = vector.shape_cast %74 : vector<4x8xf32> to vector<4x8x1xf32>
    %76 = vector.broadcast %75 : vector<4x8x1xf32> to vector<4x8x8xf32>
    %77 = arith.subf %73, %76 : vector<4x8x8xf32>
    %78 = math.exp %77 : vector<4x8x8xf32>
    %cst_43 = arith.constant dense<0.000000e+00> : vector<4x8xf32>
    %79 = vector.multi_reduction <add>, %78, %cst_43 [2] : vector<4x8x8xf32> to vector<4x8xf32>
    %80 = vector.shape_cast %79 : vector<4x8xf32> to vector<4x8x1xf32>
    %81 = vector.broadcast %80 : vector<4x8x1xf32> to vector<4x8x8xf32>
    %82 = arith.divf %78, %81 : vector<4x8x8xf32>
    "tpu.trace_start"() <{level = 10 : i32, message = "hqk,hkd->hqd"}> : () -> ()
    %cst_44 = arith.constant dense<0.000000e+00> : vector<4x8x8xf32>
    %83 = tpu.matmul %82, %72, %cst_44 {dimension_numbers = #tpu.dot_dimension_numbers<[2], [1], [1], [2], [0, 0, 0, 1, 1, 2], [0], [0]>} : vector<4x8x8xf32>, vector<4x8x8xf32>, vector<4x8x8xf32> -> vector<4x8x8xf32>
    "tpu.trace_stop"() : () -> ()
    %84 = vector.extract_strided_slice %83 {offsets = [0, 0, 0], sizes = [1, 8, 8], strides = [1, 1, 1]} : vector<4x8x8xf32> to vector<1x8x8xf32>
    %85 = vector.shape_cast %84 : vector<1x8x8xf32> to vector<8x8xf32>
    %86 = vector.extract_strided_slice %83 {offsets = [1, 0, 0], sizes = [1, 8, 8], strides = [1, 1, 1]} : vector<4x8x8xf32> to vector<1x8x8xf32>
    %87 = vector.shape_cast %86 : vector<1x8x8xf32> to vector<8x8xf32>
    %88 = vector.extract_strided_slice %83 {offsets = [2, 0, 0], sizes = [1, 8, 8], strides = [1, 1, 1]} : vector<4x8x8xf32> to vector<1x8x8xf32>
    %89 = vector.shape_cast %88 : vector<1x8x8xf32> to vector<8x8xf32>
    %90 = vector.extract_strided_slice %83 {offsets = [3, 0, 0], sizes = [1, 8, 8], strides = [1, 1, 1]} : vector<4x8x8xf32> to vector<1x8x8xf32>
    %91 = vector.shape_cast %90 : vector<1x8x8xf32> to vector<8x8xf32>
    %92 = tpu.concatenate %85, %87, %89, %91 in 1 : vector<8x8xf32>, vector<8x8xf32>, vector<8x8xf32>, vector<8x8xf32> -> vector<8x32xf32>
    %cst_45 = arith.constant dense<0.000000e+00> : vector<8x32xf32>
    %93 = tpu.matmul %92, %11, %cst_45 {dimension_numbers = #tpu.dot_dimension_numbers<[1], [0], [0], [1], [0, 0, 1, 1], [], []>} : vector<8x32xf32>, vector<32x32xf32>, vector<8x32xf32> -> vector<8x32xf32>
    %94 = arith.addf %18, %93 : vector<8x32xf32>
    %cst_46 = arith.constant dense<0.000000e+00> : vector<8xf32>
    %95 = vector.multi_reduction <add>, %94, %cst_46 [1] : vector<8x32xf32> to vector<8xf32>
    %96 = vector.shape_cast %95 : vector<8xf32> to vector<8x1xf32>
    %cst_47 = arith.constant 3.200000e+01 : f32
    %97 = vector.broadcast %cst_47 : f32 to vector<8x1xf32>
    %98 = arith.divf %96, %97 : vector<8x1xf32>
    %99 = vector.broadcast %98 : vector<8x1xf32> to vector<8x32xf32>
    %100 = arith.subf %94, %99 : vector<8x32xf32>
    %101 = arith.mulf %100, %100 : vector<8x32xf32>
    %cst_48 = arith.constant dense<0.000000e+00> : vector<8xf32>
    %102 = vector.multi_reduction <add>, %101, %cst_48 [1] : vector<8x32xf32> to vector<8xf32>
    %103 = vector.shape_cast %102 : vector<8xf32> to vector<8x1xf32>
    %cst_49 = arith.constant 3.100000e+01 : f32
    %104 = vector.broadcast %cst_49 : f32 to vector<8x1xf32>
    %105 = arith.divf %103, %104 : vector<8x1xf32>
    %106 = math.sqrt %105 : vector<8x1xf32>
    %cst_50 = arith.constant 9.99999997E-7 : f32
    %107 = vector.broadcast %cst_50 : f32 to vector<8x1xf32>
    %108 = arith.addf %106, %107 : vector<8x1xf32>
    %cst_51 = arith.constant 1.000000e+00 : f32
    %109 = vector.broadcast %cst_51 : f32 to vector<8x1xf32>
    %110 = arith.divf %109, %108 : vector<8x1xf32>
    %111 = vector.broadcast %110 : vector<8x1xf32> to vector<8x32xf32>
    %112 = arith.mulf %100, %111 : vector<8x32xf32>
    %113 = vector.broadcast %6 : vector<1x32xf32> to vector<8x32xf32>
    %114 = arith.mulf %113, %112 : vector<8x32xf32>
    %115 = vector.broadcast %7 : vector<1x32xf32> to vector<8x32xf32>
    %116 = arith.addf %114, %115 : vector<8x32xf32>
    %cst_52 = arith.constant 0.000000e+00 : f32
    %117 = vector.broadcast %cst_52 : f32 to vector<1x32xf32>
    %118 = vector.extract_strided_slice %116 {offsets = [0, 0], sizes = [7, 32], strides = [1, 1]} : vector<8x32xf32> to vector<7x32xf32>
    %119 = tpu.concatenate %117, %118 in 0 : vector<1x32xf32>, vector<7x32xf32> -> vector<8x32xf32>
    %120 = vector.extract_strided_slice %116 {offsets = [1, 0], sizes = [7, 32], strides = [1, 1]} : vector<8x32xf32> to vector<7x32xf32>
    %121 = tpu.concatenate %120, %117 in 0 : vector<7x32xf32>, vector<1x32xf32> -> vector<8x32xf32>
    %122 = tpu.concatenate %119, %116, %121 in 1 : vector<8x32xf32>, vector<8x32xf32>, vector<8x32xf32> -> vector<8x96xf32>
    %cst_53 = arith.constant dense<0.000000e+00> : vector<8x64xf32>
    %123 = tpu.matmul %122, %12, %cst_53 {dimension_numbers = #tpu.dot_dimension_numbers<[1], [0], [0], [1], [0, 0, 1, 1], [], []>} : vector<8x96xf32>, vector<96x64xf32>, vector<8x64xf32> -> vector<8x64xf32>
    %124 = vector.broadcast %13 : vector<1x64xf32> to vector<8x64xf32>
    %125 = arith.addf %123, %124 : vector<8x64xf32>
    %cst_54 = arith.constant 0.000000e+00 : f32
    %126 = vector.broadcast %cst_54 : f32 to vector<8x64xf32>
    %127 = arith.maximumf %125, %126 : vector<8x64xf32>
    %cst_55 = arith.constant 0.000000e+00 : f32
    %128 = vector.broadcast %cst_55 : f32 to vector<1x64xf32>
    %129 = vector.extract_strided_slice %127 {offsets = [0, 0], sizes = [7, 64], strides = [1, 1]} : vector<8x64xf32> to vector<7x64xf32>
    %130 = tpu.concatenate %128, %129 in 0 : vector<1x64xf32>, vector<7x64xf32> -> vector<8x64xf32>
    %131 = vector.extract_strided_slice %127 {offsets = [1, 0], sizes = [7, 64], strides = [1, 1]} : vector<8x64xf32> to vector<7x64xf32>
    %132 = tpu.concatenate %131, %128 in 0 : vector<7x64xf32>, vector<1x64xf32> -> vector<8x64xf32>
    %133 = tpu.concatenate %130, %127, %132 in 1 : vector<8x64xf32>, vector<8x64xf32>, vector<8x64xf32> -> vector<8x192xf32>
    %cst_56 = arith.constant dense<0.000000e+00> : vector<8x32xf32>
    %134 = tpu.matmul %133, %14, %cst_56 {dimension_numbers = #tpu.dot_dimension_numbers<[1], [0], [0], [1], [0, 0, 1, 1], [], []>} : vector<8x192xf32>, vector<192x32xf32>, vector<8x32xf32> -> vector<8x32xf32>
    %135 = vector.broadcast %15 : vector<1x32xf32> to vector<8x32xf32>
    %136 = arith.addf %134, %135 : vector<8x32xf32>
    %cst_57 = arith.constant 0.000000e+00 : f32
    %137 = vector.broadcast %cst_57 : f32 to vector<8x32xf32>
    %138 = arith.maximumf %136, %137 : vector<8x32xf32>
    %139 = arith.addf %94, %138 : vector<8x32xf32>
    %c1 = arith.constant 1 : index
    %c0_58 = arith.constant 0 : index
    %c0_59 = arith.constant 0 : index
    %140 = vector.load %arg2[%c1, %c0_58, %c0_59] : memref<2x8x32xf32, #tpu.memory_space<vmem>>, vector<1x8x32xf32>
    %141 = vector.shape_cast %140 : vector<1x8x32xf32> to vector<8x32xf32>
    %142 = arith.addf %139, %141 : vector<8x32xf32>
    %cst_60 = arith.constant dense<0.000000e+00> : vector<8xf32>
    %143 = vector.multi_reduction <add>, %142, %cst_60 [1] : vector<8x32xf32> to vector<8xf32>
    %144 = vector.shape_cast %143 : vector<8xf32> to vector<8x1xf32>
    %cst_61 = arith.constant 3.200000e+01 : f32
    %145 = vector.broadcast %cst_61 : f32 to vector<8x1xf32>
    %146 = arith.divf %144, %145 : vector<8x1xf32>
    %147 = vector.broadcast %146 : vector<8x1xf32> to vector<8x32xf32>
    %148 = arith.subf %142, %147 : vector<8x32xf32>
    %149 = arith.mulf %148, %148 : vector<8x32xf32>
    %cst_62 = arith.constant dense<0.000000e+00> : vector<8xf32>
    %150 = vector.multi_reduction <add>, %149, %cst_62 [1] : vector<8x32xf32> to vector<8xf32>
    %151 = vector.shape_cast %150 : vector<8xf32> to vector<8x1xf32>
    %cst_63 = arith.constant 3.100000e+01 : f32
    %152 = vector.broadcast %cst_63 : f32 to vector<8x1xf32>
    %153 = arith.divf %151, %152 : vector<8x1xf32>
    %154 = math.sqrt %153 : vector<8x1xf32>
    %cst_64 = arith.constant 9.99999997E-7 : f32
    %155 = vector.broadcast %cst_64 : f32 to vector<8x1xf32>
    %156 = arith.addf %154, %155 : vector<8x1xf32>
    %cst_65 = arith.constant 1.000000e+00 : f32
    %157 = vector.broadcast %cst_65 : f32 to vector<8x1xf32>
    %158 = arith.divf %157, %156 : vector<8x1xf32>
    %159 = vector.broadcast %158 : vector<8x1xf32> to vector<8x32xf32>
    %160 = arith.mulf %148, %159 : vector<8x32xf32>
    %161 = vector.broadcast %4 : vector<1x32xf32> to vector<8x32xf32>
    %162 = arith.mulf %161, %160 : vector<8x32xf32>
    %163 = vector.broadcast %5 : vector<1x32xf32> to vector<8x32xf32>
    %164 = arith.addf %162, %163 : vector<8x32xf32>
    %cst_66 = arith.constant dense<0.000000e+00> : vector<8x32xf32>
    %165 = tpu.matmul %164, %8, %cst_66 {dimension_numbers = #tpu.dot_dimension_numbers<[1], [0], [0], [1], [0, 0, 1, 1], [], []>} : vector<8x32xf32>, vector<32x32xf32>, vector<8x32xf32> -> vector<8x32xf32>
    %cst_67 = arith.constant 0.353553385 : f32
    %166 = vector.broadcast %cst_67 : f32 to vector<8x32xf32>
    %167 = arith.mulf %165, %166 : vector<8x32xf32>
    %cst_68 = arith.constant dense<0.000000e+00> : vector<8x32xf32>
    %168 = tpu.matmul %164, %9, %cst_68 {dimension_numbers = #tpu.dot_dimension_numbers<[1], [0], [0], [1], [0, 0, 1, 1], [], []>} : vector<8x32xf32>, vector<32x32xf32>, vector<8x32xf32> -> vector<8x32xf32>
    %cst_69 = arith.constant dense<0.000000e+00> : vector<8x32xf32>
    %169 = tpu.matmul %164, %10, %cst_69 {dimension_numbers = #tpu.dot_dimension_numbers<[1], [0], [0], [1], [0, 0, 1, 1], [], []>} : vector<8x32xf32>, vector<32x32xf32>, vector<8x32xf32> -> vector<8x32xf32>
    %170 = vector.extract_strided_slice %167 {offsets = [0, 0], sizes = [8, 8], strides = [1, 1]} : vector<8x32xf32> to vector<8x8xf32>
    %171 = vector.extract_strided_slice %167 {offsets = [0, 8], sizes = [8, 8], strides = [1, 1]} : vector<8x32xf32> to vector<8x8xf32>
    %172 = vector.extract_strided_slice %167 {offsets = [0, 16], sizes = [8, 8], strides = [1, 1]} : vector<8x32xf32> to vector<8x8xf32>
    %173 = vector.extract_strided_slice %167 {offsets = [0, 24], sizes = [8, 8], strides = [1, 1]} : vector<8x32xf32> to vector<8x8xf32>
    %174 = vector.shape_cast %170 : vector<8x8xf32> to vector<1x8x8xf32>
    %175 = vector.shape_cast %171 : vector<8x8xf32> to vector<1x8x8xf32>
    %176 = vector.shape_cast %172 : vector<8x8xf32> to vector<1x8x8xf32>
    %177 = vector.shape_cast %173 : vector<8x8xf32> to vector<1x8x8xf32>
    %178 = tpu.concatenate %174, %175, %176, %177 in 0 : vector<1x8x8xf32>, vector<1x8x8xf32>, vector<1x8x8xf32>, vector<1x8x8xf32> -> vector<4x8x8xf32>
    %179 = vector.extract_strided_slice %168 {offsets = [0, 0], sizes = [8, 8], strides = [1, 1]} : vector<8x32xf32> to vector<8x8xf32>
    %180 = vector.extract_strided_slice %168 {offsets = [0, 8], sizes = [8, 8], strides = [1, 1]} : vector<8x32xf32> to vector<8x8xf32>
    %181 = vector.extract_strided_slice %168 {offsets = [0, 16], sizes = [8, 8], strides = [1, 1]} : vector<8x32xf32> to vector<8x8xf32>
    %182 = vector.extract_strided_slice %168 {offsets = [0, 24], sizes = [8, 8], strides = [1, 1]} : vector<8x32xf32> to vector<8x8xf32>
    %183 = vector.shape_cast %179 : vector<8x8xf32> to vector<1x8x8xf32>
    %184 = vector.shape_cast %180 : vector<8x8xf32> to vector<1x8x8xf32>
    %185 = vector.shape_cast %181 : vector<8x8xf32> to vector<1x8x8xf32>
    %186 = vector.shape_cast %182 : vector<8x8xf32> to vector<1x8x8xf32>
    %187 = tpu.concatenate %183, %184, %185, %186 in 0 : vector<1x8x8xf32>, vector<1x8x8xf32>, vector<1x8x8xf32>, vector<1x8x8xf32> -> vector<4x8x8xf32>
    %188 = vector.extract_strided_slice %169 {offsets = [0, 0], sizes = [8, 8], strides = [1, 1]} : vector<8x32xf32> to vector<8x8xf32>
    %189 = vector.extract_strided_slice %169 {offsets = [0, 8], sizes = [8, 8], strides = [1, 1]} : vector<8x32xf32> to vector<8x8xf32>
    %190 = vector.extract_strided_slice %169 {offsets = [0, 16], sizes = [8, 8], strides = [1, 1]} : vector<8x32xf32> to vector<8x8xf32>
    %191 = vector.extract_strided_slice %169 {offsets = [0, 24], sizes = [8, 8], strides = [1, 1]} : vector<8x32xf32> to vector<8x8xf32>
    %192 = vector.shape_cast %188 : vector<8x8xf32> to vector<1x8x8xf32>
    %193 = vector.shape_cast %189 : vector<8x8xf32> to vector<1x8x8xf32>
    %194 = vector.shape_cast %190 : vector<8x8xf32> to vector<1x8x8xf32>
    %195 = vector.shape_cast %191 : vector<8x8xf32> to vector<1x8x8xf32>
    %196 = tpu.concatenate %192, %193, %194, %195 in 0 : vector<1x8x8xf32>, vector<1x8x8xf32>, vector<1x8x8xf32>, vector<1x8x8xf32> -> vector<4x8x8xf32>
    "tpu.trace_start"() <{level = 10 : i32, message = "hqd,hkd->hqk"}> : () -> ()
    %cst_70 = arith.constant dense<0.000000e+00> : vector<4x8x8xf32>
    %197 = tpu.matmul %178, %187, %cst_70 {dimension_numbers = #tpu.dot_dimension_numbers<[2], [2], [1], [1], [0, 0, 0, 1, 1, 1], [0], [0]>} : vector<4x8x8xf32>, vector<4x8x8xf32>, vector<4x8x8xf32> -> vector<4x8x8xf32>
    "tpu.trace_stop"() : () -> ()
    %cst_71 = arith.constant dense<0xFF800000> : vector<4x8xf32>
    %198 = vector.multi_reduction <maximumf>, %197, %cst_71 [2] : vector<4x8x8xf32> to vector<4x8xf32>
    %199 = vector.shape_cast %198 : vector<4x8xf32> to vector<4x8x1xf32>
    %200 = vector.broadcast %199 : vector<4x8x1xf32> to vector<4x8x8xf32>
    %201 = arith.subf %197, %200 : vector<4x8x8xf32>
    %202 = math.exp %201 : vector<4x8x8xf32>
    %cst_72 = arith.constant dense<0.000000e+00> : vector<4x8xf32>
    %203 = vector.multi_reduction <add>, %202, %cst_72 [2] : vector<4x8x8xf32> to vector<4x8xf32>
    %204 = vector.shape_cast %203 : vector<4x8xf32> to vector<4x8x1xf32>
    %205 = vector.broadcast %204 : vector<4x8x1xf32> to vector<4x8x8xf32>
    %206 = arith.divf %202, %205 : vector<4x8x8xf32>
    "tpu.trace_start"() <{level = 10 : i32, message = "hqk,hkd->hqd"}> : () -> ()
    %cst_73 = arith.constant dense<0.000000e+00> : vector<4x8x8xf32>
    %207 = tpu.matmul %206, %196, %cst_73 {dimension_numbers = #tpu.dot_dimension_numbers<[2], [1], [1], [2], [0, 0, 0, 1, 1, 2], [0], [0]>} : vector<4x8x8xf32>, vector<4x8x8xf32>, vector<4x8x8xf32> -> vector<4x8x8xf32>
    "tpu.trace_stop"() : () -> ()
    %208 = vector.extract_strided_slice %207 {offsets = [0, 0, 0], sizes = [1, 8, 8], strides = [1, 1, 1]} : vector<4x8x8xf32> to vector<1x8x8xf32>
    %209 = vector.shape_cast %208 : vector<1x8x8xf32> to vector<8x8xf32>
    %210 = vector.extract_strided_slice %207 {offsets = [1, 0, 0], sizes = [1, 8, 8], strides = [1, 1, 1]} : vector<4x8x8xf32> to vector<1x8x8xf32>
    %211 = vector.shape_cast %210 : vector<1x8x8xf32> to vector<8x8xf32>
    %212 = vector.extract_strided_slice %207 {offsets = [2, 0, 0], sizes = [1, 8, 8], strides = [1, 1, 1]} : vector<4x8x8xf32> to vector<1x8x8xf32>
    %213 = vector.shape_cast %212 : vector<1x8x8xf32> to vector<8x8xf32>
    %214 = vector.extract_strided_slice %207 {offsets = [3, 0, 0], sizes = [1, 8, 8], strides = [1, 1, 1]} : vector<4x8x8xf32> to vector<1x8x8xf32>
    %215 = vector.shape_cast %214 : vector<1x8x8xf32> to vector<8x8xf32>
    %216 = tpu.concatenate %209, %211, %213, %215 in 1 : vector<8x8xf32>, vector<8x8xf32>, vector<8x8xf32>, vector<8x8xf32> -> vector<8x32xf32>
    %cst_74 = arith.constant dense<0.000000e+00> : vector<8x32xf32>
    %217 = tpu.matmul %216, %11, %cst_74 {dimension_numbers = #tpu.dot_dimension_numbers<[1], [0], [0], [1], [0, 0, 1, 1], [], []>} : vector<8x32xf32>, vector<32x32xf32>, vector<8x32xf32> -> vector<8x32xf32>
    %218 = arith.addf %142, %217 : vector<8x32xf32>
    %cst_75 = arith.constant dense<0.000000e+00> : vector<8xf32>
    %219 = vector.multi_reduction <add>, %218, %cst_75 [1] : vector<8x32xf32> to vector<8xf32>
    %220 = vector.shape_cast %219 : vector<8xf32> to vector<8x1xf32>
    %cst_76 = arith.constant 3.200000e+01 : f32
    %221 = vector.broadcast %cst_76 : f32 to vector<8x1xf32>
    %222 = arith.divf %220, %221 : vector<8x1xf32>
    %223 = vector.broadcast %222 : vector<8x1xf32> to vector<8x32xf32>
    %224 = arith.subf %218, %223 : vector<8x32xf32>
    %225 = arith.mulf %224, %224 : vector<8x32xf32>
    %cst_77 = arith.constant dense<0.000000e+00> : vector<8xf32>
    %226 = vector.multi_reduction <add>, %225, %cst_77 [1] : vector<8x32xf32> to vector<8xf32>
    %227 = vector.shape_cast %226 : vector<8xf32> to vector<8x1xf32>
    %cst_78 = arith.constant 3.100000e+01 : f32
    %228 = vector.broadcast %cst_78 : f32 to vector<8x1xf32>
    %229 = arith.divf %227, %228 : vector<8x1xf32>
    %230 = math.sqrt %229 : vector<8x1xf32>
    %cst_79 = arith.constant 9.99999997E-7 : f32
    %231 = vector.broadcast %cst_79 : f32 to vector<8x1xf32>
    %232 = arith.addf %230, %231 : vector<8x1xf32>
    %cst_80 = arith.constant 1.000000e+00 : f32
    %233 = vector.broadcast %cst_80 : f32 to vector<8x1xf32>
    %234 = arith.divf %233, %232 : vector<8x1xf32>
    %235 = vector.broadcast %234 : vector<8x1xf32> to vector<8x32xf32>
    %236 = arith.mulf %224, %235 : vector<8x32xf32>
    %237 = vector.broadcast %6 : vector<1x32xf32> to vector<8x32xf32>
    %238 = arith.mulf %237, %236 : vector<8x32xf32>
    %239 = vector.broadcast %7 : vector<1x32xf32> to vector<8x32xf32>
    %240 = arith.addf %238, %239 : vector<8x32xf32>
    %cst_81 = arith.constant 0.000000e+00 : f32
    %241 = vector.broadcast %cst_81 : f32 to vector<1x32xf32>
    %242 = vector.extract_strided_slice %240 {offsets = [0, 0], sizes = [7, 32], strides = [1, 1]} : vector<8x32xf32> to vector<7x32xf32>
    %243 = tpu.concatenate %241, %242 in 0 : vector<1x32xf32>, vector<7x32xf32> -> vector<8x32xf32>
    %244 = vector.extract_strided_slice %240 {offsets = [1, 0], sizes = [7, 32], strides = [1, 1]} : vector<8x32xf32> to vector<7x32xf32>
    %245 = tpu.concatenate %244, %241 in 0 : vector<7x32xf32>, vector<1x32xf32> -> vector<8x32xf32>
    %246 = tpu.concatenate %243, %240, %245 in 1 : vector<8x32xf32>, vector<8x32xf32>, vector<8x32xf32> -> vector<8x96xf32>
    %cst_82 = arith.constant dense<0.000000e+00> : vector<8x64xf32>
    %247 = tpu.matmul %246, %12, %cst_82 {dimension_numbers = #tpu.dot_dimension_numbers<[1], [0], [0], [1], [0, 0, 1, 1], [], []>} : vector<8x96xf32>, vector<96x64xf32>, vector<8x64xf32> -> vector<8x64xf32>
    %248 = vector.broadcast %13 : vector<1x64xf32> to vector<8x64xf32>
    %249 = arith.addf %247, %248 : vector<8x64xf32>
    %cst_83 = arith.constant 0.000000e+00 : f32
    %250 = vector.broadcast %cst_83 : f32 to vector<8x64xf32>
    %251 = arith.maximumf %249, %250 : vector<8x64xf32>
    %cst_84 = arith.constant 0.000000e+00 : f32
    %252 = vector.broadcast %cst_84 : f32 to vector<1x64xf32>
    %253 = vector.extract_strided_slice %251 {offsets = [0, 0], sizes = [7, 64], strides = [1, 1]} : vector<8x64xf32> to vector<7x64xf32>
    %254 = tpu.concatenate %252, %253 in 0 : vector<1x64xf32>, vector<7x64xf32> -> vector<8x64xf32>
    %255 = vector.extract_strided_slice %251 {offsets = [1, 0], sizes = [7, 64], strides = [1, 1]} : vector<8x64xf32> to vector<7x64xf32>
    %256 = tpu.concatenate %255, %252 in 0 : vector<7x64xf32>, vector<1x64xf32> -> vector<8x64xf32>
    %257 = tpu.concatenate %254, %251, %256 in 1 : vector<8x64xf32>, vector<8x64xf32>, vector<8x64xf32> -> vector<8x192xf32>
    %cst_85 = arith.constant dense<0.000000e+00> : vector<8x32xf32>
    %258 = tpu.matmul %257, %14, %cst_85 {dimension_numbers = #tpu.dot_dimension_numbers<[1], [0], [0], [1], [0, 0, 1, 1], [], []>} : vector<8x192xf32>, vector<192x32xf32>, vector<8x32xf32> -> vector<8x32xf32>
    %259 = vector.broadcast %15 : vector<1x32xf32> to vector<8x32xf32>
    %260 = arith.addf %258, %259 : vector<8x32xf32>
    %cst_86 = arith.constant 0.000000e+00 : f32
    %261 = vector.broadcast %cst_86 : f32 to vector<8x32xf32>
    %262 = arith.maximumf %260, %261 : vector<8x32xf32>
    %263 = arith.addf %218, %262 : vector<8x32xf32>
    %c0_87 = arith.constant 0 : index
    %c0_88 = arith.constant 0 : index
    %c0_89 = arith.constant 0 : index
    %264 = vector.load %arg16[%c0_87, %c0_88, %c0_89] : memref<1x8x32xf32, #tpu.memory_space<vmem>>, vector<1x8x32xf32>
    %265 = vector.shape_cast %264 : vector<1x8x32xf32> to vector<8x32xf32>
    %266 = vector.shape_cast %263 : vector<8x32xf32> to vector<1x8x32xf32>
    tpu.vector_store %arg16[%c0_87, %c0_88, %c0_89], %266 {strides = array<i32>} : memref<1x8x32xf32, #tpu.memory_space<vmem>>, vector<1x8x32xf32>,
    return
  }
  func.func @transform_0(%arg0: i32) -> (i32, i32, i32) {
    %c0_i32 = arith.constant 0 : i32
    %c0_i32_0 = arith.constant 0 : i32
    %c0_i32_1 = arith.constant 0 : i32
    return %arg0, %c0_i32, %c0_i32_0 : i32, i32, i32
  }
  func.func @transform_1(%arg0: i32) -> (i32, i32, i32) {
    %c0_i32 = arith.constant 0 : i32
    %c0_i32_0 = arith.constant 0 : i32
    %c0_i32_1 = arith.constant 0 : i32
    %c0_i32_2 = arith.constant 0 : i32
    return %c0_i32, %c0_i32_0, %c0_i32_1 : i32, i32, i32
  }
  func.func @transform_2(%arg0: i32) -> (i32, i32) {
    %c0_i32 = arith.constant 0 : i32
    %c0_i32_0 = arith.constant 0 : i32
    %c0_i32_1 = arith.constant 0 : i32
    return %c0_i32, %c0_i32_0 : i32, i32
  }
  func.func @transform_3(%arg0: i32) -> (i32, i32) {
    %c0_i32 = arith.constant 0 : i32
    %c0_i32_0 = arith.constant 0 : i32
    %c0_i32_1 = arith.constant 0 : i32
    return %c0_i32, %c0_i32_0 : i32, i32
  }
  func.func @transform_4(%arg0: i32) -> (i32, i32) {
    %c0_i32 = arith.constant 0 : i32
    %c0_i32_0 = arith.constant 0 : i32
    %c0_i32_1 = arith.constant 0 : i32
    return %c0_i32, %c0_i32_0 : i32, i32
  }
  func.func @transform_5(%arg0: i32) -> (i32, i32) {
    %c0_i32 = arith.constant 0 : i32
    %c0_i32_0 = arith.constant 0 : i32
    %c0_i32_1 = arith.constant 0 : i32
    return %c0_i32, %c0_i32_0 : i32, i32
  }
  func.func @transform_6(%arg0: i32) -> (i32, i32) {
    %c0_i32 = arith.constant 0 : i32
    %c0_i32_0 = arith.constant 0 : i32
    %c0_i32_1 = arith.constant 0 : i32
    return %c0_i32, %c0_i32_0 : i32, i32
  }
  func.func @transform_7(%arg0: i32) -> (i32, i32) {
    %c0_i32 = arith.constant 0 : i32
    %c0_i32_0 = arith.constant 0 : i32
    %c0_i32_1 = arith.constant 0 : i32
    return %c0_i32, %c0_i32_0 : i32, i32
  }
  func.func @transform_8(%arg0: i32) -> (i32, i32) {
    %c0_i32 = arith.constant 0 : i32
    %c0_i32_0 = arith.constant 0 : i32
    %c0_i32_1 = arith.constant 0 : i32
    return %c0_i32, %c0_i32_0 : i32, i32
  }
  func.func @transform_9(%arg0: i32) -> (i32, i32) {
    %c0_i32 = arith.constant 0 : i32
    %c0_i32_0 = arith.constant 0 : i32
    %c0_i32_1 = arith.constant 0 : i32
    return %c0_i32, %c0_i32_0 : i32, i32
  }
  func.func @transform_10(%arg0: i32) -> (i32, i32) {
    %c0_i32 = arith.constant 0 : i32
    %c0_i32_0 = arith.constant 0 : i32
    %c0_i32_1 = arith.constant 0 : i32
    return %c0_i32, %c0_i32_0 : i32, i32
  }
  func.func @transform_11(%arg0: i32) -> (i32, i32) {
    %c0_i32 = arith.constant 0 : i32
    %c0_i32_0 = arith.constant 0 : i32
    %c0_i32_1 = arith.constant 0 : i32
    return %c0_i32, %c0_i32_0 : i32, i32
  }
  func.func @transform_12(%arg0: i32) -> (i32, i32) {
    %c0_i32 = arith.constant 0 : i32
    %c0_i32_0 = arith.constant 0 : i32
    %c0_i32_1 = arith.constant 0 : i32
    return %c0_i32, %c0_i32_0 : i32, i32
  }
  func.func @transform_13(%arg0: i32) -> (i32, i32) {
    %c0_i32 = arith.constant 0 : i32
    %c0_i32_0 = arith.constant 0 : i32
    %c0_i32_1 = arith.constant 0 : i32
    return %c0_i32, %c0_i32_0 : i32, i32
  }
  func.func @transform_14(%arg0: i32) -> (i32, i32) {
    %c0_i32 = arith.constant 0 : i32
    %c0_i32_0 = arith.constant 0 : i32
    %c0_i32_1 = arith.constant 0 : i32
    return %c0_i32, %c0_i32_0 : i32, i32
  }
  func.func @transform_15(%arg0: i32) -> (i32, i32, i32) {
    %c0_i32 = arith.constant 0 : i32
    %c0_i32_0 = arith.constant 0 : i32
    %c0_i32_1 = arith.constant 0 : i32
    return %arg0, %c0_i32, %c0_i32_0 : i32, i32, i32
  }
}

</mosaic_0001>

<llo_original>
// kernel: tpu_custom_call.1
$region0: #{tpu_custom_call.1}
  #allocation0 [shape = 'u32[]', space=smem, size = 0x4, offset = 0x4, fixed_abs, tag = 'smem constant byte address 0x4 - core index']
  #allocation1 [shape = 'u32[144,128]{1,0:T(1,128)}', space=vmem, size = 0x12000, scoped, tag = 'internal scratch']
  %s0 = inlined_call_operand.vmem [shape: f32[2,8,32], index: 0, kind: input, shape index: {}]
  %s1 = inlined_call_operand.vmem [shape: f32[2,8,32], index: 1, kind: input, shape index: {}]
  %s2 = inlined_call_operand.vmem [shape: f32[32,32], index: 2, kind: input, shape index: {}]
  %s3 = inlined_call_operand.vmem [shape: f32[1,32], index: 3, kind: input, shape index: {}]
  %s4 = inlined_call_operand.vmem [shape: f32[1,32], index: 4, kind: input, shape index: {}]
  %s5 = inlined_call_operand.vmem [shape: f32[32,32], index: 5, kind: input, shape index: {}]
  %s6 = inlined_call_operand.vmem [shape: f32[32,32], index: 6, kind: input, shape index: {}]
  %s7 = inlined_call_operand.vmem [shape: f32[32,32], index: 7, kind: input, shape index: {}]
  %s8 = inlined_call_operand.vmem [shape: f32[32,32], index: 8, kind: input, shape index: {}]
  %s9 = inlined_call_operand.vmem [shape: f32[1,32], index: 9, kind: input, shape index: {}]
  %s10 = inlined_call_operand.vmem [shape: f32[1,32], index: 10, kind: input, shape index: {}]
  %s11 = inlined_call_operand.vmem [shape: f32[96,64], index: 11, kind: input, shape index: {}]
  %s12 = inlined_call_operand.vmem [shape: f32[1,64], index: 12, kind: input, shape index: {}]
  %s13 = inlined_call_operand.vmem [shape: f32[192,32], index: 13, kind: input, shape index: {}]
  %s14 = inlined_call_operand.vmem [shape: f32[1,32], index: 14, kind: input, shape index: {}]
  %s15 = inlined_call_operand.hbm [shape: f32[2,8,32], index: 15, kind: output, shape index: {}]
  %s16 = sld [smem:[#allocation0]]
  $region93: #{tpu_custom_call.1} parent=0
    _
  %s18 = ssub.s32 1, %s16
  %s19 = scalar_select 0, %s18, %s16
  $region1: #{tpu_custom_call.1} parent=0
    #allocation2 [shape = 'u8[8192]{0}', space=vmem, size = 0x2000, scoped, tag = 'output window, operand 0']
    #allocation3 [shape = 's32[2]{0}', space=sflag, size = 0x8, scoped, tag = 'scoped memory for tpu_custom_call.1']
    %20 = vsyncpa [#allocation3], 0
    %s21 = scalar_lea.sflag [#allocation3], 1
    %22 = vsyncpa %s21, 0
    loop: start=0, step=1, limit=4
    $region2: #{tpu_custom_call.1} parent=1 // loop_pre_header
      _
    $region3: #{tpu_custom_call.1} parent=1 // loop_header
      %s24 = sphi 0, %s28
      %p25 = scmp.ge.s32.totalorder %s24, 4
      %s34 = sphi 0, %s36
      %s37 = sphi 0, %s34
      %s38 = sphi 0, %s37
      %s54 = sphi 0, %s38
      %s58 = sphi 0, %s58
      %s60 = sphi 0, %s58
      %s61 = sphi 0, %s60
      %s75 = sphi 0, %s61
      %s79 = sphi 0, %s79
      %s81 = sphi 0, %s79
      %s82 = sphi 0, %s81
      %s96 = sphi 0, %s82
      %s100 = sphi 0, %s100
      %s102 = sphi 0, %s100
      %s103 = sphi 0, %s102
      %s117 = sphi 0, %s103
      %s121 = sphi 0, %s121
      %s123 = sphi 0, %s121
      %s124 = sphi 0, %s123
      %s138 = sphi 0, %s124
      %s142 = sphi 0, %s142
      %s144 = sphi 0, %s142
      %s145 = sphi 0, %s144
      %s159 = sphi 0, %s145
      %s163 = sphi 0, %s163
      %s165 = sphi 0, %s163
      %s166 = sphi 0, %s165
      %s180 = sphi 0, %s166
      %s184 = sphi 0, %s184
      %s186 = sphi 0, %s184
      %s187 = sphi 0, %s186
      %s201 = sphi 0, %s187
      %s205 = sphi 0, %s205
      %s207 = sphi 0, %s205
      %s208 = sphi 0, %s207
      %s222 = sphi 0, %s208
      %s226 = sphi 0, %s226
      %s228 = sphi 0, %s226
      %s229 = sphi 0, %s228
      %s243 = sphi 0, %s229
      %s247 = sphi 0, %s247
      %s249 = sphi 0, %s247
      %s250 = sphi 0, %s249
      %s264 = sphi 0, %s250
      %s268 = sphi 0, %s268
      %s270 = sphi 0, %s268
      %s271 = sphi 0, %s270
      %s285 = sphi 0, %s271
      %s289 = sphi 0, %s289
      %s291 = sphi 0, %s289
      %s292 = sphi 0, %s291
      %s306 = sphi 0, %s292
      %s310 = sphi 0, %s310
      %s312 = sphi 0, %s310
      %s313 = sphi 0, %s312
      %s327 = sphi 0, %s313
      %s331 = sphi 0, %s331
      %s333 = sphi 0, %s331
      %s334 = sphi 0, %s333
      %s348 = sphi 0, %s334
      %s354 = sphi 0, %s356
      %s357 = sphi 0, %s354
      %s358 = sphi 0, %s357
      %s374 = sphi 0, %s358
    $region4: #{tpu_custom_call.1} parent=1 // loop_header_branch
      %27 = sbr.rel (%p25) target = $region8
    $region5: #{tpu_custom_call.1} parent=1 // loop_body
      %s29 = ssub.s32 %s24, 1
      %s30 = ssub.s32 %s24, 2
      %s31 = sadd.s32 %s24, 1
      %s32 = ssub.s32 %s24, %s31
      %p33 = scmp.eq.s32.totalorder %s32, 0
      %s35 = sadd.s32 %s34, 1
      %s36 = scalar_select %p33, %s34, %s35
      %p39 = pneg %p33
      %p40 = scmp.eq.s32.totalorder %s24, 1
      %p41 = por %p39, %p40
      %p42 = scmp.ne.s32.totalorder %s34, %s37
      %p43 = scmp.eq.s32.totalorder %s24, 0
      %p44 = por %p42, %p43
      %p45 = scmp.ne.s32.totalorder %s34, %s37
      %p46 = scmp.eq.s32.totalorder %s29, 1
      %p47 = por %p45, %p46
      %p48 = scmp.ne.s32.totalorder %s37, %s38
      %p49 = scmp.eq.s32.totalorder %s29, 0
      %p50 = por %p48, %p49
      %p51 = scmp.ne.s32.totalorder %s37, %s38
      %p52 = scmp.eq.s32.totalorder %s30, 1
      %p53 = por %p51, %p52
      %p55 = scmp.ne.s32.totalorder %s38, %s54
      %p56 = scmp.eq.s32.totalorder %s30, 0
      %p57 = por %p55, %p56
      %s59 = sadd.s32 %s58, 1
      %p62 = scmp.eq.s32.totalorder %s24, 1
      %p63 = scmp.ne.s32.totalorder %s58, %s60
      %p64 = scmp.eq.s32.totalorder %s24, 0
      %p65 = por %p63, %p64
      %p66 = scmp.ne.s32.totalorder %s58, %s60
      %p67 = scmp.eq.s32.totalorder %s29, 1
      %p68 = por %p66, %p67
      %p69 = scmp.ne.s32.totalorder %s60, %s61
      %p70 = scmp.eq.s32.totalorder %s29, 0
      %p71 = por %p69, %p70
      %p72 = scmp.ne.s32.totalorder %s60, %s61
      %p73 = scmp.eq.s32.totalorder %s30, 1
      %p74 = por %p72, %p73
      %p76 = scmp.ne.s32.totalorder %s61, %s75
      %p77 = scmp.eq.s32.totalorder %s30, 0
      %p78 = por %p76, %p77
      %s80 = sadd.s32 %s79, 1
      %p83 = scmp.eq.s32.totalorder %s24, 1
      %p84 = scmp.ne.s32.totalorder %s79, %s81
      %p85 = scmp.eq.s32.totalorder %s24, 0
      %p86 = por %p84, %p85
      %p87 = scmp.ne.s32.totalorder %s79, %s81
      %p88 = scmp.eq.s32.totalorder %s29, 1
      %p89 = por %p87, %p88
      %p90 = scmp.ne.s32.totalorder %s81, %s82
      %p91 = scmp.eq.s32.totalorder %s29, 0
      %p92 = por %p90, %p91
      %p93 = scmp.ne.s32.totalorder %s81, %s82
      %p94 = scmp.eq.s32.totalorder %s30, 1
      %p95 = por %p93, %p94
      %p97 = scmp.ne.s32.totalorder %s82, %s96
      %p98 = scmp.eq.s32.totalorder %s30, 0
      %p99 = por %p97, %p98
      %s101 = sadd.s32 %s100, 1
      %p104 = scmp.eq.s32.totalorder %s24, 1
      %p105 = scmp.ne.s32.totalorder %s100, %s102
      %p106 = scmp.eq.s32.totalorder %s24, 0
      %p107 = por %p105, %p106
      %p108 = scmp.ne.s32.totalorder %s100, %s102
      %p109 = scmp.eq.s32.totalorder %s29, 1
      %p110 = por %p108, %p109
      %p111 = scmp.ne.s32.totalorder %s102, %s103
      %p112 = scmp.eq.s32.totalorder %s29, 0
      %p113 = por %p111, %p112
      %p114 = scmp.ne.s32.totalorder %s102, %s103
      %p115 = scmp.eq.s32.totalorder %s30, 1
      %p116 = por %p114, %p115
      %p118 = scmp.ne.s32.totalorder %s103, %s117
      %p119 = scmp.eq.s32.totalorder %s30, 0
      %p120 = por %p118, %p119
      %s122 = sadd.s32 %s121, 1
      %p125 = scmp.eq.s32.totalorder %s24, 1
      %p126 = scmp.ne.s32.totalorder %s121, %s123
      %p127 = scmp.eq.s32.totalorder %s24, 0
      %p128 = por %p126, %p127
      %p129 = scmp.ne.s32.totalorder %s121, %s123
      %p130 = scmp.eq.s32.totalorder %s29, 1
      %p131 = por %p129, %p130
      %p132 = scmp.ne.s32.totalorder %s123, %s124
      %p133 = scmp.eq.s32.totalorder %s29, 0
      %p134 = por %p132, %p133
      %p135 = scmp.ne.s32.totalorder %s123, %s124
      %p136 = scmp.eq.s32.totalorder %s30, 1
      %p137 = por %p135, %p136
      %p139 = scmp.ne.s32.totalorder %s124, %s138
      %p140 = scmp.eq.s32.totalorder %s30, 0
      %p141 = por %p139, %p140
      %s143 = sadd.s32 %s142, 1
      %p146 = scmp.eq.s32.totalorder %s24, 1
      %p147 = scmp.ne.s32.totalorder %s142, %s144
      %p148 = scmp.eq.s32.totalorder %s24, 0
      %p149 = por %p147, %p148
      %p150 = scmp.ne.s32.totalorder %s142, %s144
      %p151 = scmp.eq.s32.totalorder %s29, 1
      %p152 = por %p150, %p151
      %p153 = scmp.ne.s32.totalorder %s144, %s145
      %p154 = scmp.eq.s32.totalorder %s29, 0
      %p155 = por %p153, %p154
      %p156 = scmp.ne.s32.totalorder %s144, %s145
      %p157 = scmp.eq.s32.totalorder %s30, 1
      %p158 = por %p156, %p157
      %p160 = scmp.ne.s32.totalorder %s145, %s159
      %p161 = scmp.eq.s32.totalorder %s30, 0
      %p162 = por %p160, %p161
      %s164 = sadd.s32 %s163, 1
      %p167 = scmp.eq.s32.totalorder %s24, 1
      %p168 = scmp.ne.s32.totalorder %s163, %s165
      %p169 = scmp.eq.s32.totalorder %s24, 0
      %p170 = por %p168, %p169
      %p171 = scmp.ne.s32.totalorder %s163, %s165
      %p172 = scmp.eq.s32.totalorder %s29, 1
      %p173 = por %p171, %p172
      %p174 = scmp.ne.s32.totalorder %s165, %s166
      %p175 = scmp.eq.s32.totalorder %s29, 0
      %p176 = por %p174, %p175
      %p177 = scmp.ne.s32.totalorder %s165, %s166
      %p178 = scmp.eq.s32.totalorder %s30, 1
      %p179 = por %p177, %p178
      %p181 = scmp.ne.s32.totalorder %s166, %s180
      %p182 = scmp.eq.s32.totalorder %s30, 0
      %p183 = por %p181, %p182
      %s185 = sadd.s32 %s184, 1
      %p188 = scmp.eq.s32.totalorder %s24, 1
      %p189 = scmp.ne.s32.totalorder %s184, %s186
      %p190 = scmp.eq.s32.totalorder %s24, 0
      %p191 = por %p189, %p190
      %p192 = scmp.ne.s32.totalorder %s184, %s186
      %p193 = scmp.eq.s32.totalorder %s29, 1
      %p194 = por %p192, %p193
      %p195 = scmp.ne.s32.totalorder %s186, %s187
      %p196 = scmp.eq.s32.totalorder %s29, 0
      %p197 = por %p195, %p196
      %p198 = scmp.ne.s32.totalorder %s186, %s187
      %p199 = scmp.eq.s32.totalorder %s30, 1
      %p200 = por %p198, %p199
      %p202 = scmp.ne.s32.totalorder %s187, %s201
      %p203 = scmp.eq.s32.totalorder %s30, 0
      %p204 = por %p202, %p203
      %s206 = sadd.s32 %s205, 1
      %p209 = scmp.eq.s32.totalorder %s24, 1
      %p210 = scmp.ne.s32.totalorder %s205, %s207
      %p211 = scmp.eq.s32.totalorder %s24, 0
      %p212 = por %p210, %p211
      %p213 = scmp.ne.s32.totalorder %s205, %s207
      %p214 = scmp.eq.s32.totalorder %s29, 1
      %p215 = por %p213, %p214
      %p216 = scmp.ne.s32.totalorder %s207, %s208
      %p217 = scmp.eq.s32.totalorder %s29, 0
      %p218 = por %p216, %p217
      %p219 = scmp.ne.s32.totalorder %s207, %s208
      %p220 = scmp.eq.s32.totalorder %s30, 1
      %p221 = por %p219, %p220
      %p223 = scmp.ne.s32.totalorder %s208, %s222
      %p224 = scmp.eq.s32.totalorder %s30, 0
      %p225 = por %p223, %p224
      %s227 = sadd.s32 %s226, 1
      %p230 = scmp.eq.s32.totalorder %s24, 1
      %p231 = scmp.ne.s32.totalorder %s226, %s228
      %p232 = scmp.eq.s32.totalorder %s24, 0
      %p233 = por %p231, %p232
      %p234 = scmp.ne.s32.totalorder %s226, %s228
      %p235 = scmp.eq.s32.totalorder %s29, 1
      %p236 = por %p234, %p235
      %p237 = scmp.ne.s32.totalorder %s228, %s229
      %p238 = scmp.eq.s32.totalorder %s29, 0
      %p239 = por %p237, %p238
      %p240 = scmp.ne.s32.totalorder %s228, %s229
      %p241 = scmp.eq.s32.totalorder %s30, 1
      %p242 = por %p240, %p241
      %p244 = scmp.ne.s32.totalorder %s229, %s243
      %p245 = scmp.eq.s32.totalorder %s30, 0
      %p246 = por %p244, %p245
      %s248 = sadd.s32 %s247, 1
      %p251 = scmp.eq.s32.totalorder %s24, 1
      %p252 = scmp.ne.s32.totalorder %s247, %s249
      %p253 = scmp.eq.s32.totalorder %s24, 0
      %p254 = por %p252, %p253
      %p255 = scmp.ne.s32.totalorder %s247, %s249
      %p256 = scmp.eq.s32.totalorder %s29, 1
      %p257 = por %p255, %p256
      %p258 = scmp.ne.s32.totalorder %s249, %s250
      %p259 = scmp.eq.s32.totalorder %s29, 0
      %p260 = por %p258, %p259
      %p261 = scmp.ne.s32.totalorder %s249, %s250
      %p262 = scmp.eq.s32.totalorder %s30, 1
      %p263 = por %p261, %p262
      %p265 = scmp.ne.s32.totalorder %s250, %s264
      %p266 = scmp.eq.s32.totalorder %s30, 0
      %p267 = por %p265, %p266
      %s269 = sadd.s32 %s268, 1
      %p272 = scmp.eq.s32.totalorder %s24, 1
      %p273 = scmp.ne.s32.totalorder %s268, %s270
      %p274 = scmp.eq.s32.totalorder %s24, 0
      %p275 = por %p273, %p274
      %p276 = scmp.ne.s32.totalorder %s268, %s270
      %p277 = scmp.eq.s32.totalorder %s29, 1
      %p278 = por %p276, %p277
      %p279 = scmp.ne.s32.totalorder %s270, %s271
      %p280 = scmp.eq.s32.totalorder %s29, 0
      %p281 = por %p279, %p280
      %p282 = scmp.ne.s32.totalorder %s270, %s271
      %p283 = scmp.eq.s32.totalorder %s30, 1
      %p284 = por %p282, %p283
      %p286 = scmp.ne.s32.totalorder %s271, %s285
      %p287 = scmp.eq.s32.totalorder %s30, 0
      %p288 = por %p286, %p287
      %s290 = sadd.s32 %s289, 1
      %p293 = scmp.eq.s32.totalorder %s24, 1
      %p294 = scmp.ne.s32.totalorder %s289, %s291
      %p295 = scmp.eq.s32.totalorder %s24, 0
      %p296 = por %p294, %p295
      %p297 = scmp.ne.s32.totalorder %s289, %s291
      %p298 = scmp.eq.s32.totalorder %s29, 1
      %p299 = por %p297, %p298
      %p300 = scmp.ne.s32.totalorder %s291, %s292
      %p301 = scmp.eq.s32.totalorder %s29, 0
      %p302 = por %p300, %p301
      %p303 = scmp.ne.s32.totalorder %s291, %s292
      %p304 = scmp.eq.s32.totalorder %s30, 1
      %p305 = por %p303, %p304
      %p307 = scmp.ne.s32.totalorder %s292, %s306
      %p308 = scmp.eq.s32.totalorder %s30, 0
      %p309 = por %p307, %p308
      %s311 = sadd.s32 %s310, 1
      %p314 = scmp.eq.s32.totalorder %s24, 1
      %p315 = scmp.ne.s32.totalorder %s310, %s312
      %p316 = scmp.eq.s32.totalorder %s24, 0
      %p317 = por %p315, %p316
      %p318 = scmp.ne.s32.totalorder %s310, %s312
      %p319 = scmp.eq.s32.totalorder %s29, 1
      %p320 = por %p318, %p319
      %p321 = scmp.ne.s32.totalorder %s312, %s313
      %p322 = scmp.eq.s32.totalorder %s29, 0
      %p323 = por %p321, %p322
      %p324 = scmp.ne.s32.totalorder %s312, %s313
      %p325 = scmp.eq.s32.totalorder %s30, 1
      %p326 = por %p324, %p325
      %p328 = scmp.ne.s32.totalorder %s313, %s327
      %p329 = scmp.eq.s32.totalorder %s30, 0
      %p330 = por %p328, %p329
      %s332 = sadd.s32 %s331, 1
      %p335 = scmp.eq.s32.totalorder %s24, 1
      %p336 = scmp.ne.s32.totalorder %s331, %s333
      %p337 = scmp.eq.s32.totalorder %s24, 0
      %p338 = por %p336, %p337
      %p339 = scmp.ne.s32.totalorder %s331, %s333
      %p340 = scmp.eq.s32.totalorder %s29, 1
      %p341 = por %p339, %p340
      %p342 = scmp.ne.s32.totalorder %s333, %s334
      %p343 = scmp.eq.s32.totalorder %s29, 0
      %p344 = por %p342, %p343
      %p345 = scmp.ne.s32.totalorder %s333, %s334
      %p346 = scmp.eq.s32.totalorder %s30, 1
      %p347 = por %p345, %p346
      %p349 = scmp.ne.s32.totalorder %s334, %s348
      %p350 = scmp.eq.s32.totalorder %s30, 0
      %p351 = por %p349, %p350
      %s352 = ssub.s32 %s24, %s31
      %p353 = scmp.eq.s32.totalorder %s352, 0
      %s355 = sadd.s32 %s354, 1
      %s356 = scalar_select %p353, %s354, %s355
      %p359 = pneg %p353
      %p360 = scmp.eq.s32.totalorder %s24, 1
      %p361 = por %p359, %p360
      %p362 = scmp.ne.s32.totalorder %s354, %s357
      %p363 = scmp.eq.s32.totalorder %s24, 0
      %p364 = por %p362, %p363
      %p365 = scmp.ne.s32.totalorder %s354, %s357
      %p366 = scmp.eq.s32.totalorder %s29, 1
      %p367 = por %p365, %p366
      %p368 = scmp.ne.s32.totalorder %s357, %s358
      %p369 = scmp.eq.s32.totalorder %s29, 0
      %p370 = por %p368, %p369
      %p371 = scmp.ne.s32.totalorder %s357, %s358
      %p372 = scmp.eq.s32.totalorder %s30, 1
      %p373 = por %p371, %p372
      %p375 = scmp.ne.s32.totalorder %s358, %s374
      %p376 = scmp.eq.s32.totalorder %s30, 0
      %p377 = por %p375, %p376
      %p378 = scmp.le.s32.totalorder 1, %s24
      %p379 = scmp.lt.s32.totalorder %s24, 3
      %p380 = pnand %p378, %p379
      %p381 = pneg %p380
      // Predicated region
      $region9: #{tpu_custom_call.1} parent=5 // pred_check
        _
      $region10: #{tpu_custom_call.1} parent=5 // pred_check_branch
        %383 = sbr.rel (%p380) target = $region12
      $region11: #{tpu_custom_call.1} parent=5 // pred_region
        %s384 = ssub.s32 %s24, 1
        // Predicated region
        $region13: #{tpu_custom_call.1} parent=11 // pred_check
          %p385 = pneg %p71
        $region14: #{tpu_custom_call.1} parent=11 // pred_check_branch
          %387 = sbr.rel (%p385) target = $region16
        $region15: #{tpu_custom_call.1} parent=11 // pred_region
          _
        $region16: #{tpu_custom_call.1} parent=11 // pred_fallthru
          _
        // Predicated region
        $region17: #{tpu_custom_call.1} parent=11 // pred_check
          %p388 = pneg %p92
        $region18: #{tpu_custom_call.1} parent=11 // pred_check_branch
          %390 = sbr.rel (%p388) target = $region20
        $region19: #{tpu_custom_call.1} parent=11 // pred_region
          _
        $region20: #{tpu_custom_call.1} parent=11 // pred_fallthru
          _
        // Predicated region
        $region21: #{tpu_custom_call.1} parent=11 // pred_check
          %p391 = pneg %p113
        $region22: #{tpu_custom_call.1} parent=11 // pred_check_branch
          %393 = sbr.rel (%p391) target = $region24
        $region23: #{tpu_custom_call.1} parent=11 // pred_region
          _
        $region24: #{tpu_custom_call.1} parent=11 // pred_fallthru
          _
        // Predicated region
        $region25: #{tpu_custom_call.1} parent=11 // pred_check
          %p394 = pneg %p134
        $region26: #{tpu_custom_call.1} parent=11 // pred_check_branch
          %396 = sbr.rel (%p394) target = $region28
        $region27: #{tpu_custom_call.1} parent=11 // pred_region
          _
        $region28: #{tpu_custom_call.1} parent=11 // pred_fallthru
          _
        // Predicated region
        $region29: #{tpu_custom_call.1} parent=11 // pred_check
          %p397 = pneg %p155
        $region30: #{tpu_custom_call.1} parent=11 // pred_check_branch
          %399 = sbr.rel (%p397) target = $region32
        $region31: #{tpu_custom_call.1} parent=11 // pred_region
          _
        $region32: #{tpu_custom_call.1} parent=11 // pred_fallthru
          _
        // Predicated region
        $region33: #{tpu_custom_call.1} parent=11 // pred_check
          %p400 = pneg %p176
        $region34: #{tpu_custom_call.1} parent=11 // pred_check_branch
          %402 = sbr.rel (%p400) target = $region36
        $region35: #{tpu_custom_call.1} parent=11 // pred_region
          _
        $region36: #{tpu_custom_call.1} parent=11 // pred_fallthru
          _
        // Predicated region
        $region37: #{tpu_custom_call.1} parent=11 // pred_check
          %p403 = pneg %p197
        $region38: #{tpu_custom_call.1} parent=11 // pred_check_branch
          %405 = sbr.rel (%p403) target = $region40
        $region39: #{tpu_custom_call.1} parent=11 // pred_region
          _
        $region40: #{tpu_custom_call.1} parent=11 // pred_fallthru
          _
        // Predicated region
        $region41: #{tpu_custom_call.1} parent=11 // pred_check
          %p406 = pneg %p218
        $region42: #{tpu_custom_call.1} parent=11 // pred_check_branch
          %408 = sbr.rel (%p406) target = $region44
        $region43: #{tpu_custom_call.1} parent=11 // pred_region
          _
        $region44: #{tpu_custom_call.1} parent=11 // pred_fallthru
          _
        // Predicated region
        $region45: #{tpu_custom_call.1} parent=11 // pred_check
          %p409 = pneg %p239
        $region46: #{tpu_custom_call.1} parent=11 // pred_check_branch
          %411 = sbr.rel (%p409) target = $region48
        $region47: #{tpu_custom_call.1} parent=11 // pred_region
          _
        $region48: #{tpu_custom_call.1} parent=11 // pred_fallthru
          _
        // Predicated region
        $region49: #{tpu_custom_call.1} parent=11 // pred_check
          %p412 = pneg %p260
        $region50: #{tpu_custom_call.1} parent=11 // pred_check_branch
          %414 = sbr.rel (%p412) target = $region52
        $region51: #{tpu_custom_call.1} parent=11 // pred_region
          _
        $region52: #{tpu_custom_call.1} parent=11 // pred_fallthru
          _
        // Predicated region
        $region53: #{tpu_custom_call.1} parent=11 // pred_check
          %p415 = pneg %p281
        $region54: #{tpu_custom_call.1} parent=11 // pred_check_branch
          %417 = sbr.rel (%p415) target = $region56
        $region55: #{tpu_custom_call.1} parent=11 // pred_region
          _
        $region56: #{tpu_custom_call.1} parent=11 // pred_fallthru
          _
        // Predicated region
        $region57: #{tpu_custom_call.1} parent=11 // pred_check
          %p418 = pneg %p302
        $region58: #{tpu_custom_call.1} parent=11 // pred_check_branch
          %420 = sbr.rel (%p418) target = $region60
        $region59: #{tpu_custom_call.1} parent=11 // pred_region
          _
        $region60: #{tpu_custom_call.1} parent=11 // pred_fallthru
          _
        // Predicated region
        $region61: #{tpu_custom_call.1} parent=11 // pred_check
          %p421 = pneg %p323
        $region62: #{tpu_custom_call.1} parent=11 // pred_check_branch
          %423 = sbr.rel (%p421) target = $region64
        $region63: #{tpu_custom_call.1} parent=11 // pred_region
          _
        $region64: #{tpu_custom_call.1} parent=11 // pred_fallthru
          _
        // Predicated region
        $region65: #{tpu_custom_call.1} parent=11 // pred_check
          %p424 = pneg %p344
        $region66: #{tpu_custom_call.1} parent=11 // pred_check_branch
          %426 = sbr.rel (%p424) target = $region68
        $region67: #{tpu_custom_call.1} parent=11 // pred_region
          _
        $region68: #{tpu_custom_call.1} parent=11 // pred_fallthru
          _
      $region12: #{tpu_custom_call.1} parent=5 // pred_fallthru
        _
      %p427 = scmp.lt.s32.totalorder %s24, 2
      // Predicated region
      $region69: #{tpu_custom_call.1} parent=5 // pred_check
        %p428 = pneg %p427
      $region70: #{tpu_custom_call.1} parent=5 // pred_check_branch
        %430 = sbr.rel (%p428) target = $region72
      $region71: #{tpu_custom_call.1} parent=5 // pred_region
        // Predicated region
        $region73: #{tpu_custom_call.1} parent=71 // pred_check
          %p431 = pneg %p44
        $region74: #{tpu_custom_call.1} parent=71 // pred_check_branch
          %433 = sbr.rel (%p431) target = $region76
        $region75: #{tpu_custom_call.1} parent=71 // pred_region
          %p434 = scmp.lt.s32.totalorder %s24, 1
          %s435 = scalar_select %p434, %s24, 1
          %s436 = smul.addr %s435, 8
          %s437 = scalar_lea.vmem %s0, %s436
        $region76: #{tpu_custom_call.1} parent=71 // pred_fallthru
          _
      $region72: #{tpu_custom_call.1} parent=5 // pred_fallthru
        _
      %p438 = scmp.le.s32.totalorder 1, %s24
      %p439 = scmp.lt.s32.totalorder %s24, 3
      %p440 = pnand %p438, %p439
      %p441 = pneg %p440
      // Predicated region
      $region77: #{tpu_custom_call.1} parent=5 // pred_check
        _
      $region78: #{tpu_custom_call.1} parent=5 // pred_check_branch
        %443 = sbr.rel (%p440) target = $region80
      $region79: #{tpu_custom_call.1} parent=5 // pred_region
        %s444 = ssub.s32 %s24, 1
        %p445 = scmp.lt.s32.totalorder %s29, 1
        %s446 = scalar_select %p445, %s29, 1
        %s447 = smul.addr %s446, 8
        %s448 = scalar_lea.vmem %s0, %s447
        %p449 = pneg %p50
        %p450 = pneg %p47
        %p451 = pneg %p71
        %p452 = pneg %p68
        %p453 = pneg %p92
        %p454 = pneg %p89
        %p455 = pneg %p113
        %p456 = pneg %p110
        %p457 = pneg %p134
        %p458 = pneg %p131
        %p459 = pneg %p155
        %p460 = pneg %p152
        %p461 = pneg %p176
        %p462 = pneg %p173
        %p463 = pneg %p197
        %p464 = pneg %p194
        %p465 = pneg %p218
        %p466 = pneg %p215
        %p467 = pneg %p239
        %p468 = pneg %p236
        %p469 = pneg %p260
        %p470 = pneg %p257
        %p471 = pneg %p281
        %p472 = pneg %p278
        %p473 = pneg %p302
        %p474 = pneg %p299
        %p475 = pneg %p323
        %p476 = pneg %p320
        %p477 = pneg %p344
        %p478 = pneg %p341
        %p479 = pneg %p370
        %p480 = pneg %p367
        %s481 = sand.u32 %s357, 1
        %s482 = scalar_lea.sflag [#allocation3], %s481
        %s483 = sand.u32 %s357, 1
        %s484 = smul.addr %s483, 8
        %s485 = scalar_lea.vmem [#allocation2], %s484
        %p486 = scmp.lt.s32.totalorder %s29, 1
        %s487 = scalar_select %p486, %s29, 1
        %s488 = smul.addr %s487, 8
        %s489 = scalar_lea.vmem %s0, %s488
        %v490 = vld [vmem:[%s489] sm:$0xff]
        %v491 = vld [vmem:[%s2] sm:$0xff]
        %v492 = vld [vmem:[%s2 + $0x8] sm:$0xff]
        %v493 = vld [vmem:[%s2 + $0x10] sm:$0xff]
        %v494 = vld [vmem:[%s2 + $0x18] sm:$0xff]
        %v495 = vld [vmem:[%s3] sm:$0x1]
        %v496 = vld [vmem:[%s4] sm:$0x1]
        %v497 = vld [vmem:[%s9] sm:$0x1]
        %v498 = vld [vmem:[%s10] sm:$0x1]
        %v499 = vld [vmem:[%s5] sm:$0xff]
        %v500 = vld [vmem:[%s5 + $0x8] sm:$0xff]
        %v501 = vld [vmem:[%s5 + $0x10] sm:$0xff]
        %v502 = vld [vmem:[%s5 + $0x18] sm:$0xff]
        %v503 = vld [vmem:[%s6] sm:$0xff]
        %v504 = vld [vmem:[%s6 + $0x8] sm:$0xff]
        %v505 = vld [vmem:[%s6 + $0x10] sm:$0xff]
        %v506 = vld [vmem:[%s6 + $0x18] sm:$0xff]
        %v507 = vld [vmem:[%s7] sm:$0xff]
        %v508 = vld [vmem:[%s7 + $0x8] sm:$0xff]
        %v509 = vld [vmem:[%s7 + $0x10] sm:$0xff]
        %v510 = vld [vmem:[%s7 + $0x18] sm:$0xff]
        %v511 = vld [vmem:[%s8] sm:$0xff]
        %v512 = vld [vmem:[%s8 + $0x8] sm:$0xff]
        %v513 = vld [vmem:[%s8 + $0x10] sm:$0xff]
        %v514 = vld [vmem:[%s8 + $0x18] sm:$0xff]
        %v515 = vld [vmem:[%s11] sm:$0xff]
        %v516 = vld [vmem:[%s11 + $0x8] sm:$0xff]
        %v517 = vld [vmem:[%s11 + $0x10] sm:$0xff]
        %v518 = vld [vmem:[%s11 + $0x18] sm:$0xff]
        %v519 = vld [vmem:[%s11 + $0x20] sm:$0xff]
        %v520 = vld [vmem:[%s11 + $0x28] sm:$0xff]
        %v521 = vld [vmem:[%s11 + $0x30] sm:$0xff]
        %v522 = vld [vmem:[%s11 + $0x38] sm:$0xff]
        %v523 = vld [vmem:[%s11 + $0x40] sm:$0xff]
        %v524 = vld [vmem:[%s11 + $0x48] sm:$0xff]
        %v525 = vld [vmem:[%s11 + $0x50] sm:$0xff]
        %v526 = vld [vmem:[%s11 + $0x58] sm:$0xff]
        %v527 = vld [vmem:[%s12] sm:$0x1]
        %v528 = vld [vmem:[%s13] sm:$0xff]
        %v529 = vld [vmem:[%s13 + $0x8] sm:$0xff]
        %v530 = vld [vmem:[%s13 + $0x10] sm:$0xff]
        %v531 = vld [vmem:[%s13 + $0x18] sm:$0xff]
        %v532 = vld [vmem:[%s13 + $0x20] sm:$0xff]
        %v533 = vld [vmem:[%s13 + $0x28] sm:$0xff]
        %v534 = vld [vmem:[%s13 + $0x30] sm:$0xff]
        %v535 = vld [vmem:[%s13 + $0x38] sm:$0xff]
        %v536 = vld [vmem:[%s13 + $0x40] sm:$0xff]
        %v537 = vld [vmem:[%s13 + $0x48] sm:$0xff]
        %v538 = vld [vmem:[%s13 + $0x50] sm:$0xff]
        %v539 = vld [vmem:[%s13 + $0x58] sm:$0xff]
        %v540 = vld [vmem:[%s13 + $0x60] sm:$0xff]
        %v541 = vld [vmem:[%s13 + $0x68] sm:$0xff]
        %v542 = vld [vmem:[%s13 + $0x70] sm:$0xff]
        %v543 = vld [vmem:[%s13 + $0x78] sm:$0xff]
        %v544 = vld [vmem:[%s13 + $0x80] sm:$0xff]
        %v545 = vld [vmem:[%s13 + $0x88] sm:$0xff]
        %v546 = vld [vmem:[%s13 + $0x90] sm:$0xff]
        %v547 = vld [vmem:[%s13 + $0x98] sm:$0xff]
        %v548 = vld [vmem:[%s13 + $0xa0] sm:$0xff]
        %v549 = vld [vmem:[%s13 + $0xa8] sm:$0xff]
        %v550 = vld [vmem:[%s13 + $0xb0] sm:$0xff]
        %v551 = vld [vmem:[%s13 + $0xb8] sm:$0xff]
        %v552 = vld [vmem:[%s14] sm:$0x1]
        %v553 = vld [vmem:[%s1] sm:$0xff]
        %vm554 = vcmask 261120
        %v556 = vsel %vm554, %v490, 0
        %558 = vmatprep.subr.mxu0 0.0
        %559 = vmatpush1.msra.mxu0 %v491
        %560 = vmatprep.subr.mxu0 0.0
        %561 = vmatpush1.msra.mxu0 %v492
        %562 = vmatprep.subr.mxu0 0.0
        %563 = vmatpush1.msra.mxu0 %v493
        %564 = vmatprep.subr.mxu0 0.0
        %565 = vmatpush1.msra.mxu0 %v494
        %566 = vmatprep.subr.mxu0 0.0
        %567 = vmatpush1.msra.mxu0 0.0
        %568 = vmatprep.subr.mxu0 0.0
        %569 = vmatpush1.msra.mxu0 0.0
        %570 = vmatprep.subr.mxu0 0.0
        %571 = vmatpush1.msra.mxu0 0.0
        %572 = vmatprep.subr.mxu0 0.0
        %573 = vmatpush1.msra.mxu0 0.0
        %574 = vmatprep.subr.mxu0 0.0
        %575 = vmatpush1.msra.mxu0 0.0
        %576 = vmatprep.subr.mxu0 0.0
        %577 = vmatpush1.msra.mxu0 0.0
        %578 = vmatprep.subr.mxu0 0.0
        %579 = vmatpush1.msra.mxu0 0.0
        %580 = vmatprep.subr.mxu0 0.0
        %581 = vmatpush1.msra.mxu0 0.0
        %582 = vmatprep.subr.mxu0 0.0
        %583 = vmatpush1.msra.mxu0 0.0
        %584 = vmatprep.subr.mxu0 0.0
        %585 = vmatpush1.msra.mxu0 0.0
        %586 = vmatprep.subr.mxu0 0.0
        %587 = vmatpush1.msra.mxu0 0.0
        %588 = vmatprep.subr.mxu0 0.0
        %589 = vmatpush1.msra.mxu0 0.0
        %590 = vmatprep.subr.mxu0 0.0
        %591 = vmatpush1.msra.mxu0 0.0
        %592 = vmatprep.subr.mxu0 0.0
        %593 = vmatpush1.msra.mxu0 0.0
        %594 = vmatprep.subr.mxu0 0.0
        %595 = vmatpush1.msra.mxu0 0.0
        %596 = vmatprep.subr.mxu0 0.0
        %597 = vmatpush1.msra.mxu0 0.0
        %598 = vmatprep.subr.mxu0 0.0
        %599 = vmatpush1.msra.mxu0 0.0
        %600 = vmatprep.subr.mxu0 0.0
        %601 = vmatpush1.msra.mxu0 0.0
        %602 = vmatprep.subr.mxu0 0.0
        %603 = vmatpush1.msra.mxu0 0.0
        %604 = vmatprep.subr.mxu0 0.0
        %605 = vmatpush1.msra.mxu0 0.0
        %606 = vmatprep.subr.mxu0 0.0
        %607 = vmatpush1.msra.mxu0 0.0
        %608 = vmatprep.subr.mxu0 0.0
        %609 = vmatpush1.msra.mxu0 0.0
        %610 = vmatprep.subr.mxu0 0.0
        %611 = vmatpush1.msra.mxu0 0.0
        %612 = vmatprep.subr.mxu0 0.0
        %613 = vmatpush1.msra.mxu0 0.0
        %614 = vmatprep.subr.mxu0 0.0
        %615 = vmatpush1.msra.mxu0 0.0
        %616 = vmatprep.subr.mxu0 0.0
        %617 = vmatpush1.msra.mxu0 0.0
        %618 = vmatprep.subr.mxu0 0.0
        %619 = vmatpush1.msra.mxu0 0.0
        %620 = vmatprep.subr.mxu0 0.0
        %621 = vmatpush1.msra.mxu0 0.0
        %622 = vmatprep.mubr.f32.mxu0 0.0
        %623 = vmatmul.mubr.f32.gmra.mrb[0].mxu0 %v556
        %v624 = vpop.f32.mrb[0].mxu0
        %v625 = vadd.f32 %v553, %v624
        %v626 = vpop.f32.mrb[0].mxu0
        %627 = vdwg.mxu0
        %v628 = vsel %vm554, %v625, 0.0
        %629 = vadd.xlane.f32.xlu0 %v628
        %v630 = vpop.xlane.xlu0 %629
        %v631 = vrcp.pop 32.0
        %v632 = vmul.f32 %v630, %v631
        %v633 = vsub.f32 %v625, %v632
        %v634 = vmul.f32 %v633, %v633
        %v635 = vsel %vm554, %v634, 0.0
        %636 = vadd.xlane.f32.xlu0 %v635
        %v637 = vpop.xlane.xlu0 %636
        %v638 = vrcp.pop 31.0
        %v639 = vmul.f32 %v637, %v638
        %v640 = vrsqrt.pop %v639
        %v641 = vmul.f32 %v639, %v640
        %vm642 = vcmp.eq.f32.partialorder %v639, inf
        %v643 = vsel %vm642, %v639, %v641
        %vm644 = vcmp.eq.f32.partialorder %v639, 0.0
        %v645 = vand.u32 %v639, 2147483648
        %v646 = vsel %vm644, %v645, %v643
        %v647 = vadd.f32 %v646, 1e-06
        %v648 = vrcp.pop %v647
        %v649 = vmul.f32 1.0, %v648
        %v650 = vmul.f32 %v633, %v649
        %v652 = vlaneseq
        %v653 = vshrl.u32 %v652, 7
        %v654 = vsub.s32 0, %v653
        %v655 = vrot.slane %v495, %v654
        %v657 = vmul.f32 %v655, %v650
        %v659 = vlaneseq
        %v660 = vshrl.u32 %v659, 7
        %v661 = vsub.s32 0, %v660
        %v662 = vrot.slane %v496, %v661
        %v664 = vadd.f32 %v657, %v662
        %v666 = vsel %vm554, %v664, 0
        %668 = vmatprep.subr.mxu0 0.0
        %669 = vmatpush1.msra.mxu0 %v499
        %670 = vmatprep.subr.mxu0 0.0
        %671 = vmatpush1.msra.mxu0 %v500
        %672 = vmatprep.subr.mxu0 0.0
        %673 = vmatpush1.msra.mxu0 %v501
        %674 = vmatprep.subr.mxu0 0.0
        %675 = vmatpush1.msra.mxu0 %v502
        %676 = vmatprep.subr.mxu0 0.0
        %677 = vmatpush1.msra.mxu0 0.0
        %678 = vmatprep.subr.mxu0 0.0
        %679 = vmatpush1.msra.mxu0 0.0
        %680 = vmatprep.subr.mxu0 0.0
        %681 = vmatpush1.msra.mxu0 0.0
        %682 = vmatprep.subr.mxu0 0.0
        %683 = vmatpush1.msra.mxu0 0.0
        %684 = vmatprep.subr.mxu0 0.0
        %685 = vmatpush1.msra.mxu0 0.0
        %686 = vmatprep.subr.mxu0 0.0
        %687 = vmatpush1.msra.mxu0 0.0
        %688 = vmatprep.subr.mxu0 0.0
        %689 = vmatpush1.msra.mxu0 0.0
        %690 = vmatprep.subr.mxu0 0.0
        %691 = vmatpush1.msra.mxu0 0.0
        %692 = vmatprep.subr.mxu0 0.0
        %693 = vmatpush1.msra.mxu0 0.0
        %694 = vmatprep.subr.mxu0 0.0
        %695 = vmatpush1.msra.mxu0 0.0
        %696 = vmatprep.subr.mxu0 0.0
        %697 = vmatpush1.msra.mxu0 0.0
        %698 = vmatprep.subr.mxu0 0.0
        %699 = vmatpush1.msra.mxu0 0.0
        %700 = vmatprep.subr.mxu0 0.0
        %701 = vmatpush1.msra.mxu0 0.0
        %702 = vmatprep.subr.mxu0 0.0
        %703 = vmatpush1.msra.mxu0 0.0
        %704 = vmatprep.subr.mxu0 0.0
        %705 = vmatpush1.msra.mxu0 0.0
        %706 = vmatprep.subr.mxu0 0.0
        %707 = vmatpush1.msra.mxu0 0.0
        %708 = vmatprep.subr.mxu0 0.0
        %709 = vmatpush1.msra.mxu0 0.0
        %710 = vmatprep.subr.mxu0 0.0
        %711 = vmatpush1.msra.mxu0 0.0
        %712 = vmatprep.subr.mxu0 0.0
        %713 = vmatpush1.msra.mxu0 0.0
        %714 = vmatprep.subr.mxu0 0.0
        %715 = vmatpush1.msra.mxu0 0.0
        %716 = vmatprep.subr.mxu0 0.0
        %717 = vmatpush1.msra.mxu0 0.0
        %718 = vmatprep.subr.mxu0 0.0
        %719 = vmatpush1.msra.mxu0 0.0
        %720 = vmatprep.subr.mxu0 0.0
        %721 = vmatpush1.msra.mxu0 0.0
        %722 = vmatprep.subr.mxu0 0.0
        %723 = vmatpush1.msra.mxu0 0.0
        %724 = vmatprep.subr.mxu0 0.0
        %725 = vmatpush1.msra.mxu0 0.0
        %726 = vmatprep.subr.mxu0 0.0
        %727 = vmatpush1.msra.mxu0 0.0
        %728 = vmatprep.subr.mxu0 0.0
        %729 = vmatpush1.msra.mxu0 0.0
        %730 = vmatprep.subr.mxu0 0.0
        %731 = vmatpush1.msra.mxu0 0.0
        %732 = vmatprep.mubr.f32.mxu0 0.0
        %733 = vmatmul.mubr.f32.gmra.mrb[0].mxu0 %v666
        %v734 = vpop.f32.mrb[0].mxu0
        %v735 = vadd.f32 0.0, %v734
        %v736 = vpop.f32.mrb[0].mxu0
        %737 = vdwg.mxu0
        %v738 = vmul.f32 %v735, 0.35355338
        %739 = vmatprep.subr.mxu0 0.0
        %740 = vmatpush1.msra.mxu0 %v503
        %741 = vmatprep.subr.mxu0 0.0
        %742 = vmatpush1.msra.mxu0 %v504
        %743 = vmatprep.subr.mxu0 0.0
        %744 = vmatpush1.msra.mxu0 %v505
        %745 = vmatprep.subr.mxu0 0.0
        %746 = vmatpush1.msra.mxu0 %v506
        %747 = vmatprep.subr.mxu0 0.0
        %748 = vmatpush1.msra.mxu0 0.0
        %749 = vmatprep.subr.mxu0 0.0
        %750 = vmatpush1.msra.mxu0 0.0
        %751 = vmatprep.subr.mxu0 0.0
        %752 = vmatpush1.msra.mxu0 0.0
        %753 = vmatprep.subr.mxu0 0.0
        %754 = vmatpush1.msra.mxu0 0.0
        %755 = vmatprep.subr.mxu0 0.0
        %756 = vmatpush1.msra.mxu0 0.0
        %757 = vmatprep.subr.mxu0 0.0
        %758 = vmatpush1.msra.mxu0 0.0
        %759 = vmatprep.subr.mxu0 0.0
        %760 = vmatpush1.msra.mxu0 0.0
        %761 = vmatprep.subr.mxu0 0.0
        %762 = vmatpush1.msra.mxu0 0.0
        %763 = vmatprep.subr.mxu0 0.0
        %764 = vmatpush1.msra.mxu0 0.0
        %765 = vmatprep.subr.mxu0 0.0
        %766 = vmatpush1.msra.mxu0 0.0
        %767 = vmatprep.subr.mxu0 0.0
        %768 = vmatpush1.msra.mxu0 0.0
        %769 = vmatprep.subr.mxu0 0.0
        %770 = vmatpush1.msra.mxu0 0.0
        %771 = vmatprep.subr.mxu0 0.0
        %772 = vmatpush1.msra.mxu0 0.0
        %773 = vmatprep.subr.mxu0 0.0
        %774 = vmatpush1.msra.mxu0 0.0
        %775 = vmatprep.subr.mxu0 0.0
        %776 = vmatpush1.msra.mxu0 0.0
        %777 = vmatprep.subr.mxu0 0.0
        %778 = vmatpush1.msra.mxu0 0.0
        %779 = vmatprep.subr.mxu0 0.0
        %780 = vmatpush1.msra.mxu0 0.0
        %781 = vmatprep.subr.mxu0 0.0
        %782 = vmatpush1.msra.mxu0 0.0
        %783 = vmatprep.subr.mxu0 0.0
        %784 = vmatpush1.msra.mxu0 0.0
        %785 = vmatprep.subr.mxu0 0.0
        %786 = vmatpush1.msra.mxu0 0.0
        %787 = vmatprep.subr.mxu0 0.0
        %788 = vmatpush1.msra.mxu0 0.0
        %789 = vmatprep.subr.mxu0 0.0
        %790 = vmatpush1.msra.mxu0 0.0
        %791 = vmatprep.subr.mxu0 0.0
        %792 = vmatpush1.msra.mxu0 0.0
        %793 = vmatprep.subr.mxu0 0.0
        %794 = vmatpush1.msra.mxu0 0.0
        %795 = vmatprep.subr.mxu0 0.0
        %796 = vmatpush1.msra.mxu0 0.0
        %797 = vmatprep.subr.mxu0 0.0
        %798 = vmatpush1.msra.mxu0 0.0
        %799 = vmatprep.subr.mxu0 0.0
        %800 = vmatpush1.msra.mxu0 0.0
        %801 = vmatprep.subr.mxu0 0.0
        %802 = vmatpush1.msra.mxu0 0.0
        %803 = vmatprep.mubr.f32.mxu0 0.0
        %804 = vmatmul.mubr.f32.gmra.mrb[0].mxu0 %v666
        %v805 = vpop.f32.mrb[0].mxu0
        %v806 = vadd.f32 0.0, %v805
        %v807 = vpop.f32.mrb[0].mxu0
        %808 = vdwg.mxu0
        %809 = vmatprep.subr.mxu0 0.0
        %810 = vmatpush1.msra.mxu0 %v507
        %811 = vmatprep.subr.mxu0 0.0
        %812 = vmatpush1.msra.mxu0 %v508
        %813 = vmatprep.subr.mxu0 0.0
        %814 = vmatpush1.msra.mxu0 %v509
        %815 = vmatprep.subr.mxu0 0.0
        %816 = vmatpush1.msra.mxu0 %v510
        %817 = vmatprep.subr.mxu0 0.0
        %818 = vmatpush1.msra.mxu0 0.0
        %819 = vmatprep.subr.mxu0 0.0
        %820 = vmatpush1.msra.mxu0 0.0
        %821 = vmatprep.subr.mxu0 0.0
        %822 = vmatpush1.msra.mxu0 0.0
        %823 = vmatprep.subr.mxu0 0.0
        %824 = vmatpush1.msra.mxu0 0.0
        %825 = vmatprep.subr.mxu0 0.0
        %826 = vmatpush1.msra.mxu0 0.0
        %827 = vmatprep.subr.mxu0 0.0
        %828 = vmatpush1.msra.mxu0 0.0
        %829 = vmatprep.subr.mxu0 0.0
        %830 = vmatpush1.msra.mxu0 0.0
        %831 = vmatprep.subr.mxu0 0.0
        %832 = vmatpush1.msra.mxu0 0.0
        %833 = vmatprep.subr.mxu0 0.0
        %834 = vmatpush1.msra.mxu0 0.0
        %835 = vmatprep.subr.mxu0 0.0
        %836 = vmatpush1.msra.mxu0 0.0
        %837 = vmatprep.subr.mxu0 0.0
        %838 = vmatpush1.msra.mxu0 0.0
        %839 = vmatprep.subr.mxu0 0.0
        %840 = vmatpush1.msra.mxu0 0.0
        %841 = vmatprep.subr.mxu0 0.0
        %842 = vmatpush1.msra.mxu0 0.0
        %843 = vmatprep.subr.mxu0 0.0
        %844 = vmatpush1.msra.mxu0 0.0
        %845 = vmatprep.subr.mxu0 0.0
        %846 = vmatpush1.msra.mxu0 0.0
        %847 = vmatprep.subr.mxu0 0.0
        %848 = vmatpush1.msra.mxu0 0.0
        %849 = vmatprep.subr.mxu0 0.0
        %850 = vmatpush1.msra.mxu0 0.0
        %851 = vmatprep.subr.mxu0 0.0
        %852 = vmatpush1.msra.mxu0 0.0
        %853 = vmatprep.subr.mxu0 0.0
        %854 = vmatpush1.msra.mxu0 0.0
        %855 = vmatprep.subr.mxu0 0.0
        %856 = vmatpush1.msra.mxu0 0.0
        %857 = vmatprep.subr.mxu0 0.0
        %858 = vmatpush1.msra.mxu0 0.0
        %859 = vmatprep.subr.mxu0 0.0
        %860 = vmatpush1.msra.mxu0 0.0
        %861 = vmatprep.subr.mxu0 0.0
        %862 = vmatpush1.msra.mxu0 0.0
        %863 = vmatprep.subr.mxu0 0.0
        %864 = vmatpush1.msra.mxu0 0.0
        %865 = vmatprep.subr.mxu0 0.0
        %866 = vmatpush1.msra.mxu0 0.0
        %867 = vmatprep.subr.mxu0 0.0
        %868 = vmatpush1.msra.mxu0 0.0
        %869 = vmatprep.subr.mxu0 0.0
        %870 = vmatpush1.msra.mxu0 0.0
        %871 = vmatprep.subr.mxu0 0.0
        %872 = vmatpush1.msra.mxu0 0.0
        %873 = vmatprep.mubr.f32.mxu0 0.0
        %874 = vmatmul.mubr.f32.gmra.mrb[0].mxu0 %v666
        %v875 = vpop.f32.mrb[0].mxu0
        %v876 = vadd.f32 0.0, %v875
        %v877 = vpop.f32.mrb[0].mxu0
        %878 = vdwg.mxu0
        %880 = vrot.lane.b32.xlu0 %v738, 120
        %v881 = vpop.permute.xlu0 %880
        %882 = vrot.lane.b32.xlu0 %v738, 112
        %v883 = vpop.permute.xlu0 %882
        %884 = vrot.lane.b32.xlu0 %v738, 104
        %v885 = vpop.permute.xlu0 %884
        %887 = vrot.lane.b32.xlu0 %v806, 120
        %v888 = vpop.permute.xlu0 %887
        %889 = vrot.lane.b32.xlu0 %v806, 112
        %v890 = vpop.permute.xlu0 %889
        %891 = vrot.lane.b32.xlu0 %v806, 104
        %v892 = vpop.permute.xlu0 %891
        %894 = vrot.lane.b32.xlu0 %v876, 120
        %v895 = vpop.permute.xlu0 %894
        %897 = vrot.lane.b32.xlu0 %v876, 112
        %v898 = vpop.permute.xlu0 %897
        %900 = vrot.lane.b32.xlu0 %v876, 104
        %v901 = vpop.permute.xlu0 %900
        %vm903 = vcmask 64512
        %v904 = vsel %vm903, %v738, 0
        %v906 = vsel %vm903, %v806, 0
        %908 = vmatprep.subr.mxu0 0.0
        %909 = vmatpush1.xpose.msra.mxu0 %v906
        %910 = vmatprep.subr.mxu0 0.0
        %911 = vmatpush1.xpose.msra.mxu0 0.0
        %912 = vmatprep.subr.mxu0 0.0
        %913 = vmatpush1.xpose.msra.mxu0 0.0
        %914 = vmatprep.subr.mxu0 0.0
        %915 = vmatpush1.xpose.msra.mxu0 0.0
        %916 = vmatprep.subr.mxu0 0.0
        %917 = vmatpush1.xpose.msra.mxu0 0.0
        %918 = vmatprep.subr.mxu0 0.0
        %919 = vmatpush1.xpose.msra.mxu0 0.0
        %920 = vmatprep.subr.mxu0 0.0
        %921 = vmatpush1.xpose.msra.mxu0 0.0
        %922 = vmatprep.subr.mxu0 0.0
        %923 = vmatpush1.xpose.msra.mxu0 0.0
        %924 = vmatprep.subr.mxu0 0.0
        %925 = vmatpush1.xpose.msra.mxu0 0.0
        %926 = vmatprep.subr.mxu0 0.0
        %927 = vmatpush1.xpose.msra.mxu0 0.0
        %928 = vmatprep.subr.mxu0 0.0
        %929 = vmatpush1.xpose.msra.mxu0 0.0
        %930 = vmatprep.subr.mxu0 0.0
        %931 = vmatpush1.xpose.msra.mxu0 0.0
        %932 = vmatprep.subr.mxu0 0.0
        %933 = vmatpush1.xpose.msra.mxu0 0.0
        %934 = vmatprep.subr.mxu0 0.0
        %935 = vmatpush1.xpose.msra.mxu0 0.0
        %936 = vmatprep.subr.mxu0 0.0
        %937 = vmatpush1.xpose.msra.mxu0 0.0
        %938 = vmatprep.subr.mxu0 0.0
        %939 = vmatpush1.xpose.msra.mxu0 0.0
        %940 = vmatprep.subr.mxu0 0.0
        %941 = vmatpush1.xpose.msra.mxu0 0.0
        %942 = vmatprep.subr.mxu0 0.0
        %943 = vmatpush1.xpose.msra.mxu0 0.0
        %944 = vmatprep.subr.mxu0 0.0
        %945 = vmatpush1.xpose.msra.mxu0 0.0
        %946 = vmatprep.subr.mxu0 0.0
        %947 = vmatpush1.xpose.msra.mxu0 0.0
        %948 = vmatprep.subr.mxu0 0.0
        %949 = vmatpush1.xpose.msra.mxu0 0.0
        %950 = vmatprep.subr.mxu0 0.0
        %951 = vmatpush1.xpose.msra.mxu0 0.0
        %952 = vmatprep.subr.mxu0 0.0
        %953 = vmatpush1.xpose.msra.mxu0 0.0
        %954 = vmatprep.subr.mxu0 0.0
        %955 = vmatpush1.xpose.msra.mxu0 0.0
        %956 = vmatprep.subr.mxu0 0.0
        %957 = vmatpush1.xpose.msra.mxu0 0.0
        %958 = vmatprep.subr.mxu0 0.0
        %959 = vmatpush1.xpose.msra.mxu0 0.0
        %960 = vmatprep.subr.mxu0 0.0
        %961 = vmatpush1.xpose.msra.mxu0 0.0
        %962 = vmatprep.subr.mxu0 0.0
        %963 = vmatpush1.xpose.msra.mxu0 0.0
        %964 = vmatprep.subr.mxu0 0.0
        %965 = vmatpush1.xpose.msra.mxu0 0.0
        %966 = vmatprep.subr.mxu0 0.0
        %967 = vmatpush1.xpose.msra.mxu0 0.0
        %968 = vmatprep.subr.mxu0 0.0
        %969 = vmatpush1.xpose.msra.mxu0 0.0
        %970 = vmatprep.subr.mxu0 0.0
        %971 = vmatpush1.xpose.msra.mxu0 0.0
        %972 = vmatprep.mubr.f32.mxu0 0.0
        %973 = vmatmul.mubr.f32.gmra.mrb[0].mxu0 %v904
        %v974 = vpop.f32.mrb[0].mxu0
        %v975 = vadd.f32 0.0, %v974
        %v976 = vpop.f32.mrb[0].mxu0
        %977 = vdwg.mxu0
        %v978 = vsel %vm903, %v881, 0
        %v980 = vsel %vm903, %v888, 0
        %982 = vmatprep.subr.mxu0 0.0
        %983 = vmatpush1.xpose.msra.mxu0 %v980
        %984 = vmatprep.subr.mxu0 0.0
        %985 = vmatpush1.xpose.msra.mxu0 0.0
        %986 = vmatprep.subr.mxu0 0.0
        %987 = vmatpush1.xpose.msra.mxu0 0.0
        %988 = vmatprep.subr.mxu0 0.0
        %989 = vmatpush1.xpose.msra.mxu0 0.0
        %990 = vmatprep.subr.mxu0 0.0
        %991 = vmatpush1.xpose.msra.mxu0 0.0
        %992 = vmatprep.subr.mxu0 0.0
        %993 = vmatpush1.xpose.msra.mxu0 0.0
        %994 = vmatprep.subr.mxu0 0.0
        %995 = vmatpush1.xpose.msra.mxu0 0.0
        %996 = vmatprep.subr.mxu0 0.0
        %997 = vmatpush1.xpose.msra.mxu0 0.0
        %998 = vmatprep.subr.mxu0 0.0
        %999 = vmatpush1.xpose.msra.mxu0 0.0
        %1000 = vmatprep.subr.mxu0 0.0
        %1001 = vmatpush1.xpose.msra.mxu0 0.0
        %1002 = vmatprep.subr.mxu0 0.0
        %1003 = vmatpush1.xpose.msra.mxu0 0.0
        %1004 = vmatprep.subr.mxu0 0.0
        %1005 = vmatpush1.xpose.msra.mxu0 0.0
        %1006 = vmatprep.subr.mxu0 0.0
        %1007 = vmatpush1.xpose.msra.mxu0 0.0
        %1008 = vmatprep.subr.mxu0 0.0
        %1009 = vmatpush1.xpose.msra.mxu0 0.0
        %1010 = vmatprep.subr.mxu0 0.0
        %1011 = vmatpush1.xpose.msra.mxu0 0.0
        %1012 = vmatprep.subr.mxu0 0.0
        %1013 = vmatpush1.xpose.msra.mxu0 0.0
        %1014 = vmatprep.subr.mxu0 0.0
        %1015 = vmatpush1.xpose.msra.mxu0 0.0
        %1016 = vmatprep.subr.mxu0 0.0
        %1017 = vmatpush1.xpose.msra.mxu0 0.0
        %1018 = vmatprep.subr.mxu0 0.0
        %1019 = vmatpush1.xpose.msra.mxu0 0.0
        %1020 = vmatprep.subr.mxu0 0.0
        %1021 = vmatpush1.xpose.msra.mxu0 0.0
        %1022 = vmatprep.subr.mxu0 0.0
        %1023 = vmatpush1.xpose.msra.mxu0 0.0
        %1024 = vmatprep.subr.mxu0 0.0
        %1025 = vmatpush1.xpose.msra.mxu0 0.0
        %1026 = vmatprep.subr.mxu0 0.0
        %1027 = vmatpush1.xpose.msra.mxu0 0.0
        %1028 = vmatprep.subr.mxu0 0.0
        %1029 = vmatpush1.xpose.msra.mxu0 0.0
        %1030 = vmatprep.subr.mxu0 0.0
        %1031 = vmatpush1.xpose.msra.mxu0 0.0
        %1032 = vmatprep.subr.mxu0 0.0
        %1033 = vmatpush1.xpose.msra.mxu0 0.0
        %1034 = vmatprep.subr.mxu0 0.0
        %1035 = vmatpush1.xpose.msra.mxu0 0.0
        %1036 = vmatprep.subr.mxu0 0.0
        %1037 = vmatpush1.xpose.msra.mxu0 0.0
        %1038 = vmatprep.subr.mxu0 0.0
        %1039 = vmatpush1.xpose.msra.mxu0 0.0
        %1040 = vmatprep.subr.mxu0 0.0
        %1041 = vmatpush1.xpose.msra.mxu0 0.0
        %1042 = vmatprep.subr.mxu0 0.0
        %1043 = vmatpush1.xpose.msra.mxu0 0.0
        %1044 = vmatprep.subr.mxu0 0.0
        %1045 = vmatpush1.xpose.msra.mxu0 0.0
        %1046 = vmatprep.mubr.f32.mxu0 0.0
        %1047 = vmatmul.mubr.f32.gmra.mrb[0].mxu0 %v978
        %v1048 = vpop.f32.mrb[0].mxu0
        %v1049 = vadd.f32 0.0, %v1048
        %v1050 = vpop.f32.mrb[0].mxu0
        %1051 = vdwg.mxu0
        %v1052 = vsel %vm903, %v883, 0
        %v1054 = vsel %vm903, %v890, 0
        %1056 = vmatprep.subr.mxu0 0.0
        %1057 = vmatpush1.xpose.msra.mxu0 %v1054
        %1058 = vmatprep.subr.mxu0 0.0
        %1059 = vmatpush1.xpose.msra.mxu0 0.0
        %1060 = vmatprep.subr.mxu0 0.0
        %1061 = vmatpush1.xpose.msra.mxu0 0.0
        %1062 = vmatprep.subr.mxu0 0.0
        %1063 = vmatpush1.xpose.msra.mxu0 0.0
        %1064 = vmatprep.subr.mxu0 0.0
        %1065 = vmatpush1.xpose.msra.mxu0 0.0
        %1066 = vmatprep.subr.mxu0 0.0
        %1067 = vmatpush1.xpose.msra.mxu0 0.0
        %1068 = vmatprep.subr.mxu0 0.0
        %1069 = vmatpush1.xpose.msra.mxu0 0.0
        %1070 = vmatprep.subr.mxu0 0.0
        %1071 = vmatpush1.xpose.msra.mxu0 0.0
        %1072 = vmatprep.subr.mxu0 0.0
        %1073 = vmatpush1.xpose.msra.mxu0 0.0
        %1074 = vmatprep.subr.mxu0 0.0
        %1075 = vmatpush1.xpose.msra.mxu0 0.0
        %1076 = vmatprep.subr.mxu0 0.0
        %1077 = vmatpush1.xpose.msra.mxu0 0.0
        %1078 = vmatprep.subr.mxu0 0.0
        %1079 = vmatpush1.xpose.msra.mxu0 0.0
        %1080 = vmatprep.subr.mxu0 0.0
        %1081 = vmatpush1.xpose.msra.mxu0 0.0
        %1082 = vmatprep.subr.mxu0 0.0
        %1083 = vmatpush1.xpose.msra.mxu0 0.0
        %1084 = vmatprep.subr.mxu0 0.0
        %1085 = vmatpush1.xpose.msra.mxu0 0.0
        %1086 = vmatprep.subr.mxu0 0.0
        %1087 = vmatpush1.xpose.msra.mxu0 0.0
        %1088 = vmatprep.subr.mxu0 0.0
        %1089 = vmatpush1.xpose.msra.mxu0 0.0
        %1090 = vmatprep.subr.mxu0 0.0
        %1091 = vmatpush1.xpose.msra.mxu0 0.0
        %1092 = vmatprep.subr.mxu0 0.0
        %1093 = vmatpush1.xpose.msra.mxu0 0.0
        %1094 = vmatprep.subr.mxu0 0.0
        %1095 = vmatpush1.xpose.msra.mxu0 0.0
        %1096 = vmatprep.subr.mxu0 0.0
        %1097 = vmatpush1.xpose.msra.mxu0 0.0
        %1098 = vmatprep.subr.mxu0 0.0
        %1099 = vmatpush1.xpose.msra.mxu0 0.0
        %1100 = vmatprep.subr.mxu0 0.0
        %1101 = vmatpush1.xpose.msra.mxu0 0.0
        %1102 = vmatprep.subr.mxu0 0.0
        %1103 = vmatpush1.xpose.msra.mxu0 0.0
        %1104 = vmatprep.subr.mxu0 0.0
        %1105 = vmatpush1.xpose.msra.mxu0 0.0
        %1106 = vmatprep.subr.mxu0 0.0
        %1107 = vmatpush1.xpose.msra.mxu0 0.0
        %1108 = vmatprep.subr.mxu0 0.0
        %1109 = vmatpush1.xpose.msra.mxu0 0.0
        %1110 = vmatprep.subr.mxu0 0.0
        %1111 = vmatpush1.xpose.msra.mxu0 0.0
        %1112 = vmatprep.subr.mxu0 0.0
        %1113 = vmatpush1.xpose.msra.mxu0 0.0
        %1114 = vmatprep.subr.mxu0 0.0
        %1115 = vmatpush1.xpose.msra.mxu0 0.0
        %1116 = vmatprep.subr.mxu0 0.0
        %1117 = vmatpush1.xpose.msra.mxu0 0.0
        %1118 = vmatprep.subr.mxu0 0.0
        %1119 = vmatpush1.xpose.msra.mxu0 0.0
        %1120 = vmatprep.mubr.f32.mxu0 0.0
        %1121 = vmatmul.mubr.f32.gmra.mrb[0].mxu0 %v1052
        %v1122 = vpop.f32.mrb[0].mxu0
        %v1123 = vadd.f32 0.0, %v1122
        %v1124 = vpop.f32.mrb[0].mxu0
        %1125 = vdwg.mxu0
        %v1126 = vsel %vm903, %v885, 0
        %v1128 = vsel %vm903, %v892, 0
        %1130 = vmatprep.subr.mxu0 0.0
        %1131 = vmatpush1.xpose.msra.mxu0 %v1128
        %1132 = vmatprep.subr.mxu0 0.0
        %1133 = vmatpush1.xpose.msra.mxu0 0.0
        %1134 = vmatprep.subr.mxu0 0.0
        %1135 = vmatpush1.xpose.msra.mxu0 0.0
        %1136 = vmatprep.subr.mxu0 0.0
        %1137 = vmatpush1.xpose.msra.mxu0 0.0
        %1138 = vmatprep.subr.mxu0 0.0
        %1139 = vmatpush1.xpose.msra.mxu0 0.0
        %1140 = vmatprep.subr.mxu0 0.0
        %1141 = vmatpush1.xpose.msra.mxu0 0.0
        %1142 = vmatprep.subr.mxu0 0.0
        %1143 = vmatpush1.xpose.msra.mxu0 0.0
        %1144 = vmatprep.subr.mxu0 0.0
        %1145 = vmatpush1.xpose.msra.mxu0 0.0
        %1146 = vmatprep.subr.mxu0 0.0
        %1147 = vmatpush1.xpose.msra.mxu0 0.0
        %1148 = vmatprep.subr.mxu0 0.0
        %1149 = vmatpush1.xpose.msra.mxu0 0.0
        %1150 = vmatprep.subr.mxu0 0.0
        %1151 = vmatpush1.xpose.msra.mxu0 0.0
        %1152 = vmatprep.subr.mxu0 0.0
        %1153 = vmatpush1.xpose.msra.mxu0 0.0
        %1154 = vmatprep.subr.mxu0 0.0
        %1155 = vmatpush1.xpose.msra.mxu0 0.0
        %1156 = vmatprep.subr.mxu0 0.0
        %1157 = vmatpush1.xpose.msra.mxu0 0.0
        %1158 = vmatprep.subr.mxu0 0.0
        %1159 = vmatpush1.xpose.msra.mxu0 0.0
        %1160 = vmatprep.subr.mxu0 0.0
        %1161 = vmatpush1.xpose.msra.mxu0 0.0
        %1162 = vmatprep.subr.mxu0 0.0
        %1163 = vmatpush1.xpose.msra.mxu0 0.0
        %1164 = vmatprep.subr.mxu0 0.0
        %1165 = vmatpush1.xpose.msra.mxu0 0.0
        %1166 = vmatprep.subr.mxu0 0.0
        %1167 = vmatpush1.xpose.msra.mxu0 0.0
        %1168 = vmatprep.subr.mxu0 0.0
        %1169 = vmatpush1.xpose.msra.mxu0 0.0
        %1170 = vmatprep.subr.mxu0 0.0
        %1171 = vmatpush1.xpose.msra.mxu0 0.0
        %1172 = vmatprep.subr.mxu0 0.0
        %1173 = vmatpush1.xpose.msra.mxu0 0.0
        %1174 = vmatprep.subr.mxu0 0.0
        %1175 = vmatpush1.xpose.msra.mxu0 0.0
        %1176 = vmatprep.subr.mxu0 0.0
        %1177 = vmatpush1.xpose.msra.mxu0 0.0
        %1178 = vmatprep.subr.mxu0 0.0
        %1179 = vmatpush1.xpose.msra.mxu0 0.0
        %1180 = vmatprep.subr.mxu0 0.0
        %1181 = vmatpush1.xpose.msra.mxu0 0.0
        %1182 = vmatprep.subr.mxu0 0.0
        %1183 = vmatpush1.xpose.msra.mxu0 0.0
        %1184 = vmatprep.subr.mxu0 0.0
        %1185 = vmatpush1.xpose.msra.mxu0 0.0
        %1186 = vmatprep.subr.mxu0 0.0
        %1187 = vmatpush1.xpose.msra.mxu0 0.0
        %1188 = vmatprep.subr.mxu0 0.0
        %1189 = vmatpush1.xpose.msra.mxu0 0.0
        %1190 = vmatprep.subr.mxu0 0.0
        %1191 = vmatpush1.xpose.msra.mxu0 0.0
        %1192 = vmatprep.subr.mxu0 0.0
        %1193 = vmatpush1.xpose.msra.mxu0 0.0
        %1194 = vmatprep.mubr.f32.mxu0 0.0
        %1195 = vmatmul.mubr.f32.gmra.mrb[0].mxu0 %v1126
        %v1196 = vpop.f32.mrb[0].mxu0
        %v1197 = vadd.f32 0.0, %v1196
        %v1198 = vpop.f32.mrb[0].mxu0
        %1199 = vdwg.mxu0
        %v1200 = vsel %vm903, %v975, -inf
        %1201 = vmax.xlane.f32.xlu0 %v1200
        %v1202 = vpop.xlane.xlu0 %1201
        %v1203 = vsel %vm903, %v1049, -inf
        %1204 = vmax.xlane.f32.xlu0 %v1203
        %v1205 = vpop.xlane.xlu0 %1204
        %v1206 = vsel %vm903, %v1123, -inf
        %1207 = vmax.xlane.f32.xlu0 %v1206
        %v1208 = vpop.xlane.xlu0 %1207
        %v1209 = vsel %vm903, %v1197, -inf
        %1210 = vmax.xlane.f32.xlu0 %v1209
        %v1211 = vpop.xlane.xlu0 %1210
        %v1212 = vsub.f32 %v975, %v1202
        %v1213 = vsub.f32 %v1049, %v1205
        %v1214 = vsub.f32 %v1123, %v1208
        %v1215 = vsub.f32 %v1197, %v1211
        %v1216 = vmul.f32 %v1212, 1.442695
        %v1217 = vpow.pop %v1216
        %v1218 = vmul.f32 %v1213, 1.442695
        %v1219 = vpow.pop %v1218
        %v1220 = vmul.f32 %v1214, 1.442695
        %v1221 = vpow.pop %v1220
        %v1222 = vmul.f32 %v1215, 1.442695
        %v1223 = vpow.pop %v1222
        %v1224 = vsel %vm903, %v1217, 0.0
        %1225 = vadd.xlane.f32.xlu0 %v1224
        %v1226 = vpop.xlane.xlu0 %1225
        %v1227 = vsel %vm903, %v1219, 0.0
        %1228 = vadd.xlane.f32.xlu0 %v1227
        %v1229 = vpop.xlane.xlu0 %1228
        %v1230 = vsel %vm903, %v1221, 0.0
        %1231 = vadd.xlane.f32.xlu0 %v1230
        %v1232 = vpop.xlane.xlu0 %1231
        %v1233 = vsel %vm903, %v1223, 0.0
        %1234 = vadd.xlane.f32.xlu0 %v1233
        %v1235 = vpop.xlane.xlu0 %1234
        %v1236 = vrcp.pop %v1226
        %v1237 = vmul.f32 %v1217, %v1236
        %v1238 = vrcp.pop %v1229
        %v1239 = vmul.f32 %v1219, %v1238
        %v1240 = vrcp.pop %v1232
        %v1241 = vmul.f32 %v1221, %v1240
        %v1242 = vrcp.pop %v1235
        %v1243 = vmul.f32 %v1223, %v1242
        %v1245 = vsel %vm903, %v1237, 0
        %1247 = vmatprep.subr.mxu0 0.0
        %1248 = vmatpush1.msra.mxu0 %v876
        %1249 = vmatprep.subr.mxu0 0.0
        %1250 = vmatpush1.msra.mxu0 0.0
        %1251 = vmatprep.subr.mxu0 0.0
        %1252 = vmatpush1.msra.mxu0 0.0
        %1253 = vmatprep.subr.mxu0 0.0
        %1254 = vmatpush1.msra.mxu0 0.0
        %1255 = vmatprep.subr.mxu0 0.0
        %1256 = vmatpush1.msra.mxu0 0.0
        %1257 = vmatprep.subr.mxu0 0.0
        %1258 = vmatpush1.msra.mxu0 0.0
        %1259 = vmatprep.subr.mxu0 0.0
        %1260 = vmatpush1.msra.mxu0 0.0
        %1261 = vmatprep.subr.mxu0 0.0
        %1262 = vmatpush1.msra.mxu0 0.0
        %1263 = vmatprep.subr.mxu0 0.0
        %1264 = vmatpush1.msra.mxu0 0.0
        %1265 = vmatprep.subr.mxu0 0.0
        %1266 = vmatpush1.msra.mxu0 0.0
        %1267 = vmatprep.subr.mxu0 0.0
        %1268 = vmatpush1.msra.mxu0 0.0
        %1269 = vmatprep.subr.mxu0 0.0
        %1270 = vmatpush1.msra.mxu0 0.0
        %1271 = vmatprep.subr.mxu0 0.0
        %1272 = vmatpush1.msra.mxu0 0.0
        %1273 = vmatprep.subr.mxu0 0.0
        %1274 = vmatpush1.msra.mxu0 0.0
        %1275 = vmatprep.subr.mxu0 0.0
        %1276 = vmatpush1.msra.mxu0 0.0
        %1277 = vmatprep.subr.mxu0 0.0
        %1278 = vmatpush1.msra.mxu0 0.0
        %1279 = vmatprep.subr.mxu0 0.0
        %1280 = vmatpush1.msra.mxu0 0.0
        %1281 = vmatprep.subr.mxu0 0.0
        %1282 = vmatpush1.msra.mxu0 0.0
        %1283 = vmatprep.subr.mxu0 0.0
        %1284 = vmatpush1.msra.mxu0 0.0
        %1285 = vmatprep.subr.mxu0 0.0
        %1286 = vmatpush1.msra.mxu0 0.0
        %1287 = vmatprep.subr.mxu0 0.0
        %1288 = vmatpush1.msra.mxu0 0.0
        %1289 = vmatprep.subr.mxu0 0.0
        %1290 = vmatpush1.msra.mxu0 0.0
        %1291 = vmatprep.subr.mxu0 0.0
        %1292 = vmatpush1.msra.mxu0 0.0
        %1293 = vmatprep.subr.mxu0 0.0
        %1294 = vmatpush1.msra.mxu0 0.0
        %1295 = vmatprep.subr.mxu0 0.0
        %1296 = vmatpush1.msra.mxu0 0.0
        %1297 = vmatprep.subr.mxu0 0.0
        %1298 = vmatpush1.msra.mxu0 0.0
        %1299 = vmatprep.subr.mxu0 0.0
        %1300 = vmatpush1.msra.mxu0 0.0
        %1301 = vmatprep.subr.mxu0 0.0
        %1302 = vmatpush1.msra.mxu0 0.0
        %1303 = vmatprep.subr.mxu0 0.0
        %1304 = vmatpush1.msra.mxu0 0.0
        %1305 = vmatprep.subr.mxu0 0.0
        %1306 = vmatpush1.msra.mxu0 0.0
        %1307 = vmatprep.subr.mxu0 0.0
        %1308 = vmatpush1.msra.mxu0 0.0
        %1309 = vmatprep.subr.mxu0 0.0
        %1310 = vmatpush1.msra.mxu0 0.0
        %1311 = vmatprep.mubr.f32.mxu0 0.0
        %1312 = vmatmul.mubr.f32.gmra.mrb[0].mxu0 %v1245
        %v1313 = vpop.f32.mrb[0].mxu0
        %v1314 = vadd.f32 0.0, %v1313
        %v1315 = vpop.f32.mrb[0].mxu0
        %1316 = vdwg.mxu0
        %v1318 = vsel %vm903, %v1239, 0
        %1320 = vmatprep.subr.mxu0 0.0
        %1321 = vmatpush1.msra.mxu0 %v895
        %1322 = vmatprep.subr.mxu0 0.0
        %1323 = vmatpush1.msra.mxu0 0.0
        %1324 = vmatprep.subr.mxu0 0.0
        %1325 = vmatpush1.msra.mxu0 0.0
        %1326 = vmatprep.subr.mxu0 0.0
        %1327 = vmatpush1.msra.mxu0 0.0
        %1328 = vmatprep.subr.mxu0 0.0
        %1329 = vmatpush1.msra.mxu0 0.0
        %1330 = vmatprep.subr.mxu0 0.0
        %1331 = vmatpush1.msra.mxu0 0.0
        %1332 = vmatprep.subr.mxu0 0.0
        %1333 = vmatpush1.msra.mxu0 0.0
        %1334 = vmatprep.subr.mxu0 0.0
        %1335 = vmatpush1.msra.mxu0 0.0
        %1336 = vmatprep.subr.mxu0 0.0
        %1337 = vmatpush1.msra.mxu0 0.0
        %1338 = vmatprep.subr.mxu0 0.0
        %1339 = vmatpush1.msra.mxu0 0.0
        %1340 = vmatprep.subr.mxu0 0.0
        %1341 = vmatpush1.msra.mxu0 0.0
        %1342 = vmatprep.subr.mxu0 0.0
        %1343 = vmatpush1.msra.mxu0 0.0
        %1344 = vmatprep.subr.mxu0 0.0
        %1345 = vmatpush1.msra.mxu0 0.0
        %1346 = vmatprep.subr.mxu0 0.0
        %1347 = vmatpush1.msra.mxu0 0.0
        %1348 = vmatprep.subr.mxu0 0.0
        %1349 = vmatpush1.msra.mxu0 0.0
        %1350 = vmatprep.subr.mxu0 0.0
        %1351 = vmatpush1.msra.mxu0 0.0
        %1352 = vmatprep.subr.mxu0 0.0
        %1353 = vmatpush1.msra.mxu0 0.0
        %1354 = vmatprep.subr.mxu0 0.0
        %1355 = vmatpush1.msra.mxu0 0.0
        %1356 = vmatprep.subr.mxu0 0.0
        %1357 = vmatpush1.msra.mxu0 0.0
        %1358 = vmatprep.subr.mxu0 0.0
        %1359 = vmatpush1.msra.mxu0 0.0
        %1360 = vmatprep.subr.mxu0 0.0
        %1361 = vmatpush1.msra.mxu0 0.0
        %1362 = vmatprep.subr.mxu0 0.0
        %1363 = vmatpush1.msra.mxu0 0.0
        %1364 = vmatprep.subr.mxu0 0.0
        %1365 = vmatpush1.msra.mxu0 0.0
        %1366 = vmatprep.subr.mxu0 0.0
        %1367 = vmatpush1.msra.mxu0 0.0
        %1368 = vmatprep.subr.mxu0 0.0
        %1369 = vmatpush1.msra.mxu0 0.0
        %1370 = vmatprep.subr.mxu0 0.0
        %1371 = vmatpush1.msra.mxu0 0.0
        %1372 = vmatprep.subr.mxu0 0.0
        %1373 = vmatpush1.msra.mxu0 0.0
        %1374 = vmatprep.subr.mxu0 0.0
        %1375 = vmatpush1.msra.mxu0 0.0
        %1376 = vmatprep.subr.mxu0 0.0
        %1377 = vmatpush1.msra.mxu0 0.0
        %1378 = vmatprep.subr.mxu0 0.0
        %1379 = vmatpush1.msra.mxu0 0.0
        %1380 = vmatprep.subr.mxu0 0.0
        %1381 = vmatpush1.msra.mxu0 0.0
        %1382 = vmatprep.subr.mxu0 0.0
        %1383 = vmatpush1.msra.mxu0 0.0
        %1384 = vmatprep.mubr.f32.mxu0 0.0
        %1385 = vmatmul.mubr.f32.gmra.mrb[0].mxu0 %v1318
        %v1386 = vpop.f32.mrb[0].mxu0
        %v1387 = vadd.f32 0.0, %v1386
        %v1388 = vpop.f32.mrb[0].mxu0
        %1389 = vdwg.mxu0
        %v1391 = vsel %vm903, %v1241, 0
        %1393 = vmatprep.subr.mxu0 0.0
        %1394 = vmatpush1.msra.mxu0 %v898
        %1395 = vmatprep.subr.mxu0 0.0
        %1396 = vmatpush1.msra.mxu0 0.0
        %1397 = vmatprep.subr.mxu0 0.0
        %1398 = vmatpush1.msra.mxu0 0.0
        %1399 = vmatprep.subr.mxu0 0.0
        %1400 = vmatpush1.msra.mxu0 0.0
        %1401 = vmatprep.subr.mxu0 0.0
        %1402 = vmatpush1.msra.mxu0 0.0
        %1403 = vmatprep.subr.mxu0 0.0
        %1404 = vmatpush1.msra.mxu0 0.0
        %1405 = vmatprep.subr.mxu0 0.0
        %1406 = vmatpush1.msra.mxu0 0.0
        %1407 = vmatprep.subr.mxu0 0.0
        %1408 = vmatpush1.msra.mxu0 0.0
        %1409 = vmatprep.subr.mxu0 0.0
        %1410 = vmatpush1.msra.mxu0 0.0
        %1411 = vmatprep.subr.mxu0 0.0
        %1412 = vmatpush1.msra.mxu0 0.0
        %1413 = vmatprep.subr.mxu0 0.0
        %1414 = vmatpush1.msra.mxu0 0.0
        %1415 = vmatprep.subr.mxu0 0.0
        %1416 = vmatpush1.msra.mxu0 0.0
        %1417 = vmatprep.subr.mxu0 0.0
        %1418 = vmatpush1.msra.mxu0 0.0
        %1419 = vmatprep.subr.mxu0 0.0
        %1420 = vmatpush1.msra.mxu0 0.0
        %1421 = vmatprep.subr.mxu0 0.0
        %1422 = vmatpush1.msra.mxu0 0.0
        %1423 = vmatprep.subr.mxu0 0.0
        %1424 = vmatpush1.msra.mxu0 0.0
        %1425 = vmatprep.subr.mxu0 0.0
        %1426 = vmatpush1.msra.mxu0 0.0
        %1427 = vmatprep.subr.mxu0 0.0
        %1428 = vmatpush1.msra.mxu0 0.0
        %1429 = vmatprep.subr.mxu0 0.0
        %1430 = vmatpush1.msra.mxu0 0.0
        %1431 = vmatprep.subr.mxu0 0.0
        %1432 = vmatpush1.msra.mxu0 0.0
        %1433 = vmatprep.subr.mxu0 0.0
        %1434 = vmatpush1.msra.mxu0 0.0
        %1435 = vmatprep.subr.mxu0 0.0
        %1436 = vmatpush1.msra.mxu0 0.0
        %1437 = vmatprep.subr.mxu0 0.0
        %1438 = vmatpush1.msra.mxu0 0.0
        %1439 = vmatprep.subr.mxu0 0.0
        %1440 = vmatpush1.msra.mxu0 0.0
        %1441 = vmatprep.subr.mxu0 0.0
        %1442 = vmatpush1.msra.mxu0 0.0
        %1443 = vmatprep.subr.mxu0 0.0
        %1444 = vmatpush1.msra.mxu0 0.0
        %1445 = vmatprep.subr.mxu0 0.0
        %1446 = vmatpush1.msra.mxu0 0.0
        %1447 = vmatprep.subr.mxu0 0.0
        %1448 = vmatpush1.msra.mxu0 0.0
        %1449 = vmatprep.subr.mxu0 0.0
        %1450 = vmatpush1.msra.mxu0 0.0
        %1451 = vmatprep.subr.mxu0 0.0
        %1452 = vmatpush1.msra.mxu0 0.0
        %1453 = vmatprep.subr.mxu0 0.0
        %1454 = vmatpush1.msra.mxu0 0.0
        %1455 = vmatprep.subr.mxu0 0.0
        %1456 = vmatpush1.msra.mxu0 0.0
        %1457 = vmatprep.mubr.f32.mxu0 0.0
        %1458 = vmatmul.mubr.f32.gmra.mrb[0].mxu0 %v1391
        %v1459 = vpop.f32.mrb[0].mxu0
        %v1460 = vadd.f32 0.0, %v1459
        %v1461 = vpop.f32.mrb[0].mxu0
        %1462 = vdwg.mxu0
        %v1464 = vsel %vm903, %v1243, 0
        %1466 = vmatprep.subr.mxu0 0.0
        %1467 = vmatpush1.msra.mxu0 %v901
        %1468 = vmatprep.subr.mxu0 0.0
        %1469 = vmatpush1.msra.mxu0 0.0
        %1470 = vmatprep.subr.mxu0 0.0
        %1471 = vmatpush1.msra.mxu0 0.0
        %1472 = vmatprep.subr.mxu0 0.0
        %1473 = vmatpush1.msra.mxu0 0.0
        %1474 = vmatprep.subr.mxu0 0.0
        %1475 = vmatpush1.msra.mxu0 0.0
        %1476 = vmatprep.subr.mxu0 0.0
        %1477 = vmatpush1.msra.mxu0 0.0
        %1478 = vmatprep.subr.mxu0 0.0
        %1479 = vmatpush1.msra.mxu0 0.0
        %1480 = vmatprep.subr.mxu0 0.0
        %1481 = vmatpush1.msra.mxu0 0.0
        %1482 = vmatprep.subr.mxu0 0.0
        %1483 = vmatpush1.msra.mxu0 0.0
        %1484 = vmatprep.subr.mxu0 0.0
        %1485 = vmatpush1.msra.mxu0 0.0
        %1486 = vmatprep.subr.mxu0 0.0
        %1487 = vmatpush1.msra.mxu0 0.0
        %1488 = vmatprep.subr.mxu0 0.0
        %1489 = vmatpush1.msra.mxu0 0.0
        %1490 = vmatprep.subr.mxu0 0.0
        %1491 = vmatpush1.msra.mxu0 0.0
        %1492 = vmatprep.subr.mxu0 0.0
        %1493 = vmatpush1.msra.mxu0 0.0
        %1494 = vmatprep.subr.mxu0 0.0
        %1495 = vmatpush1.msra.mxu0 0.0
        %1496 = vmatprep.subr.mxu0 0.0
        %1497 = vmatpush1.msra.mxu0 0.0
        %1498 = vmatprep.subr.mxu0 0.0
        %1499 = vmatpush1.msra.mxu0 0.0
        %1500 = vmatprep.subr.mxu0 0.0
        %1501 = vmatpush1.msra.mxu0 0.0
        %1502 = vmatprep.subr.mxu0 0.0
        %1503 = vmatpush1.msra.mxu0 0.0
        %1504 = vmatprep.subr.mxu0 0.0
        %1505 = vmatpush1.msra.mxu0 0.0
        %1506 = vmatprep.subr.mxu0 0.0
        %1507 = vmatpush1.msra.mxu0 0.0
        %1508 = vmatprep.subr.mxu0 0.0
        %1509 = vmatpush1.msra.mxu0 0.0
        %1510 = vmatprep.subr.mxu0 0.0
        %1511 = vmatpush1.msra.mxu0 0.0
        %1512 = vmatprep.subr.mxu0 0.0
        %1513 = vmatpush1.msra.mxu0 0.0
        %1514 = vmatprep.subr.mxu0 0.0
        %1515 = vmatpush1.msra.mxu0 0.0
        %1516 = vmatprep.subr.mxu0 0.0
        %1517 = vmatpush1.msra.mxu0 0.0
        %1518 = vmatprep.subr.mxu0 0.0
        %1519 = vmatpush1.msra.mxu0 0.0
        %1520 = vmatprep.subr.mxu0 0.0
        %1521 = vmatpush1.msra.mxu0 0.0
        %1522 = vmatprep.subr.mxu0 0.0
        %1523 = vmatpush1.msra.mxu0 0.0
        %1524 = vmatprep.subr.mxu0 0.0
        %1525 = vmatpush1.msra.mxu0 0.0
        %1526 = vmatprep.subr.mxu0 0.0
        %1527 = vmatpush1.msra.mxu0 0.0
        %1528 = vmatprep.subr.mxu0 0.0
        %1529 = vmatpush1.msra.mxu0 0.0
        %1530 = vmatprep.mubr.f32.mxu0 0.0
        %1531 = vmatmul.mubr.f32.gmra.mrb[0].mxu0 %v1464
        %v1532 = vpop.f32.mrb[0].mxu0
        %v1533 = vadd.f32 0.0, %v1532
        %v1534 = vpop.f32.mrb[0].mxu0
        %1535 = vdwg.mxu0
        %1537 = vrot.lane.b32.xlu0 %v1387, 8
        %v1538 = vpop.permute.xlu0 %1537
        %1541 = vrot.lane.b32.xlu0 %v1460, 16
        %v1542 = vpop.permute.xlu0 %1541
        %1545 = vrot.lane.b32.xlu0 %v1533, 24
        %v1546 = vpop.permute.xlu0 %1545
        %v1548 = vsel %vm903, %v1314, %v1538
        %vm1549 = vcmask 130048
        %v1550 = vsel %vm1549, %v1548, %v1542
        %vm1551 = vcmask 195584
        %v1552 = vsel %vm1551, %v1550, %v1546
        %v1554 = vsel %vm554, %v1552, 0
        %1556 = vmatprep.subr.mxu0 0.0
        %1557 = vmatpush1.msra.mxu0 %v511
        %1558 = vmatprep.subr.mxu0 0.0
        %1559 = vmatpush1.msra.mxu0 %v512
        %1560 = vmatprep.subr.mxu0 0.0
        %1561 = vmatpush1.msra.mxu0 %v513
        %1562 = vmatprep.subr.mxu0 0.0
        %1563 = vmatpush1.msra.mxu0 %v514
        %1564 = vmatprep.subr.mxu0 0.0
        %1565 = vmatpush1.msra.mxu0 0.0
        %1566 = vmatprep.subr.mxu0 0.0
        %1567 = vmatpush1.msra.mxu0 0.0
        %1568 = vmatprep.subr.mxu0 0.0
        %1569 = vmatpush1.msra.mxu0 0.0
        %1570 = vmatprep.subr.mxu0 0.0
        %1571 = vmatpush1.msra.mxu0 0.0
        %1572 = vmatprep.subr.mxu0 0.0
        %1573 = vmatpush1.msra.mxu0 0.0
        %1574 = vmatprep.subr.mxu0 0.0
        %1575 = vmatpush1.msra.mxu0 0.0
        %1576 = vmatprep.subr.mxu0 0.0
        %1577 = vmatpush1.msra.mxu0 0.0
        %1578 = vmatprep.subr.mxu0 0.0
        %1579 = vmatpush1.msra.mxu0 0.0
        %1580 = vmatprep.subr.mxu0 0.0
        %1581 = vmatpush1.msra.mxu0 0.0
        %1582 = vmatprep.subr.mxu0 0.0
        %1583 = vmatpush1.msra.mxu0 0.0
        %1584 = vmatprep.subr.mxu0 0.0
        %1585 = vmatpush1.msra.mxu0 0.0
        %1586 = vmatprep.subr.mxu0 0.0
        %1587 = vmatpush1.msra.mxu0 0.0
        %1588 = vmatprep.subr.mxu0 0.0
        %1589 = vmatpush1.msra.mxu0 0.0
        %1590 = vmatprep.subr.mxu0 0.0
        %1591 = vmatpush1.msra.mxu0 0.0
        %1592 = vmatprep.subr.mxu0 0.0
        %1593 = vmatpush1.msra.mxu0 0.0
        %1594 = vmatprep.subr.mxu0 0.0
        %1595 = vmatpush1.msra.mxu0 0.0
        %1596 = vmatprep.subr.mxu0 0.0
        %1597 = vmatpush1.msra.mxu0 0.0
        %1598 = vmatprep.subr.mxu0 0.0
        %1599 = vmatpush1.msra.mxu0 0.0
        %1600 = vmatprep.subr.mxu0 0.0
        %1601 = vmatpush1.msra.mxu0 0.0
        %1602 = vmatprep.subr.mxu0 0.0
        %1603 = vmatpush1.msra.mxu0 0.0
        %1604 = vmatprep.subr.mxu0 0.0
        %1605 = vmatpush1.msra.mxu0 0.0
        %1606 = vmatprep.subr.mxu0 0.0
        %1607 = vmatpush1.msra.mxu0 0.0
        %1608 = vmatprep.subr.mxu0 0.0
        %1609 = vmatpush1.msra.mxu0 0.0
        %1610 = vmatprep.subr.mxu0 0.0
        %1611 = vmatpush1.msra.mxu0 0.0
        %1612 = vmatprep.subr.mxu0 0.0
        %1613 = vmatpush1.msra.mxu0 0.0
        %1614 = vmatprep.subr.mxu0 0.0
        %1615 = vmatpush1.msra.mxu0 0.0
        %1616 = vmatprep.subr.mxu0 0.0
        %1617 = vmatpush1.msra.mxu0 0.0
        %1618 = vmatprep.subr.mxu0 0.0
        %1619 = vmatpush1.msra.mxu0 0.0
        %1620 = vmatprep.mubr.f32.mxu0 0.0
        %1621 = vmatmul.mubr.f32.gmra.mrb[0].mxu0 %v1554
        %v1622 = vpop.f32.mrb[0].mxu0
        %v1623 = vadd.f32 0.0, %v1622
        %v1624 = vpop.f32.mrb[0].mxu0
        %1625 = vdwg.mxu0
        %v1626 = vadd.f32 %v625, %v1623
        %v1627 = vsel %vm554, %v1626, 0.0
        %1628 = vadd.xlane.f32.xlu0 %v1627
        %v1629 = vpop.xlane.xlu0 %1628
        %v1630 = vmul.f32 %v1629, %v631
        %v1631 = vsub.f32 %v1626, %v1630
        %v1632 = vmul.f32 %v1631, %v1631
        %v1633 = vsel %vm554, %v1632, 0.0
        %1634 = vadd.xlane.f32.xlu0 %v1633
        %v1635 = vpop.xlane.xlu0 %1634
        %v1636 = vmul.f32 %v1635, %v638
        %v1637 = vrsqrt.pop %v1636
        %v1638 = vmul.f32 %v1636, %v1637
        %vm1639 = vcmp.eq.f32.partialorder %v1636, inf
        %v1640 = vsel %vm1639, %v1636, %v1638
        %vm1641 = vcmp.eq.f32.partialorder %v1636, 0.0
        %v1642 = vand.u32 %v1636, 2147483648
        %v1643 = vsel %vm1641, %v1642, %v1640
        %v1644 = vadd.f32 %v1643, 1e-06
        %v1645 = vrcp.pop %v1644
        %v1646 = vmul.f32 1.0, %v1645
        %v1647 = vmul.f32 %v1631, %v1646
        %v1649 = vlaneseq
        %v1650 = vshrl.u32 %v1649, 7
        %v1651 = vsub.s32 0, %v1650
        %v1652 = vrot.slane %v497, %v1651
        %v1654 = vmul.f32 %v1652, %v1647
        %v1656 = vlaneseq
        %v1657 = vshrl.u32 %v1656, 7
        %v1658 = vsub.s32 0, %v1657
        %v1659 = vrot.slane %v498, %v1658
        %v1661 = vadd.f32 %v1654, %v1659
        %v1663 = vrot.slane %v1661, 7
        %vm1665 = vcmask 1040384
        %v1666 = vsel %vm1665, 0.0, %v1663
        %v1667 = vrot.slane %v1661, 1
        %vm1669 = vcmask 1046528
        %v1670 = vsel %vm1669, %v1667, 0.0
        %1671 = vrot.lane.b32.xlu0 %v1661, 32
        %v1672 = vpop.permute.xlu0 %1671
        %1675 = vrot.lane.b32.xlu0 %v1670, 64
        %v1676 = vpop.permute.xlu0 %1675
        %v1678 = vsel %vm554, %v1666, %v1672
        %vm1679 = vcmask 523264
        %v1680 = vsel %vm1679, %v1678, %v1676
        %v1682 = vlaneseq
        %v1683 = vshrl.u32 %v1682, 7
        %v1684 = vsub.s32 0, %v1683
        %v1685 = vrot.slane %v527, %v1684
        %vm1687 = vcmask 785408
        %v1689 = vsel %vm1687, %v1680, 0
        %1691 = vmatprep.subr.mxu0 0.0
        %1692 = vmatpush1.msra.mxu0 %v515
        %1693 = vmatprep.subr.mxu0 0.0
        %1694 = vmatpush1.msra.mxu0 %v516
        %1695 = vmatprep.subr.mxu0 0.0
        %1696 = vmatpush1.msra.mxu0 %v517
        %1697 = vmatprep.subr.mxu0 0.0
        %1698 = vmatpush1.msra.mxu0 %v518
        %1699 = vmatprep.subr.mxu0 0.0
        %1700 = vmatpush1.msra.mxu0 %v519
        %1701 = vmatprep.subr.mxu0 0.0
        %1702 = vmatpush1.msra.mxu0 %v520
        %1703 = vmatprep.subr.mxu0 0.0
        %1704 = vmatpush1.msra.mxu0 %v521
        %1705 = vmatprep.subr.mxu0 0.0
        %1706 = vmatpush1.msra.mxu0 %v522
        %1707 = vmatprep.subr.mxu0 0.0
        %1708 = vmatpush1.msra.mxu0 %v523
        %1709 = vmatprep.subr.mxu0 0.0
        %1710 = vmatpush1.msra.mxu0 %v524
        %1711 = vmatprep.subr.mxu0 0.0
        %1712 = vmatpush1.msra.mxu0 %v525
        %1713 = vmatprep.subr.mxu0 0.0
        %1714 = vmatpush1.msra.mxu0 %v526
        %1715 = vmatprep.subr.mxu0 0.0
        %1716 = vmatpush1.msra.mxu0 0.0
        %1717 = vmatprep.subr.mxu0 0.0
        %1718 = vmatpush1.msra.mxu0 0.0
        %1719 = vmatprep.subr.mxu0 0.0
        %1720 = vmatpush1.msra.mxu0 0.0
        %1721 = vmatprep.subr.mxu0 0.0
        %1722 = vmatpush1.msra.mxu0 0.0
        %1723 = vmatprep.subr.mxu0 0.0
        %1724 = vmatpush1.msra.mxu0 0.0
        %1725 = vmatprep.subr.mxu0 0.0
        %1726 = vmatpush1.msra.mxu0 0.0
        %1727 = vmatprep.subr.mxu0 0.0
        %1728 = vmatpush1.msra.mxu0 0.0
        %1729 = vmatprep.subr.mxu0 0.0
        %1730 = vmatpush1.msra.mxu0 0.0
        %1731 = vmatprep.subr.mxu0 0.0
        %1732 = vmatpush1.msra.mxu0 0.0
        %1733 = vmatprep.subr.mxu0 0.0
        %1734 = vmatpush1.msra.mxu0 0.0
        %1735 = vmatprep.subr.mxu0 0.0
        %1736 = vmatpush1.msra.mxu0 0.0
        %1737 = vmatprep.subr.mxu0 0.0
        %1738 = vmatpush1.msra.mxu0 0.0
        %1739 = vmatprep.subr.mxu0 0.0
        %1740 = vmatpush1.msra.mxu0 0.0
        %1741 = vmatprep.subr.mxu0 0.0
        %1742 = vmatpush1.msra.mxu0 0.0
        %1743 = vmatprep.subr.mxu0 0.0
        %1744 = vmatpush1.msra.mxu0 0.0
        %1745 = vmatprep.subr.mxu0 0.0
        %1746 = vmatpush1.msra.mxu0 0.0
        %1747 = vmatprep.subr.mxu0 0.0
        %1748 = vmatpush1.msra.mxu0 0.0
        %1749 = vmatprep.subr.mxu0 0.0
        %1750 = vmatpush1.msra.mxu0 0.0
        %1751 = vmatprep.subr.mxu0 0.0
        %1752 = vmatpush1.msra.mxu0 0.0
        %1753 = vmatprep.subr.mxu0 0.0
        %1754 = vmatpush1.msra.mxu0 0.0
        %1755 = vmatprep.mubr.f32.mxu0 0.0
        %1756 = vmatmul.mubr.f32.gmra.mrb[0].mxu0 %v1689
        %v1757 = vpop.f32.mrb[0].mxu0
        %v1758 = vadd.f32 %v1685, %v1757
        %v1759 = vpop.f32.mrb[0].mxu0
        %1760 = vdwg.mxu0
        %v1761 = vmax.f32 %v1758, 0.0
        %v1763 = vrot.slane %v1761, 7
        %v1765 = vsel %vm1665, 0.0, %v1763
        %v1766 = vrot.slane %v1761, 1
        %v1768 = vsel %vm1669, %v1766, 0.0
        %1769 = vrot.lane.b32.xlu0 %v1761, 64
        %v1770 = vpop.permute.xlu0 %1769
        %v1772 = vsel %vm1679, %v1765, %v1770
        %v1774 = vlaneseq
        %v1775 = vshrl.u32 %v1774, 7
        %v1776 = vsub.s32 0, %v1775
        %v1777 = vrot.slane %v552, %v1776
        %v1780 = vsel %vm1679, %v1768, 0
        %1782 = vmatprep.subr.mxu0 0.0
        %1783 = vmatpush1.msra.mxu0 %v528
        %1784 = vmatprep.subr.mxu0 0.0
        %1785 = vmatpush1.msra.mxu0 %v529
        %1786 = vmatprep.subr.mxu0 0.0
        %1787 = vmatpush1.msra.mxu0 %v530
        %1788 = vmatprep.subr.mxu0 0.0
        %1789 = vmatpush1.msra.mxu0 %v531
        %1790 = vmatprep.subr.mxu0 0.0
        %1791 = vmatpush1.msra.mxu0 %v532
        %1792 = vmatprep.subr.mxu0 0.0
        %1793 = vmatpush1.msra.mxu0 %v533
        %1794 = vmatprep.subr.mxu0 0.0
        %1795 = vmatpush1.msra.mxu0 %v534
        %1796 = vmatprep.subr.mxu0 0.0
        %1797 = vmatpush1.msra.mxu0 %v535
        %1798 = vmatprep.subr.mxu0 0.0
        %1799 = vmatpush1.msra.mxu0 %v536
        %1800 = vmatprep.subr.mxu0 0.0
        %1801 = vmatpush1.msra.mxu0 %v537
        %1802 = vmatprep.subr.mxu0 0.0
        %1803 = vmatpush1.msra.mxu0 %v538
        %1804 = vmatprep.subr.mxu0 0.0
        %1805 = vmatpush1.msra.mxu0 %v539
        %1806 = vmatprep.subr.mxu0 0.0
        %1807 = vmatpush1.msra.mxu0 %v540
        %1808 = vmatprep.subr.mxu0 0.0
        %1809 = vmatpush1.msra.mxu0 %v541
        %1810 = vmatprep.subr.mxu0 0.0
        %1811 = vmatpush1.msra.mxu0 %v542
        %1812 = vmatprep.subr.mxu0 0.0
        %1813 = vmatpush1.msra.mxu0 %v543
        %1814 = vmatprep.subr.mxu0 0.0
        %1815 = vmatpush1.msra.mxu0 %v544
        %1816 = vmatprep.subr.mxu0 0.0
        %1817 = vmatpush1.msra.mxu0 %v545
        %1818 = vmatprep.subr.mxu0 0.0
        %1819 = vmatpush1.msra.mxu0 %v546
        %1820 = vmatprep.subr.mxu0 0.0
        %1821 = vmatpush1.msra.mxu0 %v547
        %1822 = vmatprep.subr.mxu0 0.0
        %1823 = vmatpush1.msra.mxu0 %v548
        %1824 = vmatprep.subr.mxu0 0.0
        %1825 = vmatpush1.msra.mxu0 %v549
        %1826 = vmatprep.subr.mxu0 0.0
        %1827 = vmatpush1.msra.mxu0 %v550
        %1828 = vmatprep.subr.mxu0 0.0
        %1829 = vmatpush1.msra.mxu0 %v551
        %1830 = vmatprep.subr.mxu0 0.0
        %1831 = vmatpush1.msra.mxu0 0.0
        %1832 = vmatprep.subr.mxu0 0.0
        %1833 = vmatpush1.msra.mxu0 0.0
        %1834 = vmatprep.subr.mxu0 0.0
        %1835 = vmatpush1.msra.mxu0 0.0
        %1836 = vmatprep.subr.mxu0 0.0
        %1837 = vmatpush1.msra.mxu0 0.0
        %1838 = vmatprep.subr.mxu0 0.0
        %1839 = vmatpush1.msra.mxu0 0.0
        %1840 = vmatprep.subr.mxu0 0.0
        %1841 = vmatpush1.msra.mxu0 0.0
        %1842 = vmatprep.subr.mxu0 0.0
        %1843 = vmatpush1.msra.mxu0 0.0
        %1844 = vmatprep.subr.mxu0 0.0
        %1845 = vmatpush1.msra.mxu0 0.0
        %1846 = vmatprep.mubr.f32.mxu0 %v1780
        %1847 = vmatmul.mubr.f32.gmra.mrb[0].mxu0 %v1772
        %v1848 = vpop.f32.mrb[0].mxu0
        %v1849 = vadd.f32 %v1777, %v1848
        %v1850 = vpop.f32.mrb[0].mxu0
        %1851 = vdwg.mxu0
        %v1852 = vmax.f32 %v1849, 0.0
        %v1853 = vadd.f32 %v1626, %v1852
        %s1854 = scalar_lea.vmem %s1, 8
        %v1855 = vld [vmem:[%s1854] sm:$0xff]
        %v1856 = vadd.f32 %v1853, %v1855
        %v1857 = vsel %vm554, %v1856, 0.0
        %1858 = vadd.xlane.f32.xlu0 %v1857
        %v1859 = vpop.xlane.xlu0 %1858
        %v1860 = vmul.f32 %v1859, %v631
        %v1861 = vsub.f32 %v1856, %v1860
        %v1862 = vmul.f32 %v1861, %v1861
        %v1863 = vsel %vm554, %v1862, 0.0
        %1864 = vadd.xlane.f32.xlu0 %v1863
        %v1865 = vpop.xlane.xlu0 %1864
        %v1866 = vmul.f32 %v1865, %v638
        %v1867 = vrsqrt.pop %v1866
        %v1868 = vmul.f32 %v1866, %v1867
        %vm1869 = vcmp.eq.f32.partialorder %v1866, inf
        %v1870 = vsel %vm1869, %v1866, %v1868
        %vm1871 = vcmp.eq.f32.partialorder %v1866, 0.0
        %v1872 = vand.u32 %v1866, 2147483648
        %v1873 = vsel %vm1871, %v1872, %v1870
        %v1874 = vadd.f32 %v1873, 1e-06
        %v1875 = vrcp.pop %v1874
        %v1876 = vmul.f32 1.0, %v1875
        %v1877 = vmul.f32 %v1861, %v1876
        %v1878 = vmul.f32 %v655, %v1877
        %v1879 = vadd.f32 %v1878, %v662
        %v1881 = vsel %vm554, %v1879, 0
        %1883 = vmatprep.subr.mxu0 0.0
        %1884 = vmatpush1.msra.mxu0 %v499
        %1885 = vmatprep.subr.mxu0 0.0
        %1886 = vmatpush1.msra.mxu0 %v500
        %1887 = vmatprep.subr.mxu0 0.0
        %1888 = vmatpush1.msra.mxu0 %v501
        %1889 = vmatprep.subr.mxu0 0.0
        %1890 = vmatpush1.msra.mxu0 %v502
        %1891 = vmatprep.subr.mxu0 0.0
        %1892 = vmatpush1.msra.mxu0 0.0
        %1893 = vmatprep.subr.mxu0 0.0
        %1894 = vmatpush1.msra.mxu0 0.0
        %1895 = vmatprep.subr.mxu0 0.0
        %1896 = vmatpush1.msra.mxu0 0.0
        %1897 = vmatprep.subr.mxu0 0.0
        %1898 = vmatpush1.msra.mxu0 0.0
        %1899 = vmatprep.subr.mxu0 0.0
        %1900 = vmatpush1.msra.mxu0 0.0
        %1901 = vmatprep.subr.mxu0 0.0
        %1902 = vmatpush1.msra.mxu0 0.0
        %1903 = vmatprep.subr.mxu0 0.0
        %1904 = vmatpush1.msra.mxu0 0.0
        %1905 = vmatprep.subr.mxu0 0.0
        %1906 = vmatpush1.msra.mxu0 0.0
        %1907 = vmatprep.subr.mxu0 0.0
        %1908 = vmatpush1.msra.mxu0 0.0
        %1909 = vmatprep.subr.mxu0 0.0
        %1910 = vmatpush1.msra.mxu0 0.0
        %1911 = vmatprep.subr.mxu0 0.0
        %1912 = vmatpush1.msra.mxu0 0.0
        %1913 = vmatprep.subr.mxu0 0.0
        %1914 = vmatpush1.msra.mxu0 0.0
        %1915 = vmatprep.subr.mxu0 0.0
        %1916 = vmatpush1.msra.mxu0 0.0
        %1917 = vmatprep.subr.mxu0 0.0
        %1918 = vmatpush1.msra.mxu0 0.0
        %1919 = vmatprep.subr.mxu0 0.0
        %1920 = vmatpush1.msra.mxu0 0.0
        %1921 = vmatprep.subr.mxu0 0.0
        %1922 = vmatpush1.msra.mxu0 0.0
        %1923 = vmatprep.subr.mxu0 0.0
        %1924 = vmatpush1.msra.mxu0 0.0
        %1925 = vmatprep.subr.mxu0 0.0
        %1926 = vmatpush1.msra.mxu0 0.0
        %1927 = vmatprep.subr.mxu0 0.0
        %1928 = vmatpush1.msra.mxu0 0.0
        %1929 = vmatprep.subr.mxu0 0.0
        %1930 = vmatpush1.msra.mxu0 0.0
        %1931 = vmatprep.subr.mxu0 0.0
        %1932 = vmatpush1.msra.mxu0 0.0
        %1933 = vmatprep.subr.mxu0 0.0
        %1934 = vmatpush1.msra.mxu0 0.0
        %1935 = vmatprep.subr.mxu0 0.0
        %1936 = vmatpush1.msra.mxu0 0.0
        %1937 = vmatprep.subr.mxu0 0.0
        %1938 = vmatpush1.msra.mxu0 0.0
        %1939 = vmatprep.subr.mxu0 0.0
        %1940 = vmatpush1.msra.mxu0 0.0
        %1941 = vmatprep.subr.mxu0 0.0
        %1942 = vmatpush1.msra.mxu0 0.0
        %1943 = vmatprep.subr.mxu0 0.0
        %1944 = vmatpush1.msra.mxu0 0.0
        %1945 = vmatprep.subr.mxu0 0.0
        %1946 = vmatpush1.msra.mxu0 0.0
        %1947 = vmatprep.mubr.f32.mxu0 0.0
        %1948 = vmatmul.mubr.f32.gmra.mrb[0].mxu0 %v1881
        %v1949 = vpop.f32.mrb[0].mxu0
        %v1950 = vadd.f32 0.0, %v1949
        %v1951 = vpop.f32.mrb[0].mxu0
        %1952 = vdwg.mxu0
        %v1953 = vmul.f32 %v1950, 0.35355338
        %1954 = vmatprep.subr.mxu0 0.0
        %1955 = vmatpush1.msra.mxu0 %v503
        %1956 = vmatprep.subr.mxu0 0.0
        %1957 = vmatpush1.msra.mxu0 %v504
        %1958 = vmatprep.subr.mxu0 0.0
        %1959 = vmatpush1.msra.mxu0 %v505
        %1960 = vmatprep.subr.mxu0 0.0
        %1961 = vmatpush1.msra.mxu0 %v506
        %1962 = vmatprep.subr.mxu0 0.0
        %1963 = vmatpush1.msra.mxu0 0.0
        %1964 = vmatprep.subr.mxu0 0.0
        %1965 = vmatpush1.msra.mxu0 0.0
        %1966 = vmatprep.subr.mxu0 0.0
        %1967 = vmatpush1.msra.mxu0 0.0
        %1968 = vmatprep.subr.mxu0 0.0
        %1969 = vmatpush1.msra.mxu0 0.0
        %1970 = vmatprep.subr.mxu0 0.0
        %1971 = vmatpush1.msra.mxu0 0.0
        %1972 = vmatprep.subr.mxu0 0.0
        %1973 = vmatpush1.msra.mxu0 0.0
        %1974 = vmatprep.subr.mxu0 0.0
        %1975 = vmatpush1.msra.mxu0 0.0
        %1976 = vmatprep.subr.mxu0 0.0
        %1977 = vmatpush1.msra.mxu0 0.0
        %1978 = vmatprep.subr.mxu0 0.0
        %1979 = vmatpush1.msra.mxu0 0.0
        %1980 = vmatprep.subr.mxu0 0.0
        %1981 = vmatpush1.msra.mxu0 0.0
        %1982 = vmatprep.subr.mxu0 0.0
        %1983 = vmatpush1.msra.mxu0 0.0
        %1984 = vmatprep.subr.mxu0 0.0
        %1985 = vmatpush1.msra.mxu0 0.0
        %1986 = vmatprep.subr.mxu0 0.0
        %1987 = vmatpush1.msra.mxu0 0.0
        %1988 = vmatprep.subr.mxu0 0.0
        %1989 = vmatpush1.msra.mxu0 0.0
        %1990 = vmatprep.subr.mxu0 0.0
        %1991 = vmatpush1.msra.mxu0 0.0
        %1992 = vmatprep.subr.mxu0 0.0
        %1993 = vmatpush1.msra.mxu0 0.0
        %1994 = vmatprep.subr.mxu0 0.0
        %1995 = vmatpush1.msra.mxu0 0.0
        %1996 = vmatprep.subr.mxu0 0.0
        %1997 = vmatpush1.msra.mxu0 0.0
        %1998 = vmatprep.subr.mxu0 0.0
        %1999 = vmatpush1.msra.mxu0 0.0
        %2000 = vmatprep.subr.mxu0 0.0
        %2001 = vmatpush1.msra.mxu0 0.0
        %2002 = vmatprep.subr.mxu0 0.0
        %2003 = vmatpush1.msra.mxu0 0.0
        %2004 = vmatprep.subr.mxu0 0.0
        %2005 = vmatpush1.msra.mxu0 0.0
        %2006 = vmatprep.subr.mxu0 0.0
        %2007 = vmatpush1.msra.mxu0 0.0
        %2008 = vmatprep.subr.mxu0 0.0
        %2009 = vmatpush1.msra.mxu0 0.0
        %2010 = vmatprep.subr.mxu0 0.0
        %2011 = vmatpush1.msra.mxu0 0.0
        %2012 = vmatprep.subr.mxu0 0.0
        %2013 = vmatpush1.msra.mxu0 0.0
        %2014 = vmatprep.subr.mxu0 0.0
        %2015 = vmatpush1.msra.mxu0 0.0
        %2016 = vmatprep.subr.mxu0 0.0
        %2017 = vmatpush1.msra.mxu0 0.0
        %2018 = vmatprep.mubr.f32.mxu0 0.0
        %2019 = vmatmul.mubr.f32.gmra.mrb[0].mxu0 %v1881
        %v2020 = vpop.f32.mrb[0].mxu0
        %v2021 = vadd.f32 0.0, %v2020
        %v2022 = vpop.f32.mrb[0].mxu0
        %2023 = vdwg.mxu0
        %2024 = vmatprep.subr.mxu0 0.0
        %2025 = vmatpush1.msra.mxu0 %v507
        %2026 = vmatprep.subr.mxu0 0.0
        %2027 = vmatpush1.msra.mxu0 %v508
        %2028 = vmatprep.subr.mxu0 0.0
        %2029 = vmatpush1.msra.mxu0 %v509
        %2030 = vmatprep.subr.mxu0 0.0
        %2031 = vmatpush1.msra.mxu0 %v510
        %2032 = vmatprep.subr.mxu0 0.0
        %2033 = vmatpush1.msra.mxu0 0.0
        %2034 = vmatprep.subr.mxu0 0.0
        %2035 = vmatpush1.msra.mxu0 0.0
        %2036 = vmatprep.subr.mxu0 0.0
        %2037 = vmatpush1.msra.mxu0 0.0
        %2038 = vmatprep.subr.mxu0 0.0
        %2039 = vmatpush1.msra.mxu0 0.0
        %2040 = vmatprep.subr.mxu0 0.0
        %2041 = vmatpush1.msra.mxu0 0.0
        %2042 = vmatprep.subr.mxu0 0.0
        %2043 = vmatpush1.msra.mxu0 0.0
        %2044 = vmatprep.subr.mxu0 0.0
        %2045 = vmatpush1.msra.mxu0 0.0
        %2046 = vmatprep.subr.mxu0 0.0
        %2047 = vmatpush1.msra.mxu0 0.0
        %2048 = vmatprep.subr.mxu0 0.0
        %2049 = vmatpush1.msra.mxu0 0.0
        %2050 = vmatprep.subr.mxu0 0.0
        %2051 = vmatpush1.msra.mxu0 0.0
        %2052 = vmatprep.subr.mxu0 0.0
        %2053 = vmatpush1.msra.mxu0 0.0
        %2054 = vmatprep.subr.mxu0 0.0
        %2055 = vmatpush1.msra.mxu0 0.0
        %2056 = vmatprep.subr.mxu0 0.0
        %2057 = vmatpush1.msra.mxu0 0.0
        %2058 = vmatprep.subr.mxu0 0.0
        %2059 = vmatpush1.msra.mxu0 0.0
        %2060 = vmatprep.subr.mxu0 0.0
        %2061 = vmatpush1.msra.mxu0 0.0
        %2062 = vmatprep.subr.mxu0 0.0
        %2063 = vmatpush1.msra.mxu0 0.0
        %2064 = vmatprep.subr.mxu0 0.0
        %2065 = vmatpush1.msra.mxu0 0.0
        %2066 = vmatprep.subr.mxu0 0.0
        %2067 = vmatpush1.msra.mxu0 0.0
        %2068 = vmatprep.subr.mxu0 0.0
        %2069 = vmatpush1.msra.mxu0 0.0
        %2070 = vmatprep.subr.mxu0 0.0
        %2071 = vmatpush1.msra.mxu0 0.0
        %2072 = vmatprep.subr.mxu0 0.0
        %2073 = vmatpush1.msra.mxu0 0.0
        %2074 = vmatprep.subr.mxu0 0.0
        %2075 = vmatpush1.msra.mxu0 0.0
        %2076 = vmatprep.subr.mxu0 0.0
        %2077 = vmatpush1.msra.mxu0 0.0
        %2078 = vmatprep.subr.mxu0 0.0
        %2079 = vmatpush1.msra.mxu0 0.0
        %2080 = vmatprep.subr.mxu0 0.0
        %2081 = vmatpush1.msra.mxu0 0.0
        %2082 = vmatprep.subr.mxu0 0.0
        %2083 = vmatpush1.msra.mxu0 0.0
        %2084 = vmatprep.subr.mxu0 0.0
        %2085 = vmatpush1.msra.mxu0 0.0
        %2086 = vmatprep.subr.mxu0 0.0
        %2087 = vmatpush1.msra.mxu0 0.0
        %2088 = vmatprep.mubr.f32.mxu0 0.0
        %2089 = vmatmul.mubr.f32.gmra.mrb[0].mxu0 %v1881
        %v2090 = vpop.f32.mrb[0].mxu0
        %v2091 = vadd.f32 0.0, %v2090
        %v2092 = vpop.f32.mrb[0].mxu0
        %2093 = vdwg.mxu0
        %2095 = vrot.lane.b32.xlu0 %v1953, 120
        %v2096 = vpop.permute.xlu0 %2095
        %2097 = vrot.lane.b32.xlu0 %v1953, 112
        %v2098 = vpop.permute.xlu0 %2097
        %2099 = vrot.lane.b32.xlu0 %v1953, 104
        %v2100 = vpop.permute.xlu0 %2099
        %2102 = vrot.lane.b32.xlu0 %v2021, 120
        %v2103 = vpop.permute.xlu0 %2102
        %2104 = vrot.lane.b32.xlu0 %v2021, 112
        %v2105 = vpop.permute.xlu0 %2104
        %2106 = vrot.lane.b32.xlu0 %v2021, 104
        %v2107 = vpop.permute.xlu0 %2106
        %2109 = vrot.lane.b32.xlu0 %v2091, 120
        %v2110 = vpop.permute.xlu0 %2109
        %2112 = vrot.lane.b32.xlu0 %v2091, 112
        %v2113 = vpop.permute.xlu0 %2112
        %2115 = vrot.lane.b32.xlu0 %v2091, 104
        %v2116 = vpop.permute.xlu0 %2115
        %v2118 = vsel %vm903, %v1953, 0
        %v2120 = vsel %vm903, %v2021, 0
        %2122 = vmatprep.subr.mxu0 0.0
        %2123 = vmatpush1.xpose.msra.mxu0 %v2120
        %2124 = vmatprep.subr.mxu0 0.0
        %2125 = vmatpush1.xpose.msra.mxu0 0.0
        %2126 = vmatprep.subr.mxu0 0.0
        %2127 = vmatpush1.xpose.msra.mxu0 0.0
        %2128 = vmatprep.subr.mxu0 0.0
        %2129 = vmatpush1.xpose.msra.mxu0 0.0
        %2130 = vmatprep.subr.mxu0 0.0
        %2131 = vmatpush1.xpose.msra.mxu0 0.0
        %2132 = vmatprep.subr.mxu0 0.0
        %2133 = vmatpush1.xpose.msra.mxu0 0.0
        %2134 = vmatprep.subr.mxu0 0.0
        %2135 = vmatpush1.xpose.msra.mxu0 0.0
        %2136 = vmatprep.subr.mxu0 0.0
        %2137 = vmatpush1.xpose.msra.mxu0 0.0
        %2138 = vmatprep.subr.mxu0 0.0
        %2139 = vmatpush1.xpose.msra.mxu0 0.0
        %2140 = vmatprep.subr.mxu0 0.0
        %2141 = vmatpush1.xpose.msra.mxu0 0.0
        %2142 = vmatprep.subr.mxu0 0.0
        %2143 = vmatpush1.xpose.msra.mxu0 0.0
        %2144 = vmatprep.subr.mxu0 0.0
        %2145 = vmatpush1.xpose.msra.mxu0 0.0
        %2146 = vmatprep.subr.mxu0 0.0
        %2147 = vmatpush1.xpose.msra.mxu0 0.0
        %2148 = vmatprep.subr.mxu0 0.0
        %2149 = vmatpush1.xpose.msra.mxu0 0.0
        %2150 = vmatprep.subr.mxu0 0.0
        %2151 = vmatpush1.xpose.msra.mxu0 0.0
        %2152 = vmatprep.subr.mxu0 0.0
        %2153 = vmatpush1.xpose.msra.mxu0 0.0
        %2154 = vmatprep.subr.mxu0 0.0
        %2155 = vmatpush1.xpose.msra.mxu0 0.0
        %2156 = vmatprep.subr.mxu0 0.0
        %2157 = vmatpush1.xpose.msra.mxu0 0.0
        %2158 = vmatprep.subr.mxu0 0.0
        %2159 = vmatpush1.xpose.msra.mxu0 0.0
        %2160 = vmatprep.subr.mxu0 0.0
        %2161 = vmatpush1.xpose.msra.mxu0 0.0
        %2162 = vmatprep.subr.mxu0 0.0
        %2163 = vmatpush1.xpose.msra.mxu0 0.0
        %2164 = vmatprep.subr.mxu0 0.0
        %2165 = vmatpush1.xpose.msra.mxu0 0.0
        %2166 = vmatprep.subr.mxu0 0.0
        %2167 = vmatpush1.xpose.msra.mxu0 0.0
        %2168 = vmatprep.subr.mxu0 0.0
        %2169 = vmatpush1.xpose.msra.mxu0 0.0
        %2170 = vmatprep.subr.mxu0 0.0
        %2171 = vmatpush1.xpose.msra.mxu0 0.0
        %2172 = vmatprep.subr.mxu0 0.0
        %2173 = vmatpush1.xpose.msra.mxu0 0.0
        %2174 = vmatprep.subr.mxu0 0.0
        %2175 = vmatpush1.xpose.msra.mxu0 0.0
        %2176 = vmatprep.subr.mxu0 0.0
        %2177 = vmatpush1.xpose.msra.mxu0 0.0
        %2178 = vmatprep.subr.mxu0 0.0
        %2179 = vmatpush1.xpose.msra.mxu0 0.0
        %2180 = vmatprep.subr.mxu0 0.0
        %2181 = vmatpush1.xpose.msra.mxu0 0.0
        %2182 = vmatprep.subr.mxu0 0.0
        %2183 = vmatpush1.xpose.msra.mxu0 0.0
        %2184 = vmatprep.subr.mxu0 0.0
        %2185 = vmatpush1.xpose.msra.mxu0 0.0
        %2186 = vmatprep.mubr.f32.mxu0 0.0
        %2187 = vmatmul.mubr.f32.gmra.mrb[0].mxu0 %v2118
        %v2188 = vpop.f32.mrb[0].mxu0
        %v2189 = vadd.f32 0.0, %v2188
        %v2190 = vpop.f32.mrb[0].mxu0
        %2191 = vdwg.mxu0
        %v2192 = vsel %vm903, %v2096, 0
        %v2194 = vsel %vm903, %v2103, 0
        %2196 = vmatprep.subr.mxu0 0.0
        %2197 = vmatpush1.xpose.msra.mxu0 %v2194
        %2198 = vmatprep.subr.mxu0 0.0
        %2199 = vmatpush1.xpose.msra.mxu0 0.0
        %2200 = vmatprep.subr.mxu0 0.0
        %2201 = vmatpush1.xpose.msra.mxu0 0.0
        %2202 = vmatprep.subr.mxu0 0.0
        %2203 = vmatpush1.xpose.msra.mxu0 0.0
        %2204 = vmatprep.subr.mxu0 0.0
        %2205 = vmatpush1.xpose.msra.mxu0 0.0
        %2206 = vmatprep.subr.mxu0 0.0
        %2207 = vmatpush1.xpose.msra.mxu0 0.0
        %2208 = vmatprep.subr.mxu0 0.0
        %2209 = vmatpush1.xpose.msra.mxu0 0.0
        %2210 = vmatprep.subr.mxu0 0.0
        %2211 = vmatpush1.xpose.msra.mxu0 0.0
        %2212 = vmatprep.subr.mxu0 0.0
        %2213 = vmatpush1.xpose.msra.mxu0 0.0
        %2214 = vmatprep.subr.mxu0 0.0
        %2215 = vmatpush1.xpose.msra.mxu0 0.0
        %2216 = vmatprep.subr.mxu0 0.0
        %2217 = vmatpush1.xpose.msra.mxu0 0.0
        %2218 = vmatprep.subr.mxu0 0.0
        %2219 = vmatpush1.xpose.msra.mxu0 0.0
        %2220 = vmatprep.subr.mxu0 0.0
        %2221 = vmatpush1.xpose.msra.mxu0 0.0
        %2222 = vmatprep.subr.mxu0 0.0
        %2223 = vmatpush1.xpose.msra.mxu0 0.0
        %2224 = vmatprep.subr.mxu0 0.0
        %2225 = vmatpush1.xpose.msra.mxu0 0.0
        %2226 = vmatprep.subr.mxu0 0.0
        %2227 = vmatpush1.xpose.msra.mxu0 0.0
        %2228 = vmatprep.subr.mxu0 0.0
        %2229 = vmatpush1.xpose.msra.mxu0 0.0
        %2230 = vmatprep.subr.mxu0 0.0
        %2231 = vmatpush1.xpose.msra.mxu0 0.0
        %2232 = vmatprep.subr.mxu0 0.0
        %2233 = vmatpush1.xpose.msra.mxu0 0.0
        %2234 = vmatprep.subr.mxu0 0.0
        %2235 = vmatpush1.xpose.msra.mxu0 0.0
        %2236 = vmatprep.subr.mxu0 0.0
        %2237 = vmatpush1.xpose.msra.mxu0 0.0
        %2238 = vmatprep.subr.mxu0 0.0
        %2239 = vmatpush1.xpose.msra.mxu0 0.0
        %2240 = vmatprep.subr.mxu0 0.0
        %2241 = vmatpush1.xpose.msra.mxu0 0.0
        %2242 = vmatprep.subr.mxu0 0.0
        %2243 = vmatpush1.xpose.msra.mxu0 0.0
        %2244 = vmatprep.subr.mxu0 0.0
        %2245 = vmatpush1.xpose.msra.mxu0 0.0
        %2246 = vmatprep.subr.mxu0 0.0
        %2247 = vmatpush1.xpose.msra.mxu0 0.0
        %2248 = vmatprep.subr.mxu0 0.0
        %2249 = vmatpush1.xpose.msra.mxu0 0.0
        %2250 = vmatprep.subr.mxu0 0.0
        %2251 = vmatpush1.xpose.msra.mxu0 0.0
        %2252 = vmatprep.subr.mxu0 0.0
        %2253 = vmatpush1.xpose.msra.mxu0 0.0
        %2254 = vmatprep.subr.mxu0 0.0
        %2255 = vmatpush1.xpose.msra.mxu0 0.0
        %2256 = vmatprep.subr.mxu0 0.0
        %2257 = vmatpush1.xpose.msra.mxu0 0.0
        %2258 = vmatprep.subr.mxu0 0.0
        %2259 = vmatpush1.xpose.msra.mxu0 0.0
        %2260 = vmatprep.mubr.f32.mxu0 0.0
        %2261 = vmatmul.mubr.f32.gmra.mrb[0].mxu0 %v2192
        %v2262 = vpop.f32.mrb[0].mxu0
        %v2263 = vadd.f32 0.0, %v2262
        %v2264 = vpop.f32.mrb[0].mxu0
        %2265 = vdwg.mxu0
        %v2266 = vsel %vm903, %v2098, 0
        %v2268 = vsel %vm903, %v2105, 0
        %2270 = vmatprep.subr.mxu0 0.0
        %2271 = vmatpush1.xpose.msra.mxu0 %v2268
        %2272 = vmatprep.subr.mxu0 0.0
        %2273 = vmatpush1.xpose.msra.mxu0 0.0
        %2274 = vmatprep.subr.mxu0 0.0
        %2275 = vmatpush1.xpose.msra.mxu0 0.0
        %2276 = vmatprep.subr.mxu0 0.0
        %2277 = vmatpush1.xpose.msra.mxu0 0.0
        %2278 = vmatprep.subr.mxu0 0.0
        %2279 = vmatpush1.xpose.msra.mxu0 0.0
        %2280 = vmatprep.subr.mxu0 0.0
        %2281 = vmatpush1.xpose.msra.mxu0 0.0
        %2282 = vmatprep.subr.mxu0 0.0
        %2283 = vmatpush1.xpose.msra.mxu0 0.0
        %2284 = vmatprep.subr.mxu0 0.0
        %2285 = vmatpush1.xpose.msra.mxu0 0.0
        %2286 = vmatprep.subr.mxu0 0.0
        %2287 = vmatpush1.xpose.msra.mxu0 0.0
        %2288 = vmatprep.subr.mxu0 0.0
        %2289 = vmatpush1.xpose.msra.mxu0 0.0
        %2290 = vmatprep.subr.mxu0 0.0
        %2291 = vmatpush1.xpose.msra.mxu0 0.0
        %2292 = vmatprep.subr.mxu0 0.0
        %2293 = vmatpush1.xpose.msra.mxu0 0.0
        %2294 = vmatprep.subr.mxu0 0.0
        %2295 = vmatpush1.xpose.msra.mxu0 0.0
        %2296 = vmatprep.subr.mxu0 0.0
        %2297 = vmatpush1.xpose.msra.mxu0 0.0
        %2298 = vmatprep.subr.mxu0 0.0
        %2299 = vmatpush1.xpose.msra.mxu0 0.0
        %2300 = vmatprep.subr.mxu0 0.0
        %2301 = vmatpush1.xpose.msra.mxu0 0.0
        %2302 = vmatprep.subr.mxu0 0.0
        %2303 = vmatpush1.xpose.msra.mxu0 0.0
        %2304 = vmatprep.subr.mxu0 0.0
        %2305 = vmatpush1.xpose.msra.mxu0 0.0
        %2306 = vmatprep.subr.mxu0 0.0
        %2307 = vmatpush1.xpose.msra.mxu0 0.0
        %2308 = vmatprep.subr.mxu0 0.0
        %2309 = vmatpush1.xpose.msra.mxu0 0.0
        %2310 = vmatprep.subr.mxu0 0.0
        %2311 = vmatpush1.xpose.msra.mxu0 0.0
        %2312 = vmatprep.subr.mxu0 0.0
        %2313 = vmatpush1.xpose.msra.mxu0 0.0
        %2314 = vmatprep.subr.mxu0 0.0
        %2315 = vmatpush1.xpose.msra.mxu0 0.0
        %2316 = vmatprep.subr.mxu0 0.0
        %2317 = vmatpush1.xpose.msra.mxu0 0.0
        %2318 = vmatprep.subr.mxu0 0.0
        %2319 = vmatpush1.xpose.msra.mxu0 0.0
        %2320 = vmatprep.subr.mxu0 0.0
        %2321 = vmatpush1.xpose.msra.mxu0 0.0
        %2322 = vmatprep.subr.mxu0 0.0
        %2323 = vmatpush1.xpose.msra.mxu0 0.0
        %2324 = vmatprep.subr.mxu0 0.0
        %2325 = vmatpush1.xpose.msra.mxu0 0.0
        %2326 = vmatprep.subr.mxu0 0.0
        %2327 = vmatpush1.xpose.msra.mxu0 0.0
        %2328 = vmatprep.subr.mxu0 0.0
        %2329 = vmatpush1.xpose.msra.mxu0 0.0
        %2330 = vmatprep.subr.mxu0 0.0
        %2331 = vmatpush1.xpose.msra.mxu0 0.0
        %2332 = vmatprep.subr.mxu0 0.0
        %2333 = vmatpush1.xpose.msra.mxu0 0.0
        %2334 = vmatprep.mubr.f32.mxu0 0.0
        %2335 = vmatmul.mubr.f32.gmra.mrb[0].mxu0 %v2266
        %v2336 = vpop.f32.mrb[0].mxu0
        %v2337 = vadd.f32 0.0, %v2336
        %v2338 = vpop.f32.mrb[0].mxu0
        %2339 = vdwg.mxu0
        %v2340 = vsel %vm903, %v2100, 0
        %v2342 = vsel %vm903, %v2107, 0
        %2344 = vmatprep.subr.mxu0 0.0
        %2345 = vmatpush1.xpose.msra.mxu0 %v2342
        %2346 = vmatprep.subr.mxu0 0.0
        %2347 = vmatpush1.xpose.msra.mxu0 0.0
        %2348 = vmatprep.subr.mxu0 0.0
        %2349 = vmatpush1.xpose.msra.mxu0 0.0
        %2350 = vmatprep.subr.mxu0 0.0
        %2351 = vmatpush1.xpose.msra.mxu0 0.0
        %2352 = vmatprep.subr.mxu0 0.0
        %2353 = vmatpush1.xpose.msra.mxu0 0.0
        %2354 = vmatprep.subr.mxu0 0.0
        %2355 = vmatpush1.xpose.msra.mxu0 0.0
        %2356 = vmatprep.subr.mxu0 0.0
        %2357 = vmatpush1.xpose.msra.mxu0 0.0
        %2358 = vmatprep.subr.mxu0 0.0
        %2359 = vmatpush1.xpose.msra.mxu0 0.0
        %2360 = vmatprep.subr.mxu0 0.0
        %2361 = vmatpush1.xpose.msra.mxu0 0.0
        %2362 = vmatprep.subr.mxu0 0.0
        %2363 = vmatpush1.xpose.msra.mxu0 0.0
        %2364 = vmatprep.subr.mxu0 0.0
        %2365 = vmatpush1.xpose.msra.mxu0 0.0
        %2366 = vmatprep.subr.mxu0 0.0
        %2367 = vmatpush1.xpose.msra.mxu0 0.0
        %2368 = vmatprep.subr.mxu0 0.0
        %2369 = vmatpush1.xpose.msra.mxu0 0.0
        %2370 = vmatprep.subr.mxu0 0.0
        %2371 = vmatpush1.xpose.msra.mxu0 0.0
        %2372 = vmatprep.subr.mxu0 0.0
        %2373 = vmatpush1.xpose.msra.mxu0 0.0
        %2374 = vmatprep.subr.mxu0 0.0
        %2375 = vmatpush1.xpose.msra.mxu0 0.0
        %2376 = vmatprep.subr.mxu0 0.0
        %2377 = vmatpush1.xpose.msra.mxu0 0.0
        %2378 = vmatprep.subr.mxu0 0.0
        %2379 = vmatpush1.xpose.msra.mxu0 0.0
        %2380 = vmatprep.subr.mxu0 0.0
        %2381 = vmatpush1.xpose.msra.mxu0 0.0
        %2382 = vmatprep.subr.mxu0 0.0
        %2383 = vmatpush1.xpose.msra.mxu0 0.0
        %2384 = vmatprep.subr.mxu0 0.0
        %2385 = vmatpush1.xpose.msra.mxu0 0.0
        %2386 = vmatprep.subr.mxu0 0.0
        %2387 = vmatpush1.xpose.msra.mxu0 0.0
        %2388 = vmatprep.subr.mxu0 0.0
        %2389 = vmatpush1.xpose.msra.mxu0 0.0
        %2390 = vmatprep.subr.mxu0 0.0
        %2391 = vmatpush1.xpose.msra.mxu0 0.0
        %2392 = vmatprep.subr.mxu0 0.0
        %2393 = vmatpush1.xpose.msra.mxu0 0.0
        %2394 = vmatprep.subr.mxu0 0.0
        %2395 = vmatpush1.xpose.msra.mxu0 0.0
        %2396 = vmatprep.subr.mxu0 0.0
        %2397 = vmatpush1.xpose.msra.mxu0 0.0
        %2398 = vmatprep.subr.mxu0 0.0
        %2399 = vmatpush1.xpose.msra.mxu0 0.0
        %2400 = vmatprep.subr.mxu0 0.0
        %2401 = vmatpush1.xpose.msra.mxu0 0.0
        %2402 = vmatprep.subr.mxu0 0.0
        %2403 = vmatpush1.xpose.msra.mxu0 0.0
        %2404 = vmatprep.subr.mxu0 0.0
        %2405 = vmatpush1.xpose.msra.mxu0 0.0
        %2406 = vmatprep.subr.mxu0 0.0
        %2407 = vmatpush1.xpose.msra.mxu0 0.0
        %2408 = vmatprep.mubr.f32.mxu0 0.0
        %2409 = vmatmul.mubr.f32.gmra.mrb[0].mxu0 %v2340
        %v2410 = vpop.f32.mrb[0].mxu0
        %v2411 = vadd.f32 0.0, %v2410
        %v2412 = vpop.f32.mrb[0].mxu0
        %2413 = vdwg.mxu0
        %v2414 = vsel %vm903, %v2189, -inf
        %2415 = vmax.xlane.f32.xlu0 %v2414
        %v2416 = vpop.xlane.xlu0 %2415
        %v2417 = vsel %vm903, %v2263, -inf
        %2418 = vmax.xlane.f32.xlu0 %v2417
        %v2419 = vpop.xlane.xlu0 %2418
        %v2420 = vsel %vm903, %v2337, -inf
        %2421 = vmax.xlane.f32.xlu0 %v2420
        %v2422 = vpop.xlane.xlu0 %2421
        %v2423 = vsel %vm903, %v2411, -inf
        %2424 = vmax.xlane.f32.xlu0 %v2423
        %v2425 = vpop.xlane.xlu0 %2424
        %v2426 = vsub.f32 %v2189, %v2416
        %v2427 = vsub.f32 %v2263, %v2419
        %v2428 = vsub.f32 %v2337, %v2422
        %v2429 = vsub.f32 %v2411, %v2425
        %v2430 = vmul.f32 %v2426, 1.442695
        %v2431 = vpow.pop %v2430
        %v2432 = vmul.f32 %v2427, 1.442695
        %v2433 = vpow.pop %v2432
        %v2434 = vmul.f32 %v2428, 1.442695
        %v2435 = vpow.pop %v2434
        %v2436 = vmul.f32 %v2429, 1.442695
        %v2437 = vpow.pop %v2436
        %v2438 = vsel %vm903, %v2431, 0.0
        %2439 = vadd.xlane.f32.xlu0 %v2438
        %v2440 = vpop.xlane.xlu0 %2439
        %v2441 = vsel %vm903, %v2433, 0.0
        %2442 = vadd.xlane.f32.xlu0 %v2441
        %v2443 = vpop.xlane.xlu0 %2442
        %v2444 = vsel %vm903, %v2435, 0.0
        %2445 = vadd.xlane.f32.xlu0 %v2444
        %v2446 = vpop.xlane.xlu0 %2445
        %v2447 = vsel %vm903, %v2437, 0.0
        %2448 = vadd.xlane.f32.xlu0 %v2447
        %v2449 = vpop.xlane.xlu0 %2448
        %v2450 = vrcp.pop %v2440
        %v2451 = vmul.f32 %v2431, %v2450
        %v2452 = vrcp.pop %v2443
        %v2453 = vmul.f32 %v2433, %v2452
        %v2454 = vrcp.pop %v2446
        %v2455 = vmul.f32 %v2435, %v2454
        %v2456 = vrcp.pop %v2449
        %v2457 = vmul.f32 %v2437, %v2456
        %v2459 = vsel %vm903, %v2451, 0
        %2461 = vmatprep.subr.mxu0 0.0
        %2462 = vmatpush1.msra.mxu0 %v2091
        %2463 = vmatprep.subr.mxu0 0.0
        %2464 = vmatpush1.msra.mxu0 0.0
        %2465 = vmatprep.subr.mxu0 0.0
        %2466 = vmatpush1.msra.mxu0 0.0
        %2467 = vmatprep.subr.mxu0 0.0
        %2468 = vmatpush1.msra.mxu0 0.0
        %2469 = vmatprep.subr.mxu0 0.0
        %2470 = vmatpush1.msra.mxu0 0.0
        %2471 = vmatprep.subr.mxu0 0.0
        %2472 = vmatpush1.msra.mxu0 0.0
        %2473 = vmatprep.subr.mxu0 0.0
        %2474 = vmatpush1.msra.mxu0 0.0
        %2475 = vmatprep.subr.mxu0 0.0
        %2476 = vmatpush1.msra.mxu0 0.0
        %2477 = vmatprep.subr.mxu0 0.0
        %2478 = vmatpush1.msra.mxu0 0.0
        %2479 = vmatprep.subr.mxu0 0.0
        %2480 = vmatpush1.msra.mxu0 0.0
        %2481 = vmatprep.subr.mxu0 0.0
        %2482 = vmatpush1.msra.mxu0 0.0
        %2483 = vmatprep.subr.mxu0 0.0
        %2484 = vmatpush1.msra.mxu0 0.0
        %2485 = vmatprep.subr.mxu0 0.0
        %2486 = vmatpush1.msra.mxu0 0.0
        %2487 = vmatprep.subr.mxu0 0.0
        %2488 = vmatpush1.msra.mxu0 0.0
        %2489 = vmatprep.subr.mxu0 0.0
        %2490 = vmatpush1.msra.mxu0 0.0
        %2491 = vmatprep.subr.mxu0 0.0
        %2492 = vmatpush1.msra.mxu0 0.0
        %2493 = vmatprep.subr.mxu0 0.0
        %2494 = vmatpush1.msra.mxu0 0.0
        %2495 = vmatprep.subr.mxu0 0.0
        %2496 = vmatpush1.msra.mxu0 0.0
        %2497 = vmatprep.subr.mxu0 0.0
        %2498 = vmatpush1.msra.mxu0 0.0
        %2499 = vmatprep.subr.mxu0 0.0
        %2500 = vmatpush1.msra.mxu0 0.0
        %2501 = vmatprep.subr.mxu0 0.0
        %2502 = vmatpush1.msra.mxu0 0.0
        %2503 = vmatprep.subr.mxu0 0.0
        %2504 = vmatpush1.msra.mxu0 0.0
        %2505 = vmatprep.subr.mxu0 0.0
        %2506 = vmatpush1.msra.mxu0 0.0
        %2507 = vmatprep.subr.mxu0 0.0
        %2508 = vmatpush1.msra.mxu0 0.0
        %2509 = vmatprep.subr.mxu0 0.0
        %2510 = vmatpush1.msra.mxu0 0.0
        %2511 = vmatprep.subr.mxu0 0.0
        %2512 = vmatpush1.msra.mxu0 0.0
        %2513 = vmatprep.subr.mxu0 0.0
        %2514 = vmatpush1.msra.mxu0 0.0
        %2515 = vmatprep.subr.mxu0 0.0
        %2516 = vmatpush1.msra.mxu0 0.0
        %2517 = vmatprep.subr.mxu0 0.0
        %2518 = vmatpush1.msra.mxu0 0.0
        %2519 = vmatprep.subr.mxu0 0.0
        %2520 = vmatpush1.msra.mxu0 0.0
        %2521 = vmatprep.subr.mxu0 0.0
        %2522 = vmatpush1.msra.mxu0 0.0
        %2523 = vmatprep.subr.mxu0 0.0
        %2524 = vmatpush1.msra.mxu0 0.0
        %2525 = vmatprep.mubr.f32.mxu0 0.0
        %2526 = vmatmul.mubr.f32.gmra.mrb[0].mxu0 %v2459
        %v2527 = vpop.f32.mrb[0].mxu0
        %v2528 = vadd.f32 0.0, %v2527
        %v2529 = vpop.f32.mrb[0].mxu0
        %2530 = vdwg.mxu0
        %v2532 = vsel %vm903, %v2453, 0
        %2534 = vmatprep.subr.mxu0 0.0
        %2535 = vmatpush1.msra.mxu0 %v2110
        %2536 = vmatprep.subr.mxu0 0.0
        %2537 = vmatpush1.msra.mxu0 0.0
        %2538 = vmatprep.subr.mxu0 0.0
        %2539 = vmatpush1.msra.mxu0 0.0
        %2540 = vmatprep.subr.mxu0 0.0
        %2541 = vmatpush1.msra.mxu0 0.0
        %2542 = vmatprep.subr.mxu0 0.0
        %2543 = vmatpush1.msra.mxu0 0.0
        %2544 = vmatprep.subr.mxu0 0.0
        %2545 = vmatpush1.msra.mxu0 0.0
        %2546 = vmatprep.subr.mxu0 0.0
        %2547 = vmatpush1.msra.mxu0 0.0
        %2548 = vmatprep.subr.mxu0 0.0
        %2549 = vmatpush1.msra.mxu0 0.0
        %2550 = vmatprep.subr.mxu0 0.0
        %2551 = vmatpush1.msra.mxu0 0.0
        %2552 = vmatprep.subr.mxu0 0.0
        %2553 = vmatpush1.msra.mxu0 0.0
        %2554 = vmatprep.subr.mxu0 0.0
        %2555 = vmatpush1.msra.mxu0 0.0
        %2556 = vmatprep.subr.mxu0 0.0
        %2557 = vmatpush1.msra.mxu0 0.0
        %2558 = vmatprep.subr.mxu0 0.0
        %2559 = vmatpush1.msra.mxu0 0.0
        %2560 = vmatprep.subr.mxu0 0.0
        %2561 = vmatpush1.msra.mxu0 0.0
        %2562 = vmatprep.subr.mxu0 0.0
        %2563 = vmatpush1.msra.mxu0 0.0
        %2564 = vmatprep.subr.mxu0 0.0
        %2565 = vmatpush1.msra.mxu0 0.0
        %2566 = vmatprep.subr.mxu0 0.0
        %2567 = vmatpush1.msra.mxu0 0.0
        %2568 = vmatprep.subr.mxu0 0.0
        %2569 = vmatpush1.msra.mxu0 0.0
        %2570 = vmatprep.subr.mxu0 0.0
        %2571 = vmatpush1.msra.mxu0 0.0
        %2572 = vmatprep.subr.mxu0 0.0
        %2573 = vmatpush1.msra.mxu0 0.0
        %2574 = vmatprep.subr.mxu0 0.0
        %2575 = vmatpush1.msra.mxu0 0.0
        %2576 = vmatprep.subr.mxu0 0.0
        %2577 = vmatpush1.msra.mxu0 0.0
        %2578 = vmatprep.subr.mxu0 0.0
        %2579 = vmatpush1.msra.mxu0 0.0
        %2580 = vmatprep.subr.mxu0 0.0
        %2581 = vmatpush1.msra.mxu0 0.0
        %2582 = vmatprep.subr.mxu0 0.0
        %2583 = vmatpush1.msra.mxu0 0.0
        %2584 = vmatprep.subr.mxu0 0.0
        %2585 = vmatpush1.msra.mxu0 0.0
        %2586 = vmatprep.subr.mxu0 0.0
        %2587 = vmatpush1.msra.mxu0 0.0
        %2588 = vmatprep.subr.mxu0 0.0
        %2589 = vmatpush1.msra.mxu0 0.0
        %2590 = vmatprep.subr.mxu0 0.0
        %2591 = vmatpush1.msra.mxu0 0.0
        %2592 = vmatprep.subr.mxu0 0.0
        %2593 = vmatpush1.msra.mxu0 0.0
        %2594 = vmatprep.subr.mxu0 0.0
        %2595 = vmatpush1.msra.mxu0 0.0
        %2596 = vmatprep.subr.mxu0 0.0
        %2597 = vmatpush1.msra.mxu0 0.0
        %2598 = vmatprep.mubr.f32.mxu0 0.0
        %2599 = vmatmul.mubr.f32.gmra.mrb[0].mxu0 %v2532
        %v2600 = vpop.f32.mrb[0].mxu0
        %v2601 = vadd.f32 0.0, %v2600
        %v2602 = vpop.f32.mrb[0].mxu0
        %2603 = vdwg.mxu0
        %v2605 = vsel %vm903, %v2455, 0
        %2607 = vmatprep.subr.mxu0 0.0
        %2608 = vmatpush1.msra.mxu0 %v2113
        %2609 = vmatprep.subr.mxu0 0.0
        %2610 = vmatpush1.msra.mxu0 0.0
        %2611 = vmatprep.subr.mxu0 0.0
        %2612 = vmatpush1.msra.mxu0 0.0
        %2613 = vmatprep.subr.mxu0 0.0
        %2614 = vmatpush1.msra.mxu0 0.0
        %2615 = vmatprep.subr.mxu0 0.0
        %2616 = vmatpush1.msra.mxu0 0.0
        %2617 = vmatprep.subr.mxu0 0.0
        %2618 = vmatpush1.msra.mxu0 0.0
        %2619 = vmatprep.subr.mxu0 0.0
        %2620 = vmatpush1.msra.mxu0 0.0
        %2621 = vmatprep.subr.mxu0 0.0
        %2622 = vmatpush1.msra.mxu0 0.0
        %2623 = vmatprep.subr.mxu0 0.0
        %2624 = vmatpush1.msra.mxu0 0.0
        %2625 = vmatprep.subr.mxu0 0.0
        %2626 = vmatpush1.msra.mxu0 0.0
        %2627 = vmatprep.subr.mxu0 0.0
        %2628 = vmatpush1.msra.mxu0 0.0
        %2629 = vmatprep.subr.mxu0 0.0
        %2630 = vmatpush1.msra.mxu0 0.0
        %2631 = vmatprep.subr.mxu0 0.0
        %2632 = vmatpush1.msra.mxu0 0.0
        %2633 = vmatprep.subr.mxu0 0.0
        %2634 = vmatpush1.msra.mxu0 0.0
        %2635 = vmatprep.subr.mxu0 0.0
        %2636 = vmatpush1.msra.mxu0 0.0
        %2637 = vmatprep.subr.mxu0 0.0
        %2638 = vmatpush1.msra.mxu0 0.0
        %2639 = vmatprep.subr.mxu0 0.0
        %2640 = vmatpush1.msra.mxu0 0.0
        %2641 = vmatprep.subr.mxu0 0.0
        %2642 = vmatpush1.msra.mxu0 0.0
        %2643 = vmatprep.subr.mxu0 0.0
        %2644 = vmatpush1.msra.mxu0 0.0
        %2645 = vmatprep.subr.mxu0 0.0
        %2646 = vmatpush1.msra.mxu0 0.0
        %2647 = vmatprep.subr.mxu0 0.0
        %2648 = vmatpush1.msra.mxu0 0.0
        %2649 = vmatprep.subr.mxu0 0.0
        %2650 = vmatpush1.msra.mxu0 0.0
        %2651 = vmatprep.subr.mxu0 0.0
        %2652 = vmatpush1.msra.mxu0 0.0
        %2653 = vmatprep.subr.mxu0 0.0
        %2654 = vmatpush1.msra.mxu0 0.0
        %2655 = vmatprep.subr.mxu0 0.0
        %2656 = vmatpush1.msra.mxu0 0.0
        %2657 = vmatprep.subr.mxu0 0.0
        %2658 = vmatpush1.msra.mxu0 0.0
        %2659 = vmatprep.subr.mxu0 0.0
        %2660 = vmatpush1.msra.mxu0 0.0
        %2661 = vmatprep.subr.mxu0 0.0
        %2662 = vmatpush1.msra.mxu0 0.0
        %2663 = vmatprep.subr.mxu0 0.0
        %2664 = vmatpush1.msra.mxu0 0.0
        %2665 = vmatprep.subr.mxu0 0.0
        %2666 = vmatpush1.msra.mxu0 0.0
        %2667 = vmatprep.subr.mxu0 0.0
        %2668 = vmatpush1.msra.mxu0 0.0
        %2669 = vmatprep.subr.mxu0 0.0
        %2670 = vmatpush1.msra.mxu0 0.0
        %2671 = vmatprep.mubr.f32.mxu0 0.0
        %2672 = vmatmul.mubr.f32.gmra.mrb[0].mxu0 %v2605
        %v2673 = vpop.f32.mrb[0].mxu0
        %v2674 = vadd.f32 0.0, %v2673
        %v2675 = vpop.f32.mrb[0].mxu0
        %2676 = vdwg.mxu0
        %v2678 = vsel %vm903, %v2457, 0
        %2680 = vmatprep.subr.mxu0 0.0
        %2681 = vmatpush1.msra.mxu0 %v2116
        %2682 = vmatprep.subr.mxu0 0.0
        %2683 = vmatpush1.msra.mxu0 0.0
        %2684 = vmatprep.subr.mxu0 0.0
        %2685 = vmatpush1.msra.mxu0 0.0
        %2686 = vmatprep.subr.mxu0 0.0
        %2687 = vmatpush1.msra.mxu0 0.0
        %2688 = vmatprep.subr.mxu0 0.0
        %2689 = vmatpush1.msra.mxu0 0.0
        %2690 = vmatprep.subr.mxu0 0.0
        %2691 = vmatpush1.msra.mxu0 0.0
        %2692 = vmatprep.subr.mxu0 0.0
        %2693 = vmatpush1.msra.mxu0 0.0
        %2694 = vmatprep.subr.mxu0 0.0
        %2695 = vmatpush1.msra.mxu0 0.0
        %2696 = vmatprep.subr.mxu0 0.0
        %2697 = vmatpush1.msra.mxu0 0.0
        %2698 = vmatprep.subr.mxu0 0.0
        %2699 = vmatpush1.msra.mxu0 0.0
        %2700 = vmatprep.subr.mxu0 0.0
        %2701 = vmatpush1.msra.mxu0 0.0
        %2702 = vmatprep.subr.mxu0 0.0
        %2703 = vmatpush1.msra.mxu0 0.0
        %2704 = vmatprep.subr.mxu0 0.0
        %2705 = vmatpush1.msra.mxu0 0.0
        %2706 = vmatprep.subr.mxu0 0.0
        %2707 = vmatpush1.msra.mxu0 0.0
        %2708 = vmatprep.subr.mxu0 0.0
        %2709 = vmatpush1.msra.mxu0 0.0
        %2710 = vmatprep.subr.mxu0 0.0
        %2711 = vmatpush1.msra.mxu0 0.0
        %2712 = vmatprep.subr.mxu0 0.0
        %2713 = vmatpush1.msra.mxu0 0.0
        %2714 = vmatprep.subr.mxu0 0.0
        %2715 = vmatpush1.msra.mxu0 0.0
        %2716 = vmatprep.subr.mxu0 0.0
        %2717 = vmatpush1.msra.mxu0 0.0
        %2718 = vmatprep.subr.mxu0 0.0
        %2719 = vmatpush1.msra.mxu0 0.0
        %2720 = vmatprep.subr.mxu0 0.0
        %2721 = vmatpush1.msra.mxu0 0.0
        %2722 = vmatprep.subr.mxu0 0.0
        %2723 = vmatpush1.msra.mxu0 0.0
        %2724 = vmatprep.subr.mxu0 0.0
        %2725 = vmatpush1.msra.mxu0 0.0
        %2726 = vmatprep.subr.mxu0 0.0
        %2727 = vmatpush1.msra.mxu0 0.0
        %2728 = vmatprep.subr.mxu0 0.0
        %2729 = vmatpush1.msra.mxu0 0.0
        %2730 = vmatprep.subr.mxu0 0.0
        %2731 = vmatpush1.msra.mxu0 0.0
        %2732 = vmatprep.subr.mxu0 0.0
        %2733 = vmatpush1.msra.mxu0 0.0
        %2734 = vmatprep.subr.mxu0 0.0
        %2735 = vmatpush1.msra.mxu0 0.0
        %2736 = vmatprep.subr.mxu0 0.0
        %2737 = vmatpush1.msra.mxu0 0.0
        %2738 = vmatprep.subr.mxu0 0.0
        %2739 = vmatpush1.msra.mxu0 0.0
        %2740 = vmatprep.subr.mxu0 0.0
        %2741 = vmatpush1.msra.mxu0 0.0
        %2742 = vmatprep.subr.mxu0 0.0
        %2743 = vmatpush1.msra.mxu0 0.0
        %2744 = vmatprep.mubr.f32.mxu0 0.0
        %2745 = vmatmul.mubr.f32.gmra.mrb[0].mxu0 %v2678
        %v2746 = vpop.f32.mrb[0].mxu0
        %v2747 = vadd.f32 0.0, %v2746
        %v2748 = vpop.f32.mrb[0].mxu0
        %2749 = vdwg.mxu0
        %2751 = vrot.lane.b32.xlu0 %v2601, 8
        %v2752 = vpop.permute.xlu0 %2751
        %2755 = vrot.lane.b32.xlu0 %v2674, 16
        %v2756 = vpop.permute.xlu0 %2755
        %2759 = vrot.lane.b32.xlu0 %v2747, 24
        %v2760 = vpop.permute.xlu0 %2759
        %v2762 = vsel %vm903, %v2528, %v2752
        %v2763 = vsel %vm1549, %v2762, %v2756
        %v2764 = vsel %vm1551, %v2763, %v2760
        %v2766 = vsel %vm554, %v2764, 0
        %2768 = vmatprep.subr.mxu0 0.0
        %2769 = vmatpush1.msra.mxu0 %v511
        %2770 = vmatprep.subr.mxu0 0.0
        %2771 = vmatpush1.msra.mxu0 %v512
        %2772 = vmatprep.subr.mxu0 0.0
        %2773 = vmatpush1.msra.mxu0 %v513
        %2774 = vmatprep.subr.mxu0 0.0
        %2775 = vmatpush1.msra.mxu0 %v514
        %2776 = vmatprep.subr.mxu0 0.0
        %2777 = vmatpush1.msra.mxu0 0.0
        %2778 = vmatprep.subr.mxu0 0.0
        %2779 = vmatpush1.msra.mxu0 0.0
        %2780 = vmatprep.subr.mxu0 0.0
        %2781 = vmatpush1.msra.mxu0 0.0
        %2782 = vmatprep.subr.mxu0 0.0
        %2783 = vmatpush1.msra.mxu0 0.0
        %2784 = vmatprep.subr.mxu0 0.0
        %2785 = vmatpush1.msra.mxu0 0.0
        %2786 = vmatprep.subr.mxu0 0.0
        %2787 = vmatpush1.msra.mxu0 0.0
        %2788 = vmatprep.subr.mxu0 0.0
        %2789 = vmatpush1.msra.mxu0 0.0
        %2790 = vmatprep.subr.mxu0 0.0
        %2791 = vmatpush1.msra.mxu0 0.0
        %2792 = vmatprep.subr.mxu0 0.0
        %2793 = vmatpush1.msra.mxu0 0.0
        %2794 = vmatprep.subr.mxu0 0.0
        %2795 = vmatpush1.msra.mxu0 0.0
        %2796 = vmatprep.subr.mxu0 0.0
        %2797 = vmatpush1.msra.mxu0 0.0
        %2798 = vmatprep.subr.mxu0 0.0
        %2799 = vmatpush1.msra.mxu0 0.0
        %2800 = vmatprep.subr.mxu0 0.0
        %2801 = vmatpush1.msra.mxu0 0.0
        %2802 = vmatprep.subr.mxu0 0.0
        %2803 = vmatpush1.msra.mxu0 0.0
        %2804 = vmatprep.subr.mxu0 0.0
        %2805 = vmatpush1.msra.mxu0 0.0
        %2806 = vmatprep.subr.mxu0 0.0
        %2807 = vmatpush1.msra.mxu0 0.0
        %2808 = vmatprep.subr.mxu0 0.0
        %2809 = vmatpush1.msra.mxu0 0.0
        %2810 = vmatprep.subr.mxu0 0.0
        %2811 = vmatpush1.msra.mxu0 0.0
        %2812 = vmatprep.subr.mxu0 0.0
        %2813 = vmatpush1.msra.mxu0 0.0
        %2814 = vmatprep.subr.mxu0 0.0
        %2815 = vmatpush1.msra.mxu0 0.0
        %2816 = vmatprep.subr.mxu0 0.0
        %2817 = vmatpush1.msra.mxu0 0.0
        %2818 = vmatprep.subr.mxu0 0.0
        %2819 = vmatpush1.msra.mxu0 0.0
        %2820 = vmatprep.subr.mxu0 0.0
        %2821 = vmatpush1.msra.mxu0 0.0
        %2822 = vmatprep.subr.mxu0 0.0
        %2823 = vmatpush1.msra.mxu0 0.0
        %2824 = vmatprep.subr.mxu0 0.0
        %2825 = vmatpush1.msra.mxu0 0.0
        %2826 = vmatprep.subr.mxu0 0.0
        %2827 = vmatpush1.msra.mxu0 0.0
        %2828 = vmatprep.subr.mxu0 0.0
        %2829 = vmatpush1.msra.mxu0 0.0
        %2830 = vmatprep.subr.mxu0 0.0
        %2831 = vmatpush1.msra.mxu0 0.0
        %2832 = vmatprep.mubr.f32.mxu0 0.0
        %2833 = vmatmul.mubr.f32.gmra.mrb[0].mxu0 %v2766
        %v2834 = vpop.f32.mrb[0].mxu0
        %v2835 = vadd.f32 0.0, %v2834
        %v2836 = vpop.f32.mrb[0].mxu0
        %2837 = vdwg.mxu0
        %v2838 = vadd.f32 %v1856, %v2835
        %v2839 = vsel %vm554, %v2838, 0.0
        %2840 = vadd.xlane.f32.xlu0 %v2839
        %v2841 = vpop.xlane.xlu0 %2840
        %v2842 = vmul.f32 %v2841, %v631
        %v2843 = vsub.f32 %v2838, %v2842
        %v2844 = vmul.f32 %v2843, %v2843
        %v2845 = vsel %vm554, %v2844, 0.0
        %2846 = vadd.xlane.f32.xlu0 %v2845
        %v2847 = vpop.xlane.xlu0 %2846
        %v2848 = vmul.f32 %v2847, %v638
        %v2849 = vrsqrt.pop %v2848
        %v2850 = vmul.f32 %v2848, %v2849
        %vm2851 = vcmp.eq.f32.partialorder %v2848, inf
        %v2852 = vsel %vm2851, %v2848, %v2850
        %vm2853 = vcmp.eq.f32.partialorder %v2848, 0.0
        %v2854 = vand.u32 %v2848, 2147483648
        %v2855 = vsel %vm2853, %v2854, %v2852
        %v2856 = vadd.f32 %v2855, 1e-06
        %v2857 = vrcp.pop %v2856
        %v2858 = vmul.f32 1.0, %v2857
        %v2859 = vmul.f32 %v2843, %v2858
        %v2860 = vmul.f32 %v1652, %v2859
        %v2861 = vadd.f32 %v2860, %v1659
        %v2863 = vrot.slane %v2861, 7
        %v2865 = vsel %vm1665, 0.0, %v2863
        %v2866 = vrot.slane %v2861, 1
        %v2868 = vsel %vm1669, %v2866, 0.0
        %2869 = vrot.lane.b32.xlu0 %v2861, 32
        %v2870 = vpop.permute.xlu0 %2869
        %2873 = vrot.lane.b32.xlu0 %v2868, 64
        %v2874 = vpop.permute.xlu0 %2873
        %v2876 = vsel %vm554, %v2865, %v2870
        %v2877 = vsel %vm1679, %v2876, %v2874
        %v2879 = vsel %vm1687, %v2877, 0
        %2881 = vmatprep.subr.mxu0 0.0
        %2882 = vmatpush1.msra.mxu0 %v515
        %2883 = vmatprep.subr.mxu0 0.0
        %2884 = vmatpush1.msra.mxu0 %v516
        %2885 = vmatprep.subr.mxu0 0.0
        %2886 = vmatpush1.msra.mxu0 %v517
        %2887 = vmatprep.subr.mxu0 0.0
        %2888 = vmatpush1.msra.mxu0 %v518
        %2889 = vmatprep.subr.mxu0 0.0
        %2890 = vmatpush1.msra.mxu0 %v519
        %2891 = vmatprep.subr.mxu0 0.0
        %2892 = vmatpush1.msra.mxu0 %v520
        %2893 = vmatprep.subr.mxu0 0.0
        %2894 = vmatpush1.msra.mxu0 %v521
        %2895 = vmatprep.subr.mxu0 0.0
        %2896 = vmatpush1.msra.mxu0 %v522
        %2897 = vmatprep.subr.mxu0 0.0
        %2898 = vmatpush1.msra.mxu0 %v523
        %2899 = vmatprep.subr.mxu0 0.0
        %2900 = vmatpush1.msra.mxu0 %v524
        %2901 = vmatprep.subr.mxu0 0.0
        %2902 = vmatpush1.msra.mxu0 %v525
        %2903 = vmatprep.subr.mxu0 0.0
        %2904 = vmatpush1.msra.mxu0 %v526
        %2905 = vmatprep.subr.mxu0 0.0
        %2906 = vmatpush1.msra.mxu0 0.0
        %2907 = vmatprep.subr.mxu0 0.0
        %2908 = vmatpush1.msra.mxu0 0.0
        %2909 = vmatprep.subr.mxu0 0.0
        %2910 = vmatpush1.msra.mxu0 0.0
        %2911 = vmatprep.subr.mxu0 0.0
        %2912 = vmatpush1.msra.mxu0 0.0
        %2913 = vmatprep.subr.mxu0 0.0
        %2914 = vmatpush1.msra.mxu0 0.0
        %2915 = vmatprep.subr.mxu0 0.0
        %2916 = vmatpush1.msra.mxu0 0.0
        %2917 = vmatprep.subr.mxu0 0.0
        %2918 = vmatpush1.msra.mxu0 0.0
        %2919 = vmatprep.subr.mxu0 0.0
        %2920 = vmatpush1.msra.mxu0 0.0
        %2921 = vmatprep.subr.mxu0 0.0
        %2922 = vmatpush1.msra.mxu0 0.0
        %2923 = vmatprep.subr.mxu0 0.0
        %2924 = vmatpush1.msra.mxu0 0.0
        %2925 = vmatprep.subr.mxu0 0.0
        %2926 = vmatpush1.msra.mxu0 0.0
        %2927 = vmatprep.subr.mxu0 0.0
        %2928 = vmatpush1.msra.mxu0 0.0
        %2929 = vmatprep.subr.mxu0 0.0
        %2930 = vmatpush1.msra.mxu0 0.0
        %2931 = vmatprep.subr.mxu0 0.0
        %2932 = vmatpush1.msra.mxu0 0.0
        %2933 = vmatprep.subr.mxu0 0.0
        %2934 = vmatpush1.msra.mxu0 0.0
        %2935 = vmatprep.subr.mxu0 0.0
        %2936 = vmatpush1.msra.mxu0 0.0
        %2937 = vmatprep.subr.mxu0 0.0
        %2938 = vmatpush1.msra.mxu0 0.0
        %2939 = vmatprep.subr.mxu0 0.0
        %2940 = vmatpush1.msra.mxu0 0.0
        %2941 = vmatprep.subr.mxu0 0.0
        %2942 = vmatpush1.msra.mxu0 0.0
        %2943 = vmatprep.subr.mxu0 0.0
        %2944 = vmatpush1.msra.mxu0 0.0
        %2945 = vmatprep.mubr.f32.mxu0 0.0
        %2946 = vmatmul.mubr.f32.gmra.mrb[0].mxu0 %v2879
        %v2947 = vpop.f32.mrb[0].mxu0
        %v2948 = vadd.f32 %v1685, %v2947
        %v2949 = vpop.f32.mrb[0].mxu0
        %2950 = vdwg.mxu0
        %v2951 = vmax.f32 %v2948, 0.0
        %v2953 = vrot.slane %v2951, 7
        %v2955 = vsel %vm1665, 0.0, %v2953
        %v2956 = vrot.slane %v2951, 1
        %v2958 = vsel %vm1669, %v2956, 0.0
        %2959 = vrot.lane.b32.xlu0 %v2951, 64
        %v2960 = vpop.permute.xlu0 %2959
        %v2962 = vsel %vm1679, %v2955, %v2960
        %v2964 = vsel %vm1679, %v2958, 0
        %2966 = vmatprep.subr.mxu0 0.0
        %2967 = vmatpush1.msra.mxu0 %v528
        %2968 = vmatprep.subr.mxu0 0.0
        %2969 = vmatpush1.msra.mxu0 %v529
        %2970 = vmatprep.subr.mxu0 0.0
        %2971 = vmatpush1.msra.mxu0 %v530
        %2972 = vmatprep.subr.mxu0 0.0
        %2973 = vmatpush1.msra.mxu0 %v531
        %2974 = vmatprep.subr.mxu0 0.0
        %2975 = vmatpush1.msra.mxu0 %v532
        %2976 = vmatprep.subr.mxu0 0.0
        %2977 = vmatpush1.msra.mxu0 %v533
        %2978 = vmatprep.subr.mxu0 0.0
        %2979 = vmatpush1.msra.mxu0 %v534
        %2980 = vmatprep.subr.mxu0 0.0
        %2981 = vmatpush1.msra.mxu0 %v535
        %2982 = vmatprep.subr.mxu0 0.0
        %2983 = vmatpush1.msra.mxu0 %v536
        %2984 = vmatprep.subr.mxu0 0.0
        %2985 = vmatpush1.msra.mxu0 %v537
        %2986 = vmatprep.subr.mxu0 0.0
        %2987 = vmatpush1.msra.mxu0 %v538
        %2988 = vmatprep.subr.mxu0 0.0
        %2989 = vmatpush1.msra.mxu0 %v539
        %2990 = vmatprep.subr.mxu0 0.0
        %2991 = vmatpush1.msra.mxu0 %v540
        %2992 = vmatprep.subr.mxu0 0.0
        %2993 = vmatpush1.msra.mxu0 %v541
        %2994 = vmatprep.subr.mxu0 0.0
        %2995 = vmatpush1.msra.mxu0 %v542
        %2996 = vmatprep.subr.mxu0 0.0
        %2997 = vmatpush1.msra.mxu0 %v543
        %2998 = vmatprep.subr.mxu0 0.0
        %2999 = vmatpush1.msra.mxu0 %v544
        %3000 = vmatprep.subr.mxu0 0.0
        %3001 = vmatpush1.msra.mxu0 %v545
        %3002 = vmatprep.subr.mxu0 0.0
        %3003 = vmatpush1.msra.mxu0 %v546
        %3004 = vmatprep.subr.mxu0 0.0
        %3005 = vmatpush1.msra.mxu0 %v547
        %3006 = vmatprep.subr.mxu0 0.0
        %3007 = vmatpush1.msra.mxu0 %v548
        %3008 = vmatprep.subr.mxu0 0.0
        %3009 = vmatpush1.msra.mxu0 %v549
        %3010 = vmatprep.subr.mxu0 0.0
        %3011 = vmatpush1.msra.mxu0 %v550
        %3012 = vmatprep.subr.mxu0 0.0
        %3013 = vmatpush1.msra.mxu0 %v551
        %3014 = vmatprep.subr.mxu0 0.0
        %3015 = vmatpush1.msra.mxu0 0.0
        %3016 = vmatprep.subr.mxu0 0.0
        %3017 = vmatpush1.msra.mxu0 0.0
        %3018 = vmatprep.subr.mxu0 0.0
        %3019 = vmatpush1.msra.mxu0 0.0
        %3020 = vmatprep.subr.mxu0 0.0
        %3021 = vmatpush1.msra.mxu0 0.0
        %3022 = vmatprep.subr.mxu0 0.0
        %3023 = vmatpush1.msra.mxu0 0.0
        %3024 = vmatprep.subr.mxu0 0.0
        %3025 = vmatpush1.msra.mxu0 0.0
        %3026 = vmatprep.subr.mxu0 0.0
        %3027 = vmatpush1.msra.mxu0 0.0
        %3028 = vmatprep.subr.mxu0 0.0
        %3029 = vmatpush1.msra.mxu0 0.0
        %3030 = vmatprep.mubr.f32.mxu0 %v2964
        %3031 = vmatmul.mubr.f32.gmra.mrb[0].mxu0 %v2962
        %v3032 = vpop.f32.mrb[0].mxu0
        %v3033 = vadd.f32 %v1777, %v3032
        %v3034 = vpop.f32.mrb[0].mxu0
        %3035 = vdwg.mxu0
        %v3036 = vmax.f32 %v3033, 0.0
        %v3037 = vadd.f32 %v2838, %v3036
        %3038 = vst.msk [vmem:[%s485] sm:$0xff] %vm554, %v3037
        %s3039 = sand.u32 %s357, 1
        %s3040 = scalar_lea.sflag [#allocation3], %s3039
        %s3041 = sand.u32 %s357, 1
        %s3042 = smul.addr %s3041, 8
        %s3043 = scalar_lea.vmem [#allocation2], %s3042
        // Predicated region
        $region81: #{tpu_custom_call.1} parent=79 // pred_check
          %p3044 = pneg %p367
        $region82: #{tpu_custom_call.1} parent=79 // pred_check_branch
          %3046 = sbr.rel (%p3044) target = $region84
        $region83: #{tpu_custom_call.1} parent=79 // pred_region
          %s3048 = ssub.s32 128, 128
          %3049 = vsyncadd %s3040, %s3048
          %s3050 = smul.addr %s29, 128
          %s3051 = scalar_lea.hbm %s15, %s3050
          %s3053 = sshll.u32 %s3043, 4
          %s3054 = int_to_ptr.vmem [resolvable:$true] %s3053
          %3056 = dma.vmem_to_hbm [thread:$0]  %s3054, 128, %s3051, %s3040
        $region84: #{tpu_custom_call.1} parent=79 // pred_fallthru
          _
      $region80: #{tpu_custom_call.1} parent=5 // pred_fallthru
        _
      %p3057 = scmp.le.s32.totalorder 2, %s24
      // Predicated region
      $region85: #{tpu_custom_call.1} parent=5 // pred_check
        %p3058 = pneg %p3057
      $region86: #{tpu_custom_call.1} parent=5 // pred_check_branch
        %3060 = sbr.rel (%p3058) target = $region88
      $region87: #{tpu_custom_call.1} parent=5 // pred_region
        %s3061 = ssub.s32 %s24, 2
        // Predicated region
        $region89: #{tpu_custom_call.1} parent=87 // pred_check
          %p3062 = pneg %p373
        $region90: #{tpu_custom_call.1} parent=87 // pred_check_branch
          %3064 = sbr.rel (%p3062) target = $region92
        $region91: #{tpu_custom_call.1} parent=87 // pred_region
          %s3065 = sand.u32 %s358, 1
          %s3066 = scalar_lea.sflag [#allocation3], %s3065
          %s3067 = sand.u32 %s358, 1
          %s3068 = smul.addr %s3067, 8
          %s3069 = scalar_lea.vmem [#allocation2], %s3068
          %3070 = dma.done %s3066, 128
        $region92: #{tpu_custom_call.1} parent=87 // pred_fallthru
          _
      $region88: #{tpu_custom_call.1} parent=5 // pred_fallthru
        _
    $region6: #{tpu_custom_call.1} parent=1 // loop_footer
      %s28 = sadd.s32 1, %s24
    $region7: #{tpu_custom_call.1} parent=1 // loop_footer_branch
      %23 = sbr.rel target = $region3
    $region8: #{tpu_custom_call.1} parent=1 // loop_exit
      _
    %3071 = vsyncpa [#allocation3], 1
    %s3072 = scalar_lea.sflag [#allocation3], 1
    %3073 = vsyncpa %s3072, 1

</llo_original>
